<compile_context>
chip_gen: v5e
topology: v5e:2x2
jax: 0.10.0
libtpu: 0.0.40
codegen_flags: <defaults>
</compile_context>

<pallas_src>
import functools
import math

import jax
import jax.numpy as jnp
from jax import lax
from jax.experimental import pallas as pl
from jax.experimental.pallas import tpu as pltpu  # noqa: F401  (TPU backend / params)

# ---- small DistilBERT-like config (lane-dense hidden) -------------------------
VOCAB = 100
MAX_POS = 32
HIDDEN = 128          # config.hidden_size (dim) — multiple of 128 lanes
N_LAYERS = 2
N_HEADS = 2           # head_dim = 64
FFN = 256             # hidden_dim
SEQ = 8
BATCH = 2
NUM_LABELS = 2
LN_EPS = 1e-12


# ---- in-kernel helpers ---------------------------------------------------------
def _layer_norm(x, gamma, beta, eps=LN_EPS):
    mean = jnp.mean(x, axis=-1, keepdims=True)
    var = jnp.mean((x - mean) ** 2, axis=-1, keepdims=True)
    return (x - mean) * lax.rsqrt(var + eps) * gamma + beta


def _gelu(x):
    # TODO(synk): HF DistilBERT uses exact (erf) GELU; tanh approximation used here.
    c = math.sqrt(2.0 / math.pi)
    return 0.5 * x * (1.0 + jnp.tanh(c * (x + 0.044715 * x * x * x)))


def _mm(a, b):
    # MXU matmul: bf16 operands, f32 accumulation.
    return jnp.dot(a.astype(jnp.bfloat16), b.astype(jnp.bfloat16),
                   preferred_element_type=jnp.float32)


# ---- fused forward kernel ------------------------------------------------------
def _fused_forward_kernel(emb_ref, bias_ref, emb_g_ref, emb_b_ref,
                          wq_ref, bq_ref, wk_ref, bk_ref, wv_ref, bv_ref,
                          wo_ref, bo_ref, g1_ref, be1_ref,
                          w1_ref, bf1_ref, w2_ref, bf2_ref, g2_ref, be2_ref,
                          clf_w_ref, clf_b_ref, logits_ref,
                          *, n_layers, n_heads):
    B, S, H = emb_ref.shape
    hd = H // n_heads
    inv_sqrt_hd = 1.0 / math.sqrt(hd)

    # Embedding LayerNorm (dropout = identity). Fold (B, S) -> B*S rows.
    x = emb_ref[...].reshape(B * S, H)
    x = _layer_norm(x, emb_g_ref[...], emb_b_ref[...])

    bias = bias_ref[...]                                    # (B, S) additive mask bias

    for l in range(n_layers):                               # static layer loop, weights VMEM-resident
        wq, wk, wv, wo = wq_ref[l], wk_ref[l], wv_ref[l], wo_ref[l]
        q = _mm(x, wq) + bq_ref[l]
        k = _mm(x, wk) + bk_ref[l]
        v = _mm(x, wv) + bv_ref[l]
        q = q * inv_sqrt_hd

        attn_rows = []
        for b in range(B):                                  # static batch loop (attention is per-element)
            rs, re = b * S, (b + 1) * S
            q_b, k_b, v_b = q[rs:re], k[rs:re], v[rs:re]    # (S, H) row slices
            bias_b = bias[b:b + 1, :]                       # (1, S)
            attn_b = jnp.zeros((S, H), jnp.float32)
            for h in range(n_heads):                        # static head loop
                cs, ce = h * hd, (h + 1) * hd
                q_h, k_h, v_h = q_b[:, cs:ce], k_b[:, cs:ce], v_b[:, cs:ce]
                scores = lax.dot_general(
                    q_h.astype(jnp.bfloat16), k_h.astype(jnp.bfloat16),
                    (((1,), (1,)), ((), ())),
                    preferred_element_type=jnp.float32)     # (S, S)
                scores = scores + bias_b                    # masked positions -> -1e9
                scores = scores - jnp.max(scores, axis=-1, keepdims=True)
                p = jnp.exp(scores)
                p = p * pl.reciprocal(jnp.sum(p, axis=-1, keepdims=True), approx=True)
                ctx_h = _mm(p, v_h)                         # (S, hd)
                # Fold the output projection per head -> no head concatenation / lane shuffles.
                attn_b = attn_b + _mm(ctx_h, wo[cs:ce, :])  # (S, H)
            attn_rows.append(attn_b)
        attn = jnp.concatenate(attn_rows, axis=0) + bo_ref[l]   # (B*S, H)

        sa = _layer_norm(attn + x, g1_ref[l], be1_ref[l])
        h1 = _gelu(_mm(sa, w1_ref[l]) + bf1_ref[l])
        h2 = _mm(h1, w2_ref[l]) + bf2_ref[l]
        x = _layer_norm(h2 + sa, g2_ref[l], be2_ref[l])

    # pooled = torch.mean(last_hidden, dim=1); classifier dropout = identity (eval).
    pooled = jnp.mean(x.reshape(B, S, H), axis=1)           # (B, H)
    logits_ref[...] = _mm(pooled, clf_w_ref[...]) + clf_b_ref[...]


# ---- pallas_call wrapper -------------------------------------------------------
def fused_forward(emb, mask_bias, params):
    kernel = functools.partial(_fused_forward_kernel,
                               n_layers=N_LAYERS, n_heads=N_HEADS)
    # No grid: a single invocation; every input is a full-array VMEM block.
    return pl.pallas_call(
        kernel,
        out_shape=jax.ShapeDtypeStruct((emb.shape[0], NUM_LABELS), jnp.float32),
    )(emb, mask_bias,
      params["emb_ln_g"], params["emb_ln_b"],
      params["wq"], params["bq"], params["wk"], params["bk"],
      params["wv"], params["bv"], params["wo"], params["bo"],
      params["ln1_g"], params["ln1_b"],
      params["w1"], params["b1"], params["w2"], params["b2"],
      params["ln2_g"], params["ln2_b"],
      params["clf_w"], params["clf_b"])


# ---- parameters ----------------------------------------------------------------
def init_params(key):
    keys = iter(jax.random.split(key, 16))

    def nrm(shape, std=0.02, dtype=jnp.bfloat16):
        return (std * jax.random.normal(next(keys), shape)).astype(dtype)

    params = {
        "word_emb": nrm((VOCAB, HIDDEN), dtype=jnp.float32),
        "pos_emb": nrm((MAX_POS, HIDDEN), dtype=jnp.float32),
        "emb_ln_g": jnp.ones((1, HIDDEN), jnp.float32),
        "emb_ln_b": jnp.zeros((1, HIDDEN), jnp.float32),
        # Per-layer weights stacked on a leading N_LAYERS axis (indexed statically in
        # the kernel). Matmul weights stored bf16, pre-transposed to (in, out) so
        # y = x @ W + b  (== PyTorch x @ W.T + b). Biases / LN params stay f32.
        "wq": nrm((N_LAYERS, HIDDEN, HIDDEN)), "bq": jnp.zeros((N_LAYERS, 1, HIDDEN), jnp.float32),
        "wk": nrm((N_LAYERS, HIDDEN, HIDDEN)), "bk": jnp.zeros((N_LAYERS, 1, HIDDEN), jnp.float32),
        "wv": nrm((N_LAYERS, HIDDEN, HIDDEN)), "bv": jnp.zeros((N_LAYERS, 1, HIDDEN), jnp.float32),
        "wo": nrm((N_LAYERS, HIDDEN, HIDDEN)), "bo": jnp.zeros((N_LAYERS, 1, HIDDEN), jnp.float32),
        "ln1_g": jnp.ones((N_LAYERS, 1, HIDDEN), jnp.float32),
        "ln1_b": jnp.zeros((N_LAYERS, 1, HIDDEN), jnp.float32),
        "w1": nrm((N_LAYERS, HIDDEN, FFN)), "b1": jnp.zeros((N_LAYERS, 1, FFN), jnp.float32),
        "w2": nrm((N_LAYERS, FFN, HIDDEN)), "b2": jnp.zeros((N_LAYERS, 1, HIDDEN), jnp.float32),
        "ln2_g": jnp.ones((N_LAYERS, 1, HIDDEN), jnp.float32),
        "ln2_b": jnp.zeros((N_LAYERS, 1, HIDDEN), jnp.float32),
    }
    # classifier: nn.init.xavier_normal_ on weight (num_labels, hidden); stored
    # transposed as (hidden, num_labels) for y = x @ W + b.
    std = math.sqrt(2.0 / (HIDDEN + NUM_LABELS))
    params["clf_w"] = (std * jax.random.normal(next(keys), (HIDDEN, NUM_LABELS))).astype(jnp.bfloat16)
    params["clf_b"] = jnp.zeros((1, NUM_LABELS), jnp.float32)
    return params


# ---- model forward -------------------------------------------------------------
def forward(params, input_ids, attention_mask):
    # Embedding gather + position add are plain-JAX glue (left to XLA); everything
    # else runs in ONE fused, weight-resident Pallas kernel.
    word = params["word_emb"][input_ids]                        # (B, S, H)
    pos = params["pos_emb"][: input_ids.shape[1]][None, :, :]   # (1, S, H)
    emb = (word + pos).astype(jnp.float32)
    # Additive attention bias, hoisted out of the kernel hot loop:
    #   0 where attended, -1e9 where masked (== masked_fill(mask==0, -inf) + softmax).
    mask_bias = (attention_mask.astype(jnp.float32) - 1.0) * 1e9
    return fused_forward(emb, mask_bias, params)


if __name__ == "__main__":
    key = jax.random.PRNGKey(0)
    k_ids, k_params = jax.random.split(key)
    input_ids = jax.random.randint(k_ids, (BATCH, SEQ), 0, VOCAB, dtype=jnp.int32)
    attention_mask = jnp.ones((BATCH, SEQ), jnp.float32)
    params = init_params(k_params)

    logits = jax.jit(forward)(params, input_ids, attention_mask)
    logits = jax.block_until_ready(logits)
    assert logits.shape == (BATCH, NUM_LABELS)
    assert bool(jnp.all(jnp.isfinite(logits)))
    print("KERNEL_OK")
</pallas_src>

<mosaic_0001>
module attributes {stable_mosaic.version = 11 : i64} {
  func.func @_fused_forward_kernel(%arg0: memref<2x8x128xf32, #tpu.memory_space<vmem>>, %arg1: memref<2x8xf32, #tpu.memory_space<vmem>>, %arg2: memref<1x128xf32, #tpu.memory_space<vmem>>, %arg3: memref<1x128xf32, #tpu.memory_space<vmem>>, %arg4: memref<2x128x128xbf16, #tpu.memory_space<vmem>>, %arg5: memref<2x1x128xf32, #tpu.memory_space<vmem>>, %arg6: memref<2x128x128xbf16, #tpu.memory_space<vmem>>, %arg7: memref<2x1x128xf32, #tpu.memory_space<vmem>>, %arg8: memref<2x128x128xbf16, #tpu.memory_space<vmem>>, %arg9: memref<2x1x128xf32, #tpu.memory_space<vmem>>, %arg10: memref<2x128x128xbf16, #tpu.memory_space<vmem>>, %arg11: memref<2x1x128xf32, #tpu.memory_space<vmem>>, %arg12: memref<2x1x128xf32, #tpu.memory_space<vmem>>, %arg13: memref<2x1x128xf32, #tpu.memory_space<vmem>>, %arg14: memref<2x128x256xbf16, #tpu.memory_space<vmem>>, %arg15: memref<2x1x256xf32, #tpu.memory_space<vmem>>, %arg16: memref<2x256x128xbf16, #tpu.memory_space<vmem>>, %arg17: memref<2x1x128xf32, #tpu.memory_space<vmem>>, %arg18: memref<2x1x128xf32, #tpu.memory_space<vmem>>, %arg19: memref<2x1x128xf32, #tpu.memory_space<vmem>>, %arg20: memref<128x2xbf16, #tpu.memory_space<vmem>>, %arg21: memref<1x2xf32, #tpu.memory_space<vmem>>, %arg22: memref<2x2xf32, #tpu.memory_space<vmem>>) attributes {dimension_semantics = [], scalar_prefetch = 0 : i64, scratch_operands = 0 : i64, tpu.core_type = #tpu.core_type<tc>} {
    %c0 = arith.constant 0 : index
    %c0_0 = arith.constant 0 : index
    %c0_1 = arith.constant 0 : index
    %0 = vector.load %arg0[%c0, %c0_0, %c0_1] : memref<2x8x128xf32, #tpu.memory_space<vmem>>, vector<2x8x128xf32>
    %1 = vector.shape_cast %0 : vector<2x8x128xf32> to vector<16x128xf32>
    %c0_2 = arith.constant 0 : index
    %c0_3 = arith.constant 0 : index
    %2 = vector.load %arg2[%c0_2, %c0_3] : memref<1x128xf32, #tpu.memory_space<vmem>>, vector<1x128xf32>
    %c0_4 = arith.constant 0 : index
    %c0_5 = arith.constant 0 : index
    %3 = vector.load %arg3[%c0_4, %c0_5] : memref<1x128xf32, #tpu.memory_space<vmem>>, vector<1x128xf32>
    %cst = arith.constant dense<0.000000e+00> : vector<16xf32>
    %4 = vector.multi_reduction <add>, %1, %cst [1] : vector<16x128xf32> to vector<16xf32>
    %5 = vector.shape_cast %4 : vector<16xf32> to vector<16x1xf32>
    %cst_6 = arith.constant 1.280000e+02 : f32
    %6 = vector.broadcast %cst_6 : f32 to vector<16x1xf32>
    %7 = arith.divf %5, %6 : vector<16x1xf32>
    %8 = vector.broadcast %7 : vector<16x1xf32> to vector<16x128xf32>
    %9 = arith.subf %1, %8 : vector<16x128xf32>
    %10 = arith.mulf %9, %9 : vector<16x128xf32>
    %cst_7 = arith.constant dense<0.000000e+00> : vector<16xf32>
    %11 = vector.multi_reduction <add>, %10, %cst_7 [1] : vector<16x128xf32> to vector<16xf32>
    %12 = vector.shape_cast %11 : vector<16xf32> to vector<16x1xf32>
    %cst_8 = arith.constant 1.280000e+02 : f32
    %13 = vector.broadcast %cst_8 : f32 to vector<16x1xf32>
    %14 = arith.divf %12, %13 : vector<16x1xf32>
    %15 = vector.broadcast %7 : vector<16x1xf32> to vector<16x128xf32>
    %16 = arith.subf %1, %15 : vector<16x128xf32>
    %cst_9 = arith.constant 9.99999996E-13 : f32
    %17 = vector.broadcast %cst_9 : f32 to vector<16x1xf32>
    %18 = arith.addf %14, %17 : vector<16x1xf32>
    %19 = math.rsqrt %18 : vector<16x1xf32>
    %20 = vector.broadcast %19 : vector<16x1xf32> to vector<16x128xf32>
    %21 = arith.mulf %16, %20 : vector<16x128xf32>
    %22 = vector.broadcast %2 : vector<1x128xf32> to vector<16x128xf32>
    %23 = arith.mulf %21, %22 : vector<16x128xf32>
    %24 = vector.broadcast %3 : vector<1x128xf32> to vector<16x128xf32>
    %25 = arith.addf %23, %24 : vector<16x128xf32>
    %c0_10 = arith.constant 0 : index
    %c0_11 = arith.constant 0 : index
    %26 = vector.load %arg1[%c0_10, %c0_11] : memref<2x8xf32, #tpu.memory_space<vmem>>, vector<2x8xf32>
    %c0_12 = arith.constant 0 : index
    %c0_13 = arith.constant 0 : index
    %c0_14 = arith.constant 0 : index
    %27 = vector.load %arg4[%c0_12, %c0_13, %c0_14] : memref<2x128x128xbf16, #tpu.memory_space<vmem>>, vector<1x128x128xbf16>
    %28 = vector.shape_cast %27 : vector<1x128x128xbf16> to vector<128x128xbf16>
    %c0_15 = arith.constant 0 : index
    %c0_16 = arith.constant 0 : index
    %c0_17 = arith.constant 0 : index
    %29 = vector.load %arg6[%c0_15, %c0_16, %c0_17] : memref<2x128x128xbf16, #tpu.memory_space<vmem>>, vector<1x128x128xbf16>
    %30 = vector.shape_cast %29 : vector<1x128x128xbf16> to vector<128x128xbf16>
    %c0_18 = arith.constant 0 : index
    %c0_19 = arith.constant 0 : index
    %c0_20 = arith.constant 0 : index
    %31 = vector.load %arg8[%c0_18, %c0_19, %c0_20] : memref<2x128x128xbf16, #tpu.memory_space<vmem>>, vector<1x128x128xbf16>
    %32 = vector.shape_cast %31 : vector<1x128x128xbf16> to vector<128x128xbf16>
    %c0_21 = arith.constant 0 : index
    %c0_22 = arith.constant 0 : index
    %c0_23 = arith.constant 0 : index
    %33 = vector.load %arg10[%c0_21, %c0_22, %c0_23] : memref<2x128x128xbf16, #tpu.memory_space<vmem>>, vector<1x128x128xbf16>
    %34 = vector.shape_cast %33 : vector<1x128x128xbf16> to vector<128x128xbf16>
    %35 = arith.truncf %25 : vector<16x128xf32> to vector<16x128xbf16>
    %cst_24 = arith.constant dense<0.000000e+00> : vector<16x128xf32>
    %36 = tpu.matmul %35, %28, %cst_24 {dimension_numbers = #tpu.dot_dimension_numbers<[1], [0], [0], [1], [0, 0, 1, 1], [], []>} : vector<16x128xbf16>, vector<128x128xbf16>, vector<16x128xf32> -> vector<16x128xf32>
    %c0_25 = arith.constant 0 : index
    %c0_26 = arith.constant 0 : index
    %c0_27 = arith.constant 0 : index
    %37 = vector.load %arg5[%c0_25, %c0_26, %c0_27] : memref<2x1x128xf32, #tpu.memory_space<vmem>>, vector<1x1x128xf32>
    %38 = vector.shape_cast %37 : vector<1x1x128xf32> to vector<1x128xf32>
    %39 = vector.broadcast %38 : vector<1x128xf32> to vector<16x128xf32>
    %40 = arith.addf %36, %39 : vector<16x128xf32>
    %41 = arith.truncf %25 : vector<16x128xf32> to vector<16x128xbf16>
    %cst_28 = arith.constant dense<0.000000e+00> : vector<16x128xf32>
    %42 = tpu.matmul %41, %30, %cst_28 {dimension_numbers = #tpu.dot_dimension_numbers<[1], [0], [0], [1], [0, 0, 1, 1], [], []>} : vector<16x128xbf16>, vector<128x128xbf16>, vector<16x128xf32> -> vector<16x128xf32>
    %c0_29 = arith.constant 0 : index
    %c0_30 = arith.constant 0 : index
    %c0_31 = arith.constant 0 : index
    %43 = vector.load %arg7[%c0_29, %c0_30, %c0_31] : memref<2x1x128xf32, #tpu.memory_space<vmem>>, vector<1x1x128xf32>
    %44 = vector.shape_cast %43 : vector<1x1x128xf32> to vector<1x128xf32>
    %45 = vector.broadcast %44 : vector<1x128xf32> to vector<16x128xf32>
    %46 = arith.addf %42, %45 : vector<16x128xf32>
    %47 = arith.truncf %25 : vector<16x128xf32> to vector<16x128xbf16>
    %cst_32 = arith.constant dense<0.000000e+00> : vector<16x128xf32>
    %48 = tpu.matmul %47, %32, %cst_32 {dimension_numbers = #tpu.dot_dimension_numbers<[1], [0], [0], [1], [0, 0, 1, 1], [], []>} : vector<16x128xbf16>, vector<128x128xbf16>, vector<16x128xf32> -> vector<16x128xf32>
    %c0_33 = arith.constant 0 : index
    %c0_34 = arith.constant 0 : index
    %c0_35 = arith.constant 0 : index
    %49 = vector.load %arg9[%c0_33, %c0_34, %c0_35] : memref<2x1x128xf32, #tpu.memory_space<vmem>>, vector<1x1x128xf32>
    %50 = vector.shape_cast %49 : vector<1x1x128xf32> to vector<1x128xf32>
    %51 = vector.broadcast %50 : vector<1x128xf32> to vector<16x128xf32>
    %52 = arith.addf %48, %51 : vector<16x128xf32>
    %cst_36 = arith.constant 1.250000e-01 : f32
    %53 = vector.broadcast %cst_36 : f32 to vector<16x128xf32>
    %54 = arith.mulf %40, %53 : vector<16x128xf32>
    %55 = vector.extract_strided_slice %54 {offsets = [0, 0], sizes = [8, 128], strides = [1, 1]} : vector<16x128xf32> to vector<8x128xf32>
    %56 = vector.extract_strided_slice %46 {offsets = [0, 0], sizes = [8, 128], strides = [1, 1]} : vector<16x128xf32> to vector<8x128xf32>
    %57 = vector.extract_strided_slice %52 {offsets = [0, 0], sizes = [8, 128], strides = [1, 1]} : vector<16x128xf32> to vector<8x128xf32>
    %58 = vector.extract_strided_slice %26 {offsets = [0, 0], sizes = [1, 8], strides = [1, 1]} : vector<2x8xf32> to vector<1x8xf32>
    %cst_37 = arith.constant 0.000000e+00 : f32
    %59 = vector.broadcast %cst_37 : f32 to vector<8x128xf32>
    %60 = vector.extract_strided_slice %55 {offsets = [0, 0], sizes = [8, 64], strides = [1, 1]} : vector<8x128xf32> to vector<8x64xf32>
    %61 = vector.extract_strided_slice %56 {offsets = [0, 0], sizes = [8, 64], strides = [1, 1]} : vector<8x128xf32> to vector<8x64xf32>
    %62 = vector.extract_strided_slice %57 {offsets = [0, 0], sizes = [8, 64], strides = [1, 1]} : vector<8x128xf32> to vector<8x64xf32>
    %63 = arith.truncf %60 : vector<8x64xf32> to vector<8x64xbf16>
    %64 = arith.truncf %61 : vector<8x64xf32> to vector<8x64xbf16>
    %cst_38 = arith.constant dense<0.000000e+00> : vector<8x8xf32>
    %65 = tpu.matmul %63, %64, %cst_38 {dimension_numbers = #tpu.dot_dimension_numbers<[1], [1], [0], [0], [0, 0, 1, 0], [], []>} : vector<8x64xbf16>, vector<8x64xbf16>, vector<8x8xf32> -> vector<8x8xf32>
    %66 = vector.broadcast %58 : vector<1x8xf32> to vector<8x8xf32>
    %67 = arith.addf %65, %66 : vector<8x8xf32>
    %cst_39 = arith.constant dense<0xFF800000> : vector<8xf32>
    %68 = vector.multi_reduction <maximumf>, %67, %cst_39 [1] : vector<8x8xf32> to vector<8xf32>
    %69 = vector.shape_cast %68 : vector<8xf32> to vector<8x1xf32>
    %70 = vector.broadcast %69 : vector<8x1xf32> to vector<8x8xf32>
    %71 = arith.subf %67, %70 : vector<8x8xf32>
    %72 = math.exp %71 : vector<8x8xf32>
    %cst_40 = arith.constant dense<0.000000e+00> : vector<8xf32>
    %73 = vector.multi_reduction <add>, %72, %cst_40 [1] : vector<8x8xf32> to vector<8xf32>
    %74 = vector.shape_cast %73 : vector<8xf32> to vector<8x1xf32>
    %75 = tpu.reciprocal %74 {approx = true} : vector<8x1xf32> -> vector<8x1xf32>
    %76 = vector.broadcast %75 : vector<8x1xf32> to vector<8x8xf32>
    %77 = arith.mulf %72, %76 : vector<8x8xf32>
    %78 = arith.truncf %77 : vector<8x8xf32> to vector<8x8xbf16>
    %79 = arith.truncf %62 : vector<8x64xf32> to vector<8x64xbf16>
    %cst_41 = arith.constant dense<0.000000e+00> : vector<8x64xf32>
    %80 = tpu.matmul %78, %79, %cst_41 {dimension_numbers = #tpu.dot_dimension_numbers<[1], [0], [0], [1], [0, 0, 1, 1], [], []>} : vector<8x8xbf16>, vector<8x64xbf16>, vector<8x64xf32> -> vector<8x64xf32>
    %81 = vector.extract_strided_slice %34 {offsets = [0, 0], sizes = [64, 128], strides = [1, 1]} : vector<128x128xbf16> to vector<64x128xbf16>
    %82 = arith.truncf %80 : vector<8x64xf32> to vector<8x64xbf16>
    %cst_42 = arith.constant dense<0.000000e+00> : vector<8x128xf32>
    %83 = tpu.matmul %82, %81, %cst_42 {dimension_numbers = #tpu.dot_dimension_numbers<[1], [0], [0], [1], [0, 0, 1, 1], [], []>} : vector<8x64xbf16>, vector<64x128xbf16>, vector<8x128xf32> -> vector<8x128xf32>
    %84 = arith.addf %59, %83 : vector<8x128xf32>
    %85 = vector.extract_strided_slice %55 {offsets = [0, 64], sizes = [8, 64], strides = [1, 1]} : vector<8x128xf32> to vector<8x64xf32>
    %86 = vector.extract_strided_slice %56 {offsets = [0, 64], sizes = [8, 64], strides = [1, 1]} : vector<8x128xf32> to vector<8x64xf32>
    %87 = vector.extract_strided_slice %57 {offsets = [0, 64], sizes = [8, 64], strides = [1, 1]} : vector<8x128xf32> to vector<8x64xf32>
    %88 = arith.truncf %85 : vector<8x64xf32> to vector<8x64xbf16>
    %89 = arith.truncf %86 : vector<8x64xf32> to vector<8x64xbf16>
    %cst_43 = arith.constant dense<0.000000e+00> : vector<8x8xf32>
    %90 = tpu.matmul %88, %89, %cst_43 {dimension_numbers = #tpu.dot_dimension_numbers<[1], [1], [0], [0], [0, 0, 1, 0], [], []>} : vector<8x64xbf16>, vector<8x64xbf16>, vector<8x8xf32> -> vector<8x8xf32>
    %91 = vector.broadcast %58 : vector<1x8xf32> to vector<8x8xf32>
    %92 = arith.addf %90, %91 : vector<8x8xf32>
    %cst_44 = arith.constant dense<0xFF800000> : vector<8xf32>
    %93 = vector.multi_reduction <maximumf>, %92, %cst_44 [1] : vector<8x8xf32> to vector<8xf32>
    %94 = vector.shape_cast %93 : vector<8xf32> to vector<8x1xf32>
    %95 = vector.broadcast %94 : vector<8x1xf32> to vector<8x8xf32>
    %96 = arith.subf %92, %95 : vector<8x8xf32>
    %97 = math.exp %96 : vector<8x8xf32>
    %cst_45 = arith.constant dense<0.000000e+00> : vector<8xf32>
    %98 = vector.multi_reduction <add>, %97, %cst_45 [1] : vector<8x8xf32> to vector<8xf32>
    %99 = vector.shape_cast %98 : vector<8xf32> to vector<8x1xf32>
    %100 = tpu.reciprocal %99 {approx = true} : vector<8x1xf32> -> vector<8x1xf32>
    %101 = vector.broadcast %100 : vector<8x1xf32> to vector<8x8xf32>
    %102 = arith.mulf %97, %101 : vector<8x8xf32>
    %103 = arith.truncf %102 : vector<8x8xf32> to vector<8x8xbf16>
    %104 = arith.truncf %87 : vector<8x64xf32> to vector<8x64xbf16>
    %cst_46 = arith.constant dense<0.000000e+00> : vector<8x64xf32>
    %105 = tpu.matmul %103, %104, %cst_46 {dimension_numbers = #tpu.dot_dimension_numbers<[1], [0], [0], [1], [0, 0, 1, 1], [], []>} : vector<8x8xbf16>, vector<8x64xbf16>, vector<8x64xf32> -> vector<8x64xf32>
    %106 = vector.extract_strided_slice %34 {offsets = [64, 0], sizes = [64, 128], strides = [1, 1]} : vector<128x128xbf16> to vector<64x128xbf16>
    %107 = arith.truncf %105 : vector<8x64xf32> to vector<8x64xbf16>
    %cst_47 = arith.constant dense<0.000000e+00> : vector<8x128xf32>
    %108 = tpu.matmul %107, %106, %cst_47 {dimension_numbers = #tpu.dot_dimension_numbers<[1], [0], [0], [1], [0, 0, 1, 1], [], []>} : vector<8x64xbf16>, vector<64x128xbf16>, vector<8x128xf32> -> vector<8x128xf32>
    %109 = arith.addf %84, %108 : vector<8x128xf32>
    %110 = vector.extract_strided_slice %54 {offsets = [8, 0], sizes = [8, 128], strides = [1, 1]} : vector<16x128xf32> to vector<8x128xf32>
    %111 = vector.extract_strided_slice %46 {offsets = [8, 0], sizes = [8, 128], strides = [1, 1]} : vector<16x128xf32> to vector<8x128xf32>
    %112 = vector.extract_strided_slice %52 {offsets = [8, 0], sizes = [8, 128], strides = [1, 1]} : vector<16x128xf32> to vector<8x128xf32>
    %113 = vector.extract_strided_slice %26 {offsets = [1, 0], sizes = [1, 8], strides = [1, 1]} : vector<2x8xf32> to vector<1x8xf32>
    %cst_48 = arith.constant 0.000000e+00 : f32
    %114 = vector.broadcast %cst_48 : f32 to vector<8x128xf32>
    %115 = vector.extract_strided_slice %110 {offsets = [0, 0], sizes = [8, 64], strides = [1, 1]} : vector<8x128xf32> to vector<8x64xf32>
    %116 = vector.extract_strided_slice %111 {offsets = [0, 0], sizes = [8, 64], strides = [1, 1]} : vector<8x128xf32> to vector<8x64xf32>
    %117 = vector.extract_strided_slice %112 {offsets = [0, 0], sizes = [8, 64], strides = [1, 1]} : vector<8x128xf32> to vector<8x64xf32>
    %118 = arith.truncf %115 : vector<8x64xf32> to vector<8x64xbf16>
    %119 = arith.truncf %116 : vector<8x64xf32> to vector<8x64xbf16>
    %cst_49 = arith.constant dense<0.000000e+00> : vector<8x8xf32>
    %120 = tpu.matmul %118, %119, %cst_49 {dimension_numbers = #tpu.dot_dimension_numbers<[1], [1], [0], [0], [0, 0, 1, 0], [], []>} : vector<8x64xbf16>, vector<8x64xbf16>, vector<8x8xf32> -> vector<8x8xf32>
    %121 = vector.broadcast %113 : vector<1x8xf32> to vector<8x8xf32>
    %122 = arith.addf %120, %121 : vector<8x8xf32>
    %cst_50 = arith.constant dense<0xFF800000> : vector<8xf32>
    %123 = vector.multi_reduction <maximumf>, %122, %cst_50 [1] : vector<8x8xf32> to vector<8xf32>
    %124 = vector.shape_cast %123 : vector<8xf32> to vector<8x1xf32>
    %125 = vector.broadcast %124 : vector<8x1xf32> to vector<8x8xf32>
    %126 = arith.subf %122, %125 : vector<8x8xf32>
    %127 = math.exp %126 : vector<8x8xf32>
    %cst_51 = arith.constant dense<0.000000e+00> : vector<8xf32>
    %128 = vector.multi_reduction <add>, %127, %cst_51 [1] : vector<8x8xf32> to vector<8xf32>
    %129 = vector.shape_cast %128 : vector<8xf32> to vector<8x1xf32>
    %130 = tpu.reciprocal %129 {approx = true} : vector<8x1xf32> -> vector<8x1xf32>
    %131 = vector.broadcast %130 : vector<8x1xf32> to vector<8x8xf32>
    %132 = arith.mulf %127, %131 : vector<8x8xf32>
    %133 = arith.truncf %132 : vector<8x8xf32> to vector<8x8xbf16>
    %134 = arith.truncf %117 : vector<8x64xf32> to vector<8x64xbf16>
    %cst_52 = arith.constant dense<0.000000e+00> : vector<8x64xf32>
    %135 = tpu.matmul %133, %134, %cst_52 {dimension_numbers = #tpu.dot_dimension_numbers<[1], [0], [0], [1], [0, 0, 1, 1], [], []>} : vector<8x8xbf16>, vector<8x64xbf16>, vector<8x64xf32> -> vector<8x64xf32>
    %136 = vector.extract_strided_slice %34 {offsets = [0, 0], sizes = [64, 128], strides = [1, 1]} : vector<128x128xbf16> to vector<64x128xbf16>
    %137 = arith.truncf %135 : vector<8x64xf32> to vector<8x64xbf16>
    %cst_53 = arith.constant dense<0.000000e+00> : vector<8x128xf32>
    %138 = tpu.matmul %137, %136, %cst_53 {dimension_numbers = #tpu.dot_dimension_numbers<[1], [0], [0], [1], [0, 0, 1, 1], [], []>} : vector<8x64xbf16>, vector<64x128xbf16>, vector<8x128xf32> -> vector<8x128xf32>
    %139 = arith.addf %114, %138 : vector<8x128xf32>
    %140 = vector.extract_strided_slice %110 {offsets = [0, 64], sizes = [8, 64], strides = [1, 1]} : vector<8x128xf32> to vector<8x64xf32>
    %141 = vector.extract_strided_slice %111 {offsets = [0, 64], sizes = [8, 64], strides = [1, 1]} : vector<8x128xf32> to vector<8x64xf32>
    %142 = vector.extract_strided_slice %112 {offsets = [0, 64], sizes = [8, 64], strides = [1, 1]} : vector<8x128xf32> to vector<8x64xf32>
    %143 = arith.truncf %140 : vector<8x64xf32> to vector<8x64xbf16>
    %144 = arith.truncf %141 : vector<8x64xf32> to vector<8x64xbf16>
    %cst_54 = arith.constant dense<0.000000e+00> : vector<8x8xf32>
    %145 = tpu.matmul %143, %144, %cst_54 {dimension_numbers = #tpu.dot_dimension_numbers<[1], [1], [0], [0], [0, 0, 1, 0], [], []>} : vector<8x64xbf16>, vector<8x64xbf16>, vector<8x8xf32> -> vector<8x8xf32>
    %146 = vector.broadcast %113 : vector<1x8xf32> to vector<8x8xf32>
    %147 = arith.addf %145, %146 : vector<8x8xf32>
    %cst_55 = arith.constant dense<0xFF800000> : vector<8xf32>
    %148 = vector.multi_reduction <maximumf>, %147, %cst_55 [1] : vector<8x8xf32> to vector<8xf32>
    %149 = vector.shape_cast %148 : vector<8xf32> to vector<8x1xf32>
    %150 = vector.broadcast %149 : vector<8x1xf32> to vector<8x8xf32>
    %151 = arith.subf %147, %150 : vector<8x8xf32>
    %152 = math.exp %151 : vector<8x8xf32>
    %cst_56 = arith.constant dense<0.000000e+00> : vector<8xf32>
    %153 = vector.multi_reduction <add>, %152, %cst_56 [1] : vector<8x8xf32> to vector<8xf32>
    %154 = vector.shape_cast %153 : vector<8xf32> to vector<8x1xf32>
    %155 = tpu.reciprocal %154 {approx = true} : vector<8x1xf32> -> vector<8x1xf32>
    %156 = vector.broadcast %155 : vector<8x1xf32> to vector<8x8xf32>
    %157 = arith.mulf %152, %156 : vector<8x8xf32>
    %158 = arith.truncf %157 : vector<8x8xf32> to vector<8x8xbf16>
    %159 = arith.truncf %142 : vector<8x64xf32> to vector<8x64xbf16>
    %cst_57 = arith.constant dense<0.000000e+00> : vector<8x64xf32>
    %160 = tpu.matmul %158, %159, %cst_57 {dimension_numbers = #tpu.dot_dimension_numbers<[1], [0], [0], [1], [0, 0, 1, 1], [], []>} : vector<8x8xbf16>, vector<8x64xbf16>, vector<8x64xf32> -> vector<8x64xf32>
    %161 = vector.extract_strided_slice %34 {offsets = [64, 0], sizes = [64, 128], strides = [1, 1]} : vector<128x128xbf16> to vector<64x128xbf16>
    %162 = arith.truncf %160 : vector<8x64xf32> to vector<8x64xbf16>
    %cst_58 = arith.constant dense<0.000000e+00> : vector<8x128xf32>
    %163 = tpu.matmul %162, %161, %cst_58 {dimension_numbers = #tpu.dot_dimension_numbers<[1], [0], [0], [1], [0, 0, 1, 1], [], []>} : vector<8x64xbf16>, vector<64x128xbf16>, vector<8x128xf32> -> vector<8x128xf32>
    %164 = arith.addf %139, %163 : vector<8x128xf32>
    %165 = tpu.concatenate %109, %164 in 0 : vector<8x128xf32>, vector<8x128xf32> -> vector<16x128xf32>
    %c0_59 = arith.constant 0 : index
    %c0_60 = arith.constant 0 : index
    %c0_61 = arith.constant 0 : index
    %166 = vector.load %arg11[%c0_59, %c0_60, %c0_61] : memref<2x1x128xf32, #tpu.memory_space<vmem>>, vector<1x1x128xf32>
    %167 = vector.shape_cast %166 : vector<1x1x128xf32> to vector<1x128xf32>
    %168 = vector.broadcast %167 : vector<1x128xf32> to vector<16x128xf32>
    %169 = arith.addf %165, %168 : vector<16x128xf32>
    %170 = arith.addf %169, %25 : vector<16x128xf32>
    %c0_62 = arith.constant 0 : index
    %c0_63 = arith.constant 0 : index
    %c0_64 = arith.constant 0 : index
    %171 = vector.load %arg12[%c0_62, %c0_63, %c0_64] : memref<2x1x128xf32, #tpu.memory_space<vmem>>, vector<1x1x128xf32>
    %172 = vector.shape_cast %171 : vector<1x1x128xf32> to vector<1x128xf32>
    %c0_65 = arith.constant 0 : index
    %c0_66 = arith.constant 0 : index
    %c0_67 = arith.constant 0 : index
    %173 = vector.load %arg13[%c0_65, %c0_66, %c0_67] : memref<2x1x128xf32, #tpu.memory_space<vmem>>, vector<1x1x128xf32>
    %174 = vector.shape_cast %173 : vector<1x1x128xf32> to vector<1x128xf32>
    %cst_68 = arith.constant dense<0.000000e+00> : vector<16xf32>
    %175 = vector.multi_reduction <add>, %170, %cst_68 [1] : vector<16x128xf32> to vector<16xf32>
    %176 = vector.shape_cast %175 : vector<16xf32> to vector<16x1xf32>
    %cst_69 = arith.constant 1.280000e+02 : f32
    %177 = vector.broadcast %cst_69 : f32 to vector<16x1xf32>
    %178 = arith.divf %176, %177 : vector<16x1xf32>
    %179 = vector.broadcast %178 : vector<16x1xf32> to vector<16x128xf32>
    %180 = arith.subf %170, %179 : vector<16x128xf32>
    %181 = arith.mulf %180, %180 : vector<16x128xf32>
    %cst_70 = arith.constant dense<0.000000e+00> : vector<16xf32>
    %182 = vector.multi_reduction <add>, %181, %cst_70 [1] : vector<16x128xf32> to vector<16xf32>
    %183 = vector.shape_cast %182 : vector<16xf32> to vector<16x1xf32>
    %cst_71 = arith.constant 1.280000e+02 : f32
    %184 = vector.broadcast %cst_71 : f32 to vector<16x1xf32>
    %185 = arith.divf %183, %184 : vector<16x1xf32>
    %186 = vector.broadcast %178 : vector<16x1xf32> to vector<16x128xf32>
    %187 = arith.subf %170, %186 : vector<16x128xf32>
    %cst_72 = arith.constant 9.99999996E-13 : f32
    %188 = vector.broadcast %cst_72 : f32 to vector<16x1xf32>
    %189 = arith.addf %185, %188 : vector<16x1xf32>
    %190 = math.rsqrt %189 : vector<16x1xf32>
    %191 = vector.broadcast %190 : vector<16x1xf32> to vector<16x128xf32>
    %192 = arith.mulf %187, %191 : vector<16x128xf32>
    %193 = vector.broadcast %172 : vector<1x128xf32> to vector<16x128xf32>
    %194 = arith.mulf %192, %193 : vector<16x128xf32>
    %195 = vector.broadcast %174 : vector<1x128xf32> to vector<16x128xf32>
    %196 = arith.addf %194, %195 : vector<16x128xf32>
    %c0_73 = arith.constant 0 : index
    %c0_74 = arith.constant 0 : index
    %c0_75 = arith.constant 0 : index
    %197 = vector.load %arg14[%c0_73, %c0_74, %c0_75] : memref<2x128x256xbf16, #tpu.memory_space<vmem>>, vector<1x128x256xbf16>
    %198 = vector.shape_cast %197 : vector<1x128x256xbf16> to vector<128x256xbf16>
    %199 = arith.truncf %196 : vector<16x128xf32> to vector<16x128xbf16>
    %cst_76 = arith.constant dense<0.000000e+00> : vector<16x256xf32>
    %200 = tpu.matmul %199, %198, %cst_76 {dimension_numbers = #tpu.dot_dimension_numbers<[1], [0], [0], [1], [0, 0, 1, 1], [], []>} : vector<16x128xbf16>, vector<128x256xbf16>, vector<16x256xf32> -> vector<16x256xf32>
    %c0_77 = arith.constant 0 : index
    %c0_78 = arith.constant 0 : index
    %c0_79 = arith.constant 0 : index
    %201 = vector.load %arg15[%c0_77, %c0_78, %c0_79] : memref<2x1x256xf32, #tpu.memory_space<vmem>>, vector<1x1x256xf32>
    %202 = vector.shape_cast %201 : vector<1x1x256xf32> to vector<1x256xf32>
    %203 = vector.broadcast %202 : vector<1x256xf32> to vector<16x256xf32>
    %204 = arith.addf %200, %203 : vector<16x256xf32>
    %cst_80 = arith.constant 5.000000e-01 : f32
    %205 = vector.broadcast %cst_80 : f32 to vector<16x256xf32>
    %206 = arith.mulf %205, %204 : vector<16x256xf32>
    %cst_81 = arith.constant 4.471500e-02 : f32
    %207 = vector.broadcast %cst_81 : f32 to vector<16x256xf32>
    %208 = arith.mulf %207, %204 : vector<16x256xf32>
    %209 = arith.mulf %208, %204 : vector<16x256xf32>
    %210 = arith.mulf %209, %204 : vector<16x256xf32>
    %211 = arith.addf %204, %210 : vector<16x256xf32>
    %cst_82 = arith.constant 0.797884583 : f32
    %212 = vector.broadcast %cst_82 : f32 to vector<16x256xf32>
    %213 = arith.mulf %212, %211 : vector<16x256xf32>
    %214 = math.tanh %213 : vector<16x256xf32>
    %cst_83 = arith.constant 1.000000e+00 : f32
    %215 = vector.broadcast %cst_83 : f32 to vector<16x256xf32>
    %216 = arith.addf %215, %214 : vector<16x256xf32>
    %217 = arith.mulf %206, %216 : vector<16x256xf32>
    %c0_84 = arith.constant 0 : index
    %c0_85 = arith.constant 0 : index
    %c0_86 = arith.constant 0 : index
    %218 = vector.load %arg16[%c0_84, %c0_85, %c0_86] : memref<2x256x128xbf16, #tpu.memory_space<vmem>>, vector<1x256x128xbf16>
    %219 = vector.shape_cast %218 : vector<1x256x128xbf16> to vector<256x128xbf16>
    %220 = arith.truncf %217 : vector<16x256xf32> to vector<16x256xbf16>
    %cst_87 = arith.constant dense<0.000000e+00> : vector<16x128xf32>
    %221 = tpu.matmul %220, %219, %cst_87 {dimension_numbers = #tpu.dot_dimension_numbers<[1], [0], [0], [1], [0, 0, 1, 1], [], []>} : vector<16x256xbf16>, vector<256x128xbf16>, vector<16x128xf32> -> vector<16x128xf32>
    %c0_88 = arith.constant 0 : index
    %c0_89 = arith.constant 0 : index
    %c0_90 = arith.constant 0 : index
    %222 = vector.load %arg17[%c0_88, %c0_89, %c0_90] : memref<2x1x128xf32, #tpu.memory_space<vmem>>, vector<1x1x128xf32>
    %223 = vector.shape_cast %222 : vector<1x1x128xf32> to vector<1x128xf32>
    %224 = vector.broadcast %223 : vector<1x128xf32> to vector<16x128xf32>
    %225 = arith.addf %221, %224 : vector<16x128xf32>
    %226 = arith.addf %225, %196 : vector<16x128xf32>
    %c0_91 = arith.constant 0 : index
    %c0_92 = arith.constant 0 : index
    %c0_93 = arith.constant 0 : index
    %227 = vector.load %arg18[%c0_91, %c0_92, %c0_93] : memref<2x1x128xf32, #tpu.memory_space<vmem>>, vector<1x1x128xf32>
    %228 = vector.shape_cast %227 : vector<1x1x128xf32> to vector<1x128xf32>
    %c0_94 = arith.constant 0 : index
    %c0_95 = arith.constant 0 : index
    %c0_96 = arith.constant 0 : index
    %229 = vector.load %arg19[%c0_94, %c0_95, %c0_96] : memref<2x1x128xf32, #tpu.memory_space<vmem>>, vector<1x1x128xf32>
    %230 = vector.shape_cast %229 : vector<1x1x128xf32> to vector<1x128xf32>
    %cst_97 = arith.constant dense<0.000000e+00> : vector<16xf32>
    %231 = vector.multi_reduction <add>, %226, %cst_97 [1] : vector<16x128xf32> to vector<16xf32>
    %232 = vector.shape_cast %231 : vector<16xf32> to vector<16x1xf32>
    %cst_98 = arith.constant 1.280000e+02 : f32
    %233 = vector.broadcast %cst_98 : f32 to vector<16x1xf32>
    %234 = arith.divf %232, %233 : vector<16x1xf32>
    %235 = vector.broadcast %234 : vector<16x1xf32> to vector<16x128xf32>
    %236 = arith.subf %226, %235 : vector<16x128xf32>
    %237 = arith.mulf %236, %236 : vector<16x128xf32>
    %cst_99 = arith.constant dense<0.000000e+00> : vector<16xf32>
    %238 = vector.multi_reduction <add>, %237, %cst_99 [1] : vector<16x128xf32> to vector<16xf32>
    %239 = vector.shape_cast %238 : vector<16xf32> to vector<16x1xf32>
    %cst_100 = arith.constant 1.280000e+02 : f32
    %240 = vector.broadcast %cst_100 : f32 to vector<16x1xf32>
    %241 = arith.divf %239, %240 : vector<16x1xf32>
    %242 = vector.broadcast %234 : vector<16x1xf32> to vector<16x128xf32>
    %243 = arith.subf %226, %242 : vector<16x128xf32>
    %cst_101 = arith.constant 9.99999996E-13 : f32
    %244 = vector.broadcast %cst_101 : f32 to vector<16x1xf32>
    %245 = arith.addf %241, %244 : vector<16x1xf32>
    %246 = math.rsqrt %245 : vector<16x1xf32>
    %247 = vector.broadcast %246 : vector<16x1xf32> to vector<16x128xf32>
    %248 = arith.mulf %243, %247 : vector<16x128xf32>
    %249 = vector.broadcast %228 : vector<1x128xf32> to vector<16x128xf32>
    %250 = arith.mulf %248, %249 : vector<16x128xf32>
    %251 = vector.broadcast %230 : vector<1x128xf32> to vector<16x128xf32>
    %252 = arith.addf %250, %251 : vector<16x128xf32>
    %c1 = arith.constant 1 : index
    %c0_102 = arith.constant 0 : index
    %c0_103 = arith.constant 0 : index
    %253 = vector.load %arg4[%c1, %c0_102, %c0_103] : memref<2x128x128xbf16, #tpu.memory_space<vmem>>, vector<1x128x128xbf16>
    %254 = vector.shape_cast %253 : vector<1x128x128xbf16> to vector<128x128xbf16>
    %c1_104 = arith.constant 1 : index
    %c0_105 = arith.constant 0 : index
    %c0_106 = arith.constant 0 : index
    %255 = vector.load %arg6[%c1_104, %c0_105, %c0_106] : memref<2x128x128xbf16, #tpu.memory_space<vmem>>, vector<1x128x128xbf16>
    %256 = vector.shape_cast %255 : vector<1x128x128xbf16> to vector<128x128xbf16>
    %c1_107 = arith.constant 1 : index
    %c0_108 = arith.constant 0 : index
    %c0_109 = arith.constant 0 : index
    %257 = vector.load %arg8[%c1_107, %c0_108, %c0_109] : memref<2x128x128xbf16, #tpu.memory_space<vmem>>, vector<1x128x128xbf16>
    %258 = vector.shape_cast %257 : vector<1x128x128xbf16> to vector<128x128xbf16>
    %c1_110 = arith.constant 1 : index
    %c0_111 = arith.constant 0 : index
    %c0_112 = arith.constant 0 : index
    %259 = vector.load %arg10[%c1_110, %c0_111, %c0_112] : memref<2x128x128xbf16, #tpu.memory_space<vmem>>, vector<1x128x128xbf16>
    %260 = vector.shape_cast %259 : vector<1x128x128xbf16> to vector<128x128xbf16>
    %261 = arith.truncf %252 : vector<16x128xf32> to vector<16x128xbf16>
    %cst_113 = arith.constant dense<0.000000e+00> : vector<16x128xf32>
    %262 = tpu.matmul %261, %254, %cst_113 {dimension_numbers = #tpu.dot_dimension_numbers<[1], [0], [0], [1], [0, 0, 1, 1], [], []>} : vector<16x128xbf16>, vector<128x128xbf16>, vector<16x128xf32> -> vector<16x128xf32>
    %c1_114 = arith.constant 1 : index
    %c0_115 = arith.constant 0 : index
    %c0_116 = arith.constant 0 : index
    %263 = vector.load %arg5[%c1_114, %c0_115, %c0_116] : memref<2x1x128xf32, #tpu.memory_space<vmem>>, vector<1x1x128xf32>
    %264 = vector.shape_cast %263 : vector<1x1x128xf32> to vector<1x128xf32>
    %265 = vector.broadcast %264 : vector<1x128xf32> to vector<16x128xf32>
    %266 = arith.addf %262, %265 : vector<16x128xf32>
    %267 = arith.truncf %252 : vector<16x128xf32> to vector<16x128xbf16>
    %cst_117 = arith.constant dense<0.000000e+00> : vector<16x128xf32>
    %268 = tpu.matmul %267, %256, %cst_117 {dimension_numbers = #tpu.dot_dimension_numbers<[1], [0], [0], [1], [0, 0, 1, 1], [], []>} : vector<16x128xbf16>, vector<128x128xbf16>, vector<16x128xf32> -> vector<16x128xf32>
    %c1_118 = arith.constant 1 : index
    %c0_119 = arith.constant 0 : index
    %c0_120 = arith.constant 0 : index
    %269 = vector.load %arg7[%c1_118, %c0_119, %c0_120] : memref<2x1x128xf32, #tpu.memory_space<vmem>>, vector<1x1x128xf32>
    %270 = vector.shape_cast %269 : vector<1x1x128xf32> to vector<1x128xf32>
    %271 = vector.broadcast %270 : vector<1x128xf32> to vector<16x128xf32>
    %272 = arith.addf %268, %271 : vector<16x128xf32>
    %273 = arith.truncf %252 : vector<16x128xf32> to vector<16x128xbf16>
    %cst_121 = arith.constant dense<0.000000e+00> : vector<16x128xf32>
    %274 = tpu.matmul %273, %258, %cst_121 {dimension_numbers = #tpu.dot_dimension_numbers<[1], [0], [0], [1], [0, 0, 1, 1], [], []>} : vector<16x128xbf16>, vector<128x128xbf16>, vector<16x128xf32> -> vector<16x128xf32>
    %c1_122 = arith.constant 1 : index
    %c0_123 = arith.constant 0 : index
    %c0_124 = arith.constant 0 : index
    %275 = vector.load %arg9[%c1_122, %c0_123, %c0_124] : memref<2x1x128xf32, #tpu.memory_space<vmem>>, vector<1x1x128xf32>
    %276 = vector.shape_cast %275 : vector<1x1x128xf32> to vector<1x128xf32>
    %277 = vector.broadcast %276 : vector<1x128xf32> to vector<16x128xf32>
    %278 = arith.addf %274, %277 : vector<16x128xf32>
    %cst_125 = arith.constant 1.250000e-01 : f32
    %279 = vector.broadcast %cst_125 : f32 to vector<16x128xf32>
    %280 = arith.mulf %266, %279 : vector<16x128xf32>
    %281 = vector.extract_strided_slice %280 {offsets = [0, 0], sizes = [8, 128], strides = [1, 1]} : vector<16x128xf32> to vector<8x128xf32>
    %282 = vector.extract_strided_slice %272 {offsets = [0, 0], sizes = [8, 128], strides = [1, 1]} : vector<16x128xf32> to vector<8x128xf32>
    %283 = vector.extract_strided_slice %278 {offsets = [0, 0], sizes = [8, 128], strides = [1, 1]} : vector<16x128xf32> to vector<8x128xf32>
    %284 = vector.extract_strided_slice %26 {offsets = [0, 0], sizes = [1, 8], strides = [1, 1]} : vector<2x8xf32> to vector<1x8xf32>
    %cst_126 = arith.constant 0.000000e+00 : f32
    %285 = vector.broadcast %cst_126 : f32 to vector<8x128xf32>
    %286 = vector.extract_strided_slice %281 {offsets = [0, 0], sizes = [8, 64], strides = [1, 1]} : vector<8x128xf32> to vector<8x64xf32>
    %287 = vector.extract_strided_slice %282 {offsets = [0, 0], sizes = [8, 64], strides = [1, 1]} : vector<8x128xf32> to vector<8x64xf32>
    %288 = vector.extract_strided_slice %283 {offsets = [0, 0], sizes = [8, 64], strides = [1, 1]} : vector<8x128xf32> to vector<8x64xf32>
    %289 = arith.truncf %286 : vector<8x64xf32> to vector<8x64xbf16>
    %290 = arith.truncf %287 : vector<8x64xf32> to vector<8x64xbf16>
    %cst_127 = arith.constant dense<0.000000e+00> : vector<8x8xf32>
    %291 = tpu.matmul %289, %290, %cst_127 {dimension_numbers = #tpu.dot_dimension_numbers<[1], [1], [0], [0], [0, 0, 1, 0], [], []>} : vector<8x64xbf16>, vector<8x64xbf16>, vector<8x8xf32> -> vector<8x8xf32>
    %292 = vector.broadcast %284 : vector<1x8xf32> to vector<8x8xf32>
    %293 = arith.addf %291, %292 : vector<8x8xf32>
    %cst_128 = arith.constant dense<0xFF800000> : vector<8xf32>
    %294 = vector.multi_reduction <maximumf>, %293, %cst_128 [1] : vector<8x8xf32> to vector<8xf32>
    %295 = vector.shape_cast %294 : vector<8xf32> to vector<8x1xf32>
    %296 = vector.broadcast %295 : vector<8x1xf32> to vector<8x8xf32>
    %297 = arith.subf %293, %296 : vector<8x8xf32>
    %298 = math.exp %297 : vector<8x8xf32>
    %cst_129 = arith.constant dense<0.000000e+00> : vector<8xf32>
    %299 = vector.multi_reduction <add>, %298, %cst_129 [1] : vector<8x8xf32> to vector<8xf32>
    %300 = vector.shape_cast %299 : vector<8xf32> to vector<8x1xf32>
    %301 = tpu.reciprocal %300 {approx = true} : vector<8x1xf32> -> vector<8x1xf32>
    %302 = vector.broadcast %301 : vector<8x1xf32> to vector<8x8xf32>
    %303 = arith.mulf %298, %302 : vector<8x8xf32>
    %304 = arith.truncf %303 : vector<8x8xf32> to vector<8x8xbf16>
    %305 = arith.truncf %288 : vector<8x64xf32> to vector<8x64xbf16>
    %cst_130 = arith.constant dense<0.000000e+00> : vector<8x64xf32>
    %306 = tpu.matmul %304, %305, %cst_130 {dimension_numbers = #tpu.dot_dimension_numbers<[1], [0], [0], [1], [0, 0, 1, 1], [], []>} : vector<8x8xbf16>, vector<8x64xbf16>, vector<8x64xf32> -> vector<8x64xf32>
    %307 = vector.extract_strided_slice %260 {offsets = [0, 0], sizes = [64, 128], strides = [1, 1]} : vector<128x128xbf16> to vector<64x128xbf16>
    %308 = arith.truncf %306 : vector<8x64xf32> to vector<8x64xbf16>
    %cst_131 = arith.constant dense<0.000000e+00> : vector<8x128xf32>
    %309 = tpu.matmul %308, %307, %cst_131 {dimension_numbers = #tpu.dot_dimension_numbers<[1], [0], [0], [1], [0, 0, 1, 1], [], []>} : vector<8x64xbf16>, vector<64x128xbf16>, vector<8x128xf32> -> vector<8x128xf32>
    %310 = arith.addf %285, %309 : vector<8x128xf32>
    %311 = vector.extract_strided_slice %281 {offsets = [0, 64], sizes = [8, 64], strides = [1, 1]} : vector<8x128xf32> to vector<8x64xf32>
    %312 = vector.extract_strided_slice %282 {offsets = [0, 64], sizes = [8, 64], strides = [1, 1]} : vector<8x128xf32> to vector<8x64xf32>
    %313 = vector.extract_strided_slice %283 {offsets = [0, 64], sizes = [8, 64], strides = [1, 1]} : vector<8x128xf32> to vector<8x64xf32>
    %314 = arith.truncf %311 : vector<8x64xf32> to vector<8x64xbf16>
    %315 = arith.truncf %312 : vector<8x64xf32> to vector<8x64xbf16>
    %cst_132 = arith.constant dense<0.000000e+00> : vector<8x8xf32>
    %316 = tpu.matmul %314, %315, %cst_132 {dimension_numbers = #tpu.dot_dimension_numbers<[1], [1], [0], [0], [0, 0, 1, 0], [], []>} : vector<8x64xbf16>, vector<8x64xbf16>, vector<8x8xf32> -> vector<8x8xf32>
    %317 = vector.broadcast %284 : vector<1x8xf32> to vector<8x8xf32>
    %318 = arith.addf %316, %317 : vector<8x8xf32>
    %cst_133 = arith.constant dense<0xFF800000> : vector<8xf32>
    %319 = vector.multi_reduction <maximumf>, %318, %cst_133 [1] : vector<8x8xf32> to vector<8xf32>
    %320 = vector.shape_cast %319 : vector<8xf32> to vector<8x1xf32>
    %321 = vector.broadcast %320 : vector<8x1xf32> to vector<8x8xf32>
    %322 = arith.subf %318, %321 : vector<8x8xf32>
    %323 = math.exp %322 : vector<8x8xf32>
    %cst_134 = arith.constant dense<0.000000e+00> : vector<8xf32>
    %324 = vector.multi_reduction <add>, %323, %cst_134 [1] : vector<8x8xf32> to vector<8xf32>
    %325 = vector.shape_cast %324 : vector<8xf32> to vector<8x1xf32>
    %326 = tpu.reciprocal %325 {approx = true} : vector<8x1xf32> -> vector<8x1xf32>
    %327 = vector.broadcast %326 : vector<8x1xf32> to vector<8x8xf32>
    %328 = arith.mulf %323, %327 : vector<8x8xf32>
    %329 = arith.truncf %328 : vector<8x8xf32> to vector<8x8xbf16>
    %330 = arith.truncf %313 : vector<8x64xf32> to vector<8x64xbf16>
    %cst_135 = arith.constant dense<0.000000e+00> : vector<8x64xf32>
    %331 = tpu.matmul %329, %330, %cst_135 {dimension_numbers = #tpu.dot_dimension_numbers<[1], [0], [0], [1], [0, 0, 1, 1], [], []>} : vector<8x8xbf16>, vector<8x64xbf16>, vector<8x64xf32> -> vector<8x64xf32>
    %332 = vector.extract_strided_slice %260 {offsets = [64, 0], sizes = [64, 128], strides = [1, 1]} : vector<128x128xbf16> to vector<64x128xbf16>
    %333 = arith.truncf %331 : vector<8x64xf32> to vector<8x64xbf16>
    %cst_136 = arith.constant dense<0.000000e+00> : vector<8x128xf32>
    %334 = tpu.matmul %333, %332, %cst_136 {dimension_numbers = #tpu.dot_dimension_numbers<[1], [0], [0], [1], [0, 0, 1, 1], [], []>} : vector<8x64xbf16>, vector<64x128xbf16>, vector<8x128xf32> -> vector<8x128xf32>
    %335 = arith.addf %310, %334 : vector<8x128xf32>
    %336 = vector.extract_strided_slice %280 {offsets = [8, 0], sizes = [8, 128], strides = [1, 1]} : vector<16x128xf32> to vector<8x128xf32>
    %337 = vector.extract_strided_slice %272 {offsets = [8, 0], sizes = [8, 128], strides = [1, 1]} : vector<16x128xf32> to vector<8x128xf32>
    %338 = vector.extract_strided_slice %278 {offsets = [8, 0], sizes = [8, 128], strides = [1, 1]} : vector<16x128xf32> to vector<8x128xf32>
    %339 = vector.extract_strided_slice %26 {offsets = [1, 0], sizes = [1, 8], strides = [1, 1]} : vector<2x8xf32> to vector<1x8xf32>
    %cst_137 = arith.constant 0.000000e+00 : f32
    %340 = vector.broadcast %cst_137 : f32 to vector<8x128xf32>
    %341 = vector.extract_strided_slice %336 {offsets = [0, 0], sizes = [8, 64], strides = [1, 1]} : vector<8x128xf32> to vector<8x64xf32>
    %342 = vector.extract_strided_slice %337 {offsets = [0, 0], sizes = [8, 64], strides = [1, 1]} : vector<8x128xf32> to vector<8x64xf32>
    %343 = vector.extract_strided_slice %338 {offsets = [0, 0], sizes = [8, 64], strides = [1, 1]} : vector<8x128xf32> to vector<8x64xf32>
    %344 = arith.truncf %341 : vector<8x64xf32> to vector<8x64xbf16>
    %345 = arith.truncf %342 : vector<8x64xf32> to vector<8x64xbf16>
    %cst_138 = arith.constant dense<0.000000e+00> : vector<8x8xf32>
    %346 = tpu.matmul %344, %345, %cst_138 {dimension_numbers = #tpu.dot_dimension_numbers<[1], [1], [0], [0], [0, 0, 1, 0], [], []>} : vector<8x64xbf16>, vector<8x64xbf16>, vector<8x8xf32> -> vector<8x8xf32>
    %347 = vector.broadcast %339 : vector<1x8xf32> to vector<8x8xf32>
    %348 = arith.addf %346, %347 : vector<8x8xf32>
    %cst_139 = arith.constant dense<0xFF800000> : vector<8xf32>
    %349 = vector.multi_reduction <maximumf>, %348, %cst_139 [1] : vector<8x8xf32> to vector<8xf32>
    %350 = vector.shape_cast %349 : vector<8xf32> to vector<8x1xf32>
    %351 = vector.broadcast %350 : vector<8x1xf32> to vector<8x8xf32>
    %352 = arith.subf %348, %351 : vector<8x8xf32>
    %353 = math.exp %352 : vector<8x8xf32>
    %cst_140 = arith.constant dense<0.000000e+00> : vector<8xf32>
    %354 = vector.multi_reduction <add>, %353, %cst_140 [1] : vector<8x8xf32> to vector<8xf32>
    %355 = vector.shape_cast %354 : vector<8xf32> to vector<8x1xf32>
    %356 = tpu.reciprocal %355 {approx = true} : vector<8x1xf32> -> vector<8x1xf32>
    %357 = vector.broadcast %356 : vector<8x1xf32> to vector<8x8xf32>
    %358 = arith.mulf %353, %357 : vector<8x8xf32>
    %359 = arith.truncf %358 : vector<8x8xf32> to vector<8x8xbf16>
    %360 = arith.truncf %343 : vector<8x64xf32> to vector<8x64xbf16>
    %cst_141 = arith.constant dense<0.000000e+00> : vector<8x64xf32>
    %361 = tpu.matmul %359, %360, %cst_141 {dimension_numbers = #tpu.dot_dimension_numbers<[1], [0], [0], [1], [0, 0, 1, 1], [], []>} : vector<8x8xbf16>, vector<8x64xbf16>, vector<8x64xf32> -> vector<8x64xf32>
    %362 = vector.extract_strided_slice %260 {offsets = [0, 0], sizes = [64, 128], strides = [1, 1]} : vector<128x128xbf16> to vector<64x128xbf16>
    %363 = arith.truncf %361 : vector<8x64xf32> to vector<8x64xbf16>
    %cst_142 = arith.constant dense<0.000000e+00> : vector<8x128xf32>
    %364 = tpu.matmul %363, %362, %cst_142 {dimension_numbers = #tpu.dot_dimension_numbers<[1], [0], [0], [1], [0, 0, 1, 1], [], []>} : vector<8x64xbf16>, vector<64x128xbf16>, vector<8x128xf32> -> vector<8x128xf32>
    %365 = arith.addf %340, %364 : vector<8x128xf32>
    %366 = vector.extract_strided_slice %336 {offsets = [0, 64], sizes = [8, 64], strides = [1, 1]} : vector<8x128xf32> to vector<8x64xf32>
    %367 = vector.extract_strided_slice %337 {offsets = [0, 64], sizes = [8, 64], strides = [1, 1]} : vector<8x128xf32> to vector<8x64xf32>
    %368 = vector.extract_strided_slice %338 {offsets = [0, 64], sizes = [8, 64], strides = [1, 1]} : vector<8x128xf32> to vector<8x64xf32>
    %369 = arith.truncf %366 : vector<8x64xf32> to vector<8x64xbf16>
    %370 = arith.truncf %367 : vector<8x64xf32> to vector<8x64xbf16>
    %cst_143 = arith.constant dense<0.000000e+00> : vector<8x8xf32>
    %371 = tpu.matmul %369, %370, %cst_143 {dimension_numbers = #tpu.dot_dimension_numbers<[1], [1], [0], [0], [0, 0, 1, 0], [], []>} : vector<8x64xbf16>, vector<8x64xbf16>, vector<8x8xf32> -> vector<8x8xf32>
    %372 = vector.broadcast %339 : vector<1x8xf32> to vector<8x8xf32>
    %373 = arith.addf %371, %372 : vector<8x8xf32>
    %cst_144 = arith.constant dense<0xFF800000> : vector<8xf32>
    %374 = vector.multi_reduction <maximumf>, %373, %cst_144 [1] : vector<8x8xf32> to vector<8xf32>
    %375 = vector.shape_cast %374 : vector<8xf32> to vector<8x1xf32>
    %376 = vector.broadcast %375 : vector<8x1xf32> to vector<8x8xf32>
    %377 = arith.subf %373, %376 : vector<8x8xf32>
    %378 = math.exp %377 : vector<8x8xf32>
    %cst_145 = arith.constant dense<0.000000e+00> : vector<8xf32>
    %379 = vector.multi_reduction <add>, %378, %cst_145 [1] : vector<8x8xf32> to vector<8xf32>
    %380 = vector.shape_cast %379 : vector<8xf32> to vector<8x1xf32>
    %381 = tpu.reciprocal %380 {approx = true} : vector<8x1xf32> -> vector<8x1xf32>
    %382 = vector.broadcast %381 : vector<8x1xf32> to vector<8x8xf32>
    %383 = arith.mulf %378, %382 : vector<8x8xf32>
    %384 = arith.truncf %383 : vector<8x8xf32> to vector<8x8xbf16>
    %385 = arith.truncf %368 : vector<8x64xf32> to vector<8x64xbf16>
    %cst_146 = arith.constant dense<0.000000e+00> : vector<8x64xf32>
    %386 = tpu.matmul %384, %385, %cst_146 {dimension_numbers = #tpu.dot_dimension_numbers<[1], [0], [0], [1], [0, 0, 1, 1], [], []>} : vector<8x8xbf16>, vector<8x64xbf16>, vector<8x64xf32> -> vector<8x64xf32>
    %387 = vector.extract_strided_slice %260 {offsets = [64, 0], sizes = [64, 128], strides = [1, 1]} : vector<128x128xbf16> to vector<64x128xbf16>
    %388 = arith.truncf %386 : vector<8x64xf32> to vector<8x64xbf16>
    %cst_147 = arith.constant dense<0.000000e+00> : vector<8x128xf32>
    %389 = tpu.matmul %388, %387, %cst_147 {dimension_numbers = #tpu.dot_dimension_numbers<[1], [0], [0], [1], [0, 0, 1, 1], [], []>} : vector<8x64xbf16>, vector<64x128xbf16>, vector<8x128xf32> -> vector<8x128xf32>
    %390 = arith.addf %365, %389 : vector<8x128xf32>
    %391 = tpu.concatenate %335, %390 in 0 : vector<8x128xf32>, vector<8x128xf32> -> vector<16x128xf32>
    %c1_148 = arith.constant 1 : index
    %c0_149 = arith.constant 0 : index
    %c0_150 = arith.constant 0 : index
    %392 = vector.load %arg11[%c1_148, %c0_149, %c0_150] : memref<2x1x128xf32, #tpu.memory_space<vmem>>, vector<1x1x128xf32>
    %393 = vector.shape_cast %392 : vector<1x1x128xf32> to vector<1x128xf32>
    %394 = vector.broadcast %393 : vector<1x128xf32> to vector<16x128xf32>
    %395 = arith.addf %391, %394 : vector<16x128xf32>
    %396 = arith.addf %395, %252 : vector<16x128xf32>
    %c1_151 = arith.constant 1 : index
    %c0_152 = arith.constant 0 : index
    %c0_153 = arith.constant 0 : index
    %397 = vector.load %arg12[%c1_151, %c0_152, %c0_153] : memref<2x1x128xf32, #tpu.memory_space<vmem>>, vector<1x1x128xf32>
    %398 = vector.shape_cast %397 : vector<1x1x128xf32> to vector<1x128xf32>
    %c1_154 = arith.constant 1 : index
    %c0_155 = arith.constant 0 : index
    %c0_156 = arith.constant 0 : index
    %399 = vector.load %arg13[%c1_154, %c0_155, %c0_156] : memref<2x1x128xf32, #tpu.memory_space<vmem>>, vector<1x1x128xf32>
    %400 = vector.shape_cast %399 : vector<1x1x128xf32> to vector<1x128xf32>
    %cst_157 = arith.constant dense<0.000000e+00> : vector<16xf32>
    %401 = vector.multi_reduction <add>, %396, %cst_157 [1] : vector<16x128xf32> to vector<16xf32>
    %402 = vector.shape_cast %401 : vector<16xf32> to vector<16x1xf32>
    %cst_158 = arith.constant 1.280000e+02 : f32
    %403 = vector.broadcast %cst_158 : f32 to vector<16x1xf32>
    %404 = arith.divf %402, %403 : vector<16x1xf32>
    %405 = vector.broadcast %404 : vector<16x1xf32> to vector<16x128xf32>
    %406 = arith.subf %396, %405 : vector<16x128xf32>
    %407 = arith.mulf %406, %406 : vector<16x128xf32>
    %cst_159 = arith.constant dense<0.000000e+00> : vector<16xf32>
    %408 = vector.multi_reduction <add>, %407, %cst_159 [1] : vector<16x128xf32> to vector<16xf32>
    %409 = vector.shape_cast %408 : vector<16xf32> to vector<16x1xf32>
    %cst_160 = arith.constant 1.280000e+02 : f32
    %410 = vector.broadcast %cst_160 : f32 to vector<16x1xf32>
    %411 = arith.divf %409, %410 : vector<16x1xf32>
    %412 = vector.broadcast %404 : vector<16x1xf32> to vector<16x128xf32>
    %413 = arith.subf %396, %412 : vector<16x128xf32>
    %cst_161 = arith.constant 9.99999996E-13 : f32
    %414 = vector.broadcast %cst_161 : f32 to vector<16x1xf32>
    %415 = arith.addf %411, %414 : vector<16x1xf32>
    %416 = math.rsqrt %415 : vector<16x1xf32>
    %417 = vector.broadcast %416 : vector<16x1xf32> to vector<16x128xf32>
    %418 = arith.mulf %413, %417 : vector<16x128xf32>
    %419 = vector.broadcast %398 : vector<1x128xf32> to vector<16x128xf32>
    %420 = arith.mulf %418, %419 : vector<16x128xf32>
    %421 = vector.broadcast %400 : vector<1x128xf32> to vector<16x128xf32>
    %422 = arith.addf %420, %421 : vector<16x128xf32>
    %c1_162 = arith.constant 1 : index
    %c0_163 = arith.constant 0 : index
    %c0_164 = arith.constant 0 : index
    %423 = vector.load %arg14[%c1_162, %c0_163, %c0_164] : memref<2x128x256xbf16, #tpu.memory_space<vmem>>, vector<1x128x256xbf16>
    %424 = vector.shape_cast %423 : vector<1x128x256xbf16> to vector<128x256xbf16>
    %425 = arith.truncf %422 : vector<16x128xf32> to vector<16x128xbf16>
    %cst_165 = arith.constant dense<0.000000e+00> : vector<16x256xf32>
    %426 = tpu.matmul %425, %424, %cst_165 {dimension_numbers = #tpu.dot_dimension_numbers<[1], [0], [0], [1], [0, 0, 1, 1], [], []>} : vector<16x128xbf16>, vector<128x256xbf16>, vector<16x256xf32> -> vector<16x256xf32>
    %c1_166 = arith.constant 1 : index
    %c0_167 = arith.constant 0 : index
    %c0_168 = arith.constant 0 : index
    %427 = vector.load %arg15[%c1_166, %c0_167, %c0_168] : memref<2x1x256xf32, #tpu.memory_space<vmem>>, vector<1x1x256xf32>
    %428 = vector.shape_cast %427 : vector<1x1x256xf32> to vector<1x256xf32>
    %429 = vector.broadcast %428 : vector<1x256xf32> to vector<16x256xf32>
    %430 = arith.addf %426, %429 : vector<16x256xf32>
    %cst_169 = arith.constant 5.000000e-01 : f32
    %431 = vector.broadcast %cst_169 : f32 to vector<16x256xf32>
    %432 = arith.mulf %431, %430 : vector<16x256xf32>
    %cst_170 = arith.constant 4.471500e-02 : f32
    %433 = vector.broadcast %cst_170 : f32 to vector<16x256xf32>
    %434 = arith.mulf %433, %430 : vector<16x256xf32>
    %435 = arith.mulf %434, %430 : vector<16x256xf32>
    %436 = arith.mulf %435, %430 : vector<16x256xf32>
    %437 = arith.addf %430, %436 : vector<16x256xf32>
    %cst_171 = arith.constant 0.797884583 : f32
    %438 = vector.broadcast %cst_171 : f32 to vector<16x256xf32>
    %439 = arith.mulf %438, %437 : vector<16x256xf32>
    %440 = math.tanh %439 : vector<16x256xf32>
    %cst_172 = arith.constant 1.000000e+00 : f32
    %441 = vector.broadcast %cst_172 : f32 to vector<16x256xf32>
    %442 = arith.addf %441, %440 : vector<16x256xf32>
    %443 = arith.mulf %432, %442 : vector<16x256xf32>
    %c1_173 = arith.constant 1 : index
    %c0_174 = arith.constant 0 : index
    %c0_175 = arith.constant 0 : index
    %444 = vector.load %arg16[%c1_173, %c0_174, %c0_175] : memref<2x256x128xbf16, #tpu.memory_space<vmem>>, vector<1x256x128xbf16>
    %445 = vector.shape_cast %444 : vector<1x256x128xbf16> to vector<256x128xbf16>
    %446 = arith.truncf %443 : vector<16x256xf32> to vector<16x256xbf16>
    %cst_176 = arith.constant dense<0.000000e+00> : vector<16x128xf32>
    %447 = tpu.matmul %446, %445, %cst_176 {dimension_numbers = #tpu.dot_dimension_numbers<[1], [0], [0], [1], [0, 0, 1, 1], [], []>} : vector<16x256xbf16>, vector<256x128xbf16>, vector<16x128xf32> -> vector<16x128xf32>
    %c1_177 = arith.constant 1 : index
    %c0_178 = arith.constant 0 : index
    %c0_179 = arith.constant 0 : index
    %448 = vector.load %arg17[%c1_177, %c0_178, %c0_179] : memref<2x1x128xf32, #tpu.memory_space<vmem>>, vector<1x1x128xf32>
    %449 = vector.shape_cast %448 : vector<1x1x128xf32> to vector<1x128xf32>
    %450 = vector.broadcast %449 : vector<1x128xf32> to vector<16x128xf32>
    %451 = arith.addf %447, %450 : vector<16x128xf32>
    %452 = arith.addf %451, %422 : vector<16x128xf32>
    %c1_180 = arith.constant 1 : index
    %c0_181 = arith.constant 0 : index
    %c0_182 = arith.constant 0 : index
    %453 = vector.load %arg18[%c1_180, %c0_181, %c0_182] : memref<2x1x128xf32, #tpu.memory_space<vmem>>, vector<1x1x128xf32>
    %454 = vector.shape_cast %453 : vector<1x1x128xf32> to vector<1x128xf32>
    %c1_183 = arith.constant 1 : index
    %c0_184 = arith.constant 0 : index
    %c0_185 = arith.constant 0 : index
    %455 = vector.load %arg19[%c1_183, %c0_184, %c0_185] : memref<2x1x128xf32, #tpu.memory_space<vmem>>, vector<1x1x128xf32>
    %456 = vector.shape_cast %455 : vector<1x1x128xf32> to vector<1x128xf32>
    %cst_186 = arith.constant dense<0.000000e+00> : vector<16xf32>
    %457 = vector.multi_reduction <add>, %452, %cst_186 [1] : vector<16x128xf32> to vector<16xf32>
    %458 = vector.shape_cast %457 : vector<16xf32> to vector<16x1xf32>
    %cst_187 = arith.constant 1.280000e+02 : f32
    %459 = vector.broadcast %cst_187 : f32 to vector<16x1xf32>
    %460 = arith.divf %458, %459 : vector<16x1xf32>
    %461 = vector.broadcast %460 : vector<16x1xf32> to vector<16x128xf32>
    %462 = arith.subf %452, %461 : vector<16x128xf32>
    %463 = arith.mulf %462, %462 : vector<16x128xf32>
    %cst_188 = arith.constant dense<0.000000e+00> : vector<16xf32>
    %464 = vector.multi_reduction <add>, %463, %cst_188 [1] : vector<16x128xf32> to vector<16xf32>
    %465 = vector.shape_cast %464 : vector<16xf32> to vector<16x1xf32>
    %cst_189 = arith.constant 1.280000e+02 : f32
    %466 = vector.broadcast %cst_189 : f32 to vector<16x1xf32>
    %467 = arith.divf %465, %466 : vector<16x1xf32>
    %468 = vector.broadcast %460 : vector<16x1xf32> to vector<16x128xf32>
    %469 = arith.subf %452, %468 : vector<16x128xf32>
    %cst_190 = arith.constant 9.99999996E-13 : f32
    %470 = vector.broadcast %cst_190 : f32 to vector<16x1xf32>
    %471 = arith.addf %467, %470 : vector<16x1xf32>
    %472 = math.rsqrt %471 : vector<16x1xf32>
    %473 = vector.broadcast %472 : vector<16x1xf32> to vector<16x128xf32>
    %474 = arith.mulf %469, %473 : vector<16x128xf32>
    %475 = vector.broadcast %454 : vector<1x128xf32> to vector<16x128xf32>
    %476 = arith.mulf %474, %475 : vector<16x128xf32>
    %477 = vector.broadcast %456 : vector<1x128xf32> to vector<16x128xf32>
    %478 = arith.addf %476, %477 : vector<16x128xf32>
    %479 = vector.shape_cast %478 : vector<16x128xf32> to vector<2x8x128xf32>
    %cst_191 = arith.constant dense<0.000000e+00> : vector<2x128xf32>
    %480 = vector.multi_reduction <add>, %479, %cst_191 [1] : vector<2x8x128xf32> to vector<2x128xf32>
    %cst_192 = arith.constant 8.000000e+00 : f32
    %481 = vector.broadcast %cst_192 : f32 to vector<2x128xf32>
    %482 = arith.divf %480, %481 : vector<2x128xf32>
    %c0_193 = arith.constant 0 : index
    %c0_194 = arith.constant 0 : index
    %483 = vector.load %arg20[%c0_193, %c0_194] : memref<128x2xbf16, #tpu.memory_space<vmem>>, vector<128x2xbf16>
    %484 = arith.truncf %482 : vector<2x128xf32> to vector<2x128xbf16>
    %cst_195 = arith.constant dense<0.000000e+00> : vector<2x2xf32>
    %485 = tpu.matmul %484, %483, %cst_195 {dimension_numbers = #tpu.dot_dimension_numbers<[1], [0], [0], [1], [0, 0, 1, 1], [], []>} : vector<2x128xbf16>, vector<128x2xbf16>, vector<2x2xf32> -> vector<2x2xf32>
    %c0_196 = arith.constant 0 : index
    %c0_197 = arith.constant 0 : index
    %486 = vector.load %arg21[%c0_196, %c0_197] : memref<1x2xf32, #tpu.memory_space<vmem>>, vector<1x2xf32>
    %487 = vector.broadcast %486 : vector<1x2xf32> to vector<2x2xf32>
    %488 = arith.addf %485, %487 : vector<2x2xf32>
    %c0_198 = arith.constant 0 : index
    %c0_199 = arith.constant 0 : index
    %489 = vector.load %arg22[%c0_198, %c0_199] : memref<2x2xf32, #tpu.memory_space<vmem>>, vector<2x2xf32>
    tpu.vector_store %arg22[%c0_198, %c0_199], %488 {strides = array<i32>} : memref<2x2xf32, #tpu.memory_space<vmem>>, vector<2x2xf32>,
    return
  }
}

</mosaic_0001>

<llo_original>
// kernel: forward.1
$region0: #{forward.1}
  #allocation0 [shape = 'u32[]', space=smem, size = 0x4, offset = 0x4, fixed_abs, tag = 'smem constant byte address 0x4 - core index']
  #allocation1 [shape = 'u32[72,128]{1,0:T(1,128)}', space=vmem, size = 0x9000, scoped, tag = 'internal scratch']
  %s0 = inlined_call_operand.vmem [shape: f32[2,8,128], index: 0, kind: input, shape index: {}]
  %s1 = inlined_call_operand.vmem [shape: f32[2,8], index: 1, kind: input, shape index: {}]
  %s2 = inlined_call_operand.vmem [shape: f32[1,128], index: 2, kind: input, shape index: {}]
  %s3 = inlined_call_operand.vmem [shape: f32[1,128], index: 3, kind: input, shape index: {}]
  %s4 = inlined_call_operand.vmem [shape: bf16[2,128,128], index: 4, kind: input, shape index: {}]
  %s5 = inlined_call_operand.vmem [shape: f32[2,1,128], index: 5, kind: input, shape index: {}]
  %s6 = inlined_call_operand.hbm [shape: bf16[2,128,128], index: 6, kind: input, shape index: {}]
  %s7 = inlined_call_operand.vmem [shape: f32[2,1,128], index: 7, kind: input, shape index: {}]
  %s8 = inlined_call_operand.hbm [shape: bf16[2,128,128], index: 8, kind: input, shape index: {}]
  %s9 = inlined_call_operand.vmem [shape: f32[2,1,128], index: 9, kind: input, shape index: {}]
  %s10 = inlined_call_operand.hbm [shape: bf16[2,128,128], index: 10, kind: input, shape index: {}]
  %s11 = inlined_call_operand.vmem [shape: f32[2,1,128], index: 11, kind: input, shape index: {}]
  %s12 = inlined_call_operand.vmem [shape: f32[2,1,128], index: 12, kind: input, shape index: {}]
  %s13 = inlined_call_operand.vmem [shape: f32[2,1,128], index: 13, kind: input, shape index: {}]
  %s14 = inlined_call_operand.hbm [shape: bf16[2,128,256], index: 14, kind: input, shape index: {}]
  %s15 = inlined_call_operand.vmem [shape: f32[2,1,256], index: 15, kind: input, shape index: {}]
  %s16 = inlined_call_operand.hbm [shape: bf16[2,256,128], index: 16, kind: input, shape index: {}]
  %s17 = inlined_call_operand.vmem [shape: f32[2,1,128], index: 17, kind: input, shape index: {}]
  %s18 = inlined_call_operand.vmem [shape: f32[2,1,128], index: 18, kind: input, shape index: {}]
  %s19 = inlined_call_operand.vmem [shape: f32[2,1,128], index: 19, kind: input, shape index: {}]
  %s20 = inlined_call_operand.vmem [shape: bf16[128,2], index: 20, kind: input, shape index: {}]
  %s21 = inlined_call_operand.vmem [shape: f32[1,2], index: 21, kind: input, shape index: {}]
  %s22 = inlined_call_operand.hbm [shape: f32[2,2], index: 22, kind: output, shape index: {}]
  %s23 = sld [smem:[#allocation0]]
  $region118: #{forward.1} parent=0
    _
  %s25 = ssub.s32 1, %s23
  %s26 = scalar_select 0, %s25, %s23
  $region1: #{forward.1} parent=0
    #allocation2 [shape = 'u8[65536]{0}', space=vmem, size = 0x10000, scoped, tag = 'input window, operand 6, single buffered']
    #allocation3 [shape = 's32[1]{0}', space=sflag, size = 0x4, scoped, tag = 'scoped memory for forward.1']
    #allocation4 [shape = 's32[1]{0}', space=sflag, size = 0x4, scoped, tag = 'scoped memory for forward.1']
    #allocation5 [shape = 'u8[65536]{0}', space=vmem, size = 0x10000, scoped, tag = 'input window, operand 8, single buffered']
    #allocation6 [shape = 's32[1]{0}', space=sflag, size = 0x4, scoped, tag = 'scoped memory for forward.1']
    #allocation7 [shape = 'u8[65536]{0}', space=vmem, size = 0x10000, scoped, tag = 'input window, operand 10, single buffered']
    #allocation8 [shape = 'u8[131072]{0}', space=vmem, size = 0x20000, scoped, tag = 'input window, operand 14, single buffered']
    #allocation9 [shape = 's32[1]{0}', space=sflag, size = 0x4, scoped, tag = 'scoped memory for forward.1']
    #allocation10 [shape = 'u8[131072]{0}', space=vmem, size = 0x20000, scoped, tag = 'input window, operand 16, single buffered']
    #allocation11 [shape = 'u8[1024]{0}', space=vmem, size = 0x400, scoped, tag = 'output window, operand 0, single buffered']
    %27 = vsyncpa [#allocation3], 0
    %28 = vsyncpa [#allocation6], 0
    %29 = vsyncpa [#allocation9], 0
    %30 = vsyncpa [#allocation4], 0
    // Predicated region
    $region2: #{forward.1} parent=1 // pred_check
      _
    $region3: #{forward.1} parent=1 // pred_check_branch
      %32 = sbr.rel (0) target = $region5
    $region4: #{forward.1} parent=1 // pred_region
      _
    $region5: #{forward.1} parent=1 // pred_fallthru
      _
    // Predicated region
    $region6: #{forward.1} parent=1 // pred_check
      _
    $region7: #{forward.1} parent=1 // pred_check_branch
      %34 = sbr.rel (0) target = $region9
    $region8: #{forward.1} parent=1 // pred_region
      _
    $region9: #{forward.1} parent=1 // pred_fallthru
      _
    // Predicated region
    $region10: #{forward.1} parent=1 // pred_check
      _
    $region11: #{forward.1} parent=1 // pred_check_branch
      %36 = sbr.rel (0) target = $region13
    $region12: #{forward.1} parent=1 // pred_region
      _
    $region13: #{forward.1} parent=1 // pred_fallthru
      _
    // Predicated region
    $region14: #{forward.1} parent=1 // pred_check
      _
    $region15: #{forward.1} parent=1 // pred_check_branch
      %38 = sbr.rel (0) target = $region17
    $region16: #{forward.1} parent=1 // pred_region
      _
    $region17: #{forward.1} parent=1 // pred_fallthru
      _
    // Predicated region
    $region18: #{forward.1} parent=1 // pred_check
      _
    $region19: #{forward.1} parent=1 // pred_check_branch
      %40 = sbr.rel (0) target = $region21
    $region20: #{forward.1} parent=1 // pred_region
      _
    $region21: #{forward.1} parent=1 // pred_fallthru
      _
    // Predicated region
    $region22: #{forward.1} parent=1 // pred_check
      _
    $region23: #{forward.1} parent=1 // pred_check_branch
      %42 = sbr.rel (0) target = $region25
    $region24: #{forward.1} parent=1 // pred_region
      _
    $region25: #{forward.1} parent=1 // pred_fallthru
      _
    // Predicated region
    $region26: #{forward.1} parent=1 // pred_check
      _
    $region27: #{forward.1} parent=1 // pred_check_branch
      %44 = sbr.rel (0) target = $region29
    $region28: #{forward.1} parent=1 // pred_region
      %46 = vsyncadd [#allocation3], 0
      %s47 = sshll.u32 %s6, 4
      %s48 = int_to_ptr.hbm [resolvable:$true] %s47
      %s49 = sshll.u32 [#allocation2], 4
      %s50 = int_to_ptr.vmem [resolvable:$true] %s49
      %55 = dma.hbm_to_vmem [thread:$0]  %s48, 2048, %s50, [#allocation3], 64, 64, 4
    $region29: #{forward.1} parent=1 // pred_fallthru
      _
    // Predicated region
    $region30: #{forward.1} parent=1 // pred_check
      _
    $region31: #{forward.1} parent=1 // pred_check_branch
      %57 = sbr.rel (0) target = $region33
    $region32: #{forward.1} parent=1 // pred_region
      _
    $region33: #{forward.1} parent=1 // pred_fallthru
      _
    // Predicated region
    $region34: #{forward.1} parent=1 // pred_check
      _
    $region35: #{forward.1} parent=1 // pred_check_branch
      %59 = sbr.rel (0) target = $region37
    $region36: #{forward.1} parent=1 // pred_region
      %61 = vsyncadd [#allocation6], 0
      %s62 = sshll.u32 %s8, 4
      %s63 = int_to_ptr.hbm [resolvable:$true] %s62
      %s64 = sshll.u32 [#allocation5], 4
      %s65 = int_to_ptr.vmem [resolvable:$true] %s64
      %70 = dma.hbm_to_vmem [thread:$0]  %s63, 2048, %s65, [#allocation6], 64, 64, 4
    $region37: #{forward.1} parent=1 // pred_fallthru
      _
    // Predicated region
    $region38: #{forward.1} parent=1 // pred_check
      _
    $region39: #{forward.1} parent=1 // pred_check_branch
      %72 = sbr.rel (0) target = $region41
    $region40: #{forward.1} parent=1 // pred_region
      _
    $region41: #{forward.1} parent=1 // pred_fallthru
      _
    // Predicated region
    $region42: #{forward.1} parent=1 // pred_check
      _
    $region43: #{forward.1} parent=1 // pred_check_branch
      %74 = sbr.rel (0) target = $region45
    $region44: #{forward.1} parent=1 // pred_region
      %76 = vsyncadd [#allocation6], 0
      %s77 = sshll.u32 %s10, 4
      %s78 = int_to_ptr.hbm [resolvable:$true] %s77
      %s79 = sshll.u32 [#allocation7], 4
      %s80 = int_to_ptr.vmem [resolvable:$true] %s79
      %85 = dma.hbm_to_vmem [thread:$0]  %s78, 2048, %s80, [#allocation6], 64, 64, 4
    $region45: #{forward.1} parent=1 // pred_fallthru
      _
    // Predicated region
    $region46: #{forward.1} parent=1 // pred_check
      _
    $region47: #{forward.1} parent=1 // pred_check_branch
      %87 = sbr.rel (0) target = $region49
    $region48: #{forward.1} parent=1 // pred_region
      _
    $region49: #{forward.1} parent=1 // pred_fallthru
      _
    // Predicated region
    $region50: #{forward.1} parent=1 // pred_check
      _
    $region51: #{forward.1} parent=1 // pred_check_branch
      %89 = sbr.rel (0) target = $region53
    $region52: #{forward.1} parent=1 // pred_region
      _
    $region53: #{forward.1} parent=1 // pred_fallthru
      _
    // Predicated region
    $region54: #{forward.1} parent=1 // pred_check
      _
    $region55: #{forward.1} parent=1 // pred_check_branch
      %91 = sbr.rel (0) target = $region57
    $region56: #{forward.1} parent=1 // pred_region
      _
    $region57: #{forward.1} parent=1 // pred_fallthru
      _
    // Predicated region
    $region58: #{forward.1} parent=1 // pred_check
      _
    $region59: #{forward.1} parent=1 // pred_check_branch
      %93 = sbr.rel (0) target = $region61
    $region60: #{forward.1} parent=1 // pred_region
      %95 = vsyncadd [#allocation9], 0
      %s96 = sshll.u32 %s14, 4
      %s97 = int_to_ptr.hbm [resolvable:$true] %s96
      %s98 = sshll.u32 [#allocation8], 4
      %s99 = int_to_ptr.vmem [resolvable:$true] %s98
      %104 = dma.hbm_to_vmem [thread:$0]  %s97, 4096, %s99, [#allocation9], 128, 128, 8
    $region61: #{forward.1} parent=1 // pred_fallthru
      _
    // Predicated region
    $region62: #{forward.1} parent=1 // pred_check
      _
    $region63: #{forward.1} parent=1 // pred_check_branch
      %106 = sbr.rel (0) target = $region65
    $region64: #{forward.1} parent=1 // pred_region
      _
    $region65: #{forward.1} parent=1 // pred_fallthru
      _
    // Predicated region
    $region66: #{forward.1} parent=1 // pred_check
      _
    $region67: #{forward.1} parent=1 // pred_check_branch
      %108 = sbr.rel (0) target = $region69
    $region68: #{forward.1} parent=1 // pred_region
      %110 = vsyncadd [#allocation9], 0
      %s111 = sshll.u32 %s16, 4
      %s112 = int_to_ptr.hbm [resolvable:$true] %s111
      %s113 = sshll.u32 [#allocation10], 4
      %s114 = int_to_ptr.vmem [resolvable:$true] %s113
      %119 = dma.hbm_to_vmem [thread:$0]  %s112, 4096, %s114, [#allocation9], 64, 64, 4
    $region69: #{forward.1} parent=1 // pred_fallthru
      _
    // Predicated region
    $region70: #{forward.1} parent=1 // pred_check
      _
    $region71: #{forward.1} parent=1 // pred_check_branch
      %121 = sbr.rel (0) target = $region73
    $region72: #{forward.1} parent=1 // pred_region
      _
    $region73: #{forward.1} parent=1 // pred_fallthru
      _
    // Predicated region
    $region74: #{forward.1} parent=1 // pred_check
      _
    $region75: #{forward.1} parent=1 // pred_check_branch
      %123 = sbr.rel (0) target = $region77
    $region76: #{forward.1} parent=1 // pred_region
      _
    $region77: #{forward.1} parent=1 // pred_fallthru
      _
    // Predicated region
    $region78: #{forward.1} parent=1 // pred_check
      _
    $region79: #{forward.1} parent=1 // pred_check_branch
      %125 = sbr.rel (0) target = $region81
    $region80: #{forward.1} parent=1 // pred_region
      _
    $region81: #{forward.1} parent=1 // pred_fallthru
      _
    // Predicated region
    $region82: #{forward.1} parent=1 // pred_check
      _
    $region83: #{forward.1} parent=1 // pred_check_branch
      %127 = sbr.rel (0) target = $region85
    $region84: #{forward.1} parent=1 // pred_region
      _
    $region85: #{forward.1} parent=1 // pred_fallthru
      _
    // Predicated region
    $region86: #{forward.1} parent=1 // pred_check
      _
    $region87: #{forward.1} parent=1 // pred_check_branch
      %129 = sbr.rel (0) target = $region89
    $region88: #{forward.1} parent=1 // pred_region
      _
    $region89: #{forward.1} parent=1 // pred_fallthru
      _
    // Predicated region
    $region90: #{forward.1} parent=1 // pred_check
      _
    $region91: #{forward.1} parent=1 // pred_check_branch
      %131 = sbr.rel (0) target = $region93
    $region92: #{forward.1} parent=1 // pred_region
      %133 = dma.done [#allocation3], 2048
    $region93: #{forward.1} parent=1 // pred_fallthru
      _
    // Predicated region
    $region94: #{forward.1} parent=1 // pred_check
      _
    $region95: #{forward.1} parent=1 // pred_check_branch
      %135 = sbr.rel (0) target = $region97
    $region96: #{forward.1} parent=1 // pred_region
      %137 = dma.done [#allocation6], 2048
    $region97: #{forward.1} parent=1 // pred_fallthru
      _
    // Predicated region
    $region98: #{forward.1} parent=1 // pred_check
      _
    $region99: #{forward.1} parent=1 // pred_check_branch
      %139 = sbr.rel (0) target = $region101
    $region100: #{forward.1} parent=1 // pred_region
      %141 = dma.done [#allocation6], 2048
    $region101: #{forward.1} parent=1 // pred_fallthru
      _
    // Predicated region
    $region102: #{forward.1} parent=1 // pred_check
      _
    $region103: #{forward.1} parent=1 // pred_check_branch
      %143 = sbr.rel (0) target = $region105
    $region104: #{forward.1} parent=1 // pred_region
      %145 = dma.done [#allocation9], 4096
    $region105: #{forward.1} parent=1 // pred_fallthru
      _
    // Predicated region
    $region106: #{forward.1} parent=1 // pred_check
      _
    $region107: #{forward.1} parent=1 // pred_check_branch
      %147 = sbr.rel (0) target = $region109
    $region108: #{forward.1} parent=1 // pred_region
      %149 = dma.done [#allocation9], 4096
    $region109: #{forward.1} parent=1 // pred_fallthru
      _
    %v151 = vld [vmem:[%s0] sm:$0xff]
    %v152 = vld [vmem:[%s0 + $0x8] sm:$0xff]
    %v153 = vld [vmem:[%s2] sm:$0x1]
    %v154 = vld [vmem:[%s3] sm:$0x1]
    %155 = vadd.xlane.f32.xlu0 %v151
    %v156 = vpop.xlane.xlu0 %155
    %157 = vadd.xlane.f32.xlu0 %v152
    %v158 = vpop.xlane.xlu0 %157
    %v159 = vrcp.pop 128.0
    %v160 = vmul.f32 128.0, %v159
    %v161 = vsub.f32 1.0, %v160
    %v162 = vmul.f32 %v159, %v161
    %v163 = vadd.f32 %v159, %v162
    %vm164 = vweird.f32 %v159
    %v165 = vsel %vm164, %v159, %v163
    %v166 = vmul.f32 %v156, %v165
    %v167 = vmul.f32 %v158, %v165
    %v168 = vsub.f32 %v151, %v166
    %v169 = vsub.f32 %v152, %v167
    %v170 = vmul.f32 %v168, %v168
    %v171 = vmul.f32 %v169, %v169
    %172 = vadd.xlane.f32.xlu0 %v170
    %v173 = vpop.xlane.xlu0 %172
    %174 = vadd.xlane.f32.xlu0 %v171
    %v175 = vpop.xlane.xlu0 %174
    %v176 = vmul.f32 %v173, %v165
    %v177 = vmul.f32 %v175, %v165
    %v178 = vadd.f32 %v176, 1e-12
    %v179 = vadd.f32 %v177, 1e-12
    %v180 = vrsqrt.pop %v178
    %v181 = vmul.f32 %v180, %v178
    %v182 = vmul.f32 %v181, %v180
    %v183 = vmul.f32 0.5, %v182
    %v184 = vsub.f32 1.5, %v183
    %v185 = vmul.f32 %v180, %v184
    %vm186 = vweird.f32 %v178
    %vm187 = vweird.f32 %v180
    %vm188 = vmor %vm186, %vm187
    %v189 = vsel %vm188, %v180, %v185
    %v190 = vrsqrt.pop %v179
    %v191 = vmul.f32 %v190, %v179
    %v192 = vmul.f32 %v191, %v190
    %v193 = vmul.f32 0.5, %v192
    %v194 = vsub.f32 1.5, %v193
    %v195 = vmul.f32 %v190, %v194
    %vm196 = vweird.f32 %v179
    %vm197 = vweird.f32 %v190
    %vm198 = vmor %vm196, %vm197
    %v199 = vsel %vm198, %v190, %v195
    %v200 = vmul.f32 %v168, %v189
    %v201 = vmul.f32 %v169, %v199
    %v203 = vperm.slane %v153, 0
    %v205 = vmul.f32 %v200, %v203
    %v206 = vmul.f32 %v201, %v203
    %v208 = vperm.slane %v154, 0
    %v210 = vadd.f32 %v205, %v208
    %v211 = vadd.f32 %v206, %v208
    %v212 = vld [vmem:[%s1] sm:$0x3]
    %v213 = vld [vmem:[%s4] sm:$0xf]
    %v214 = vld [vmem:[%s4 + $0x4] sm:$0xf]
    %v215 = vld [vmem:[%s4 + $0x8] sm:$0xf]
    %v216 = vld [vmem:[%s4 + $0xc] sm:$0xf]
    %v217 = vld [vmem:[%s4 + $0x10] sm:$0xf]
    %v218 = vld [vmem:[%s4 + $0x14] sm:$0xf]
    %v219 = vld [vmem:[%s4 + $0x18] sm:$0xf]
    %v220 = vld [vmem:[%s4 + $0x1c] sm:$0xf]
    %v221 = vld [vmem:[%s4 + $0x20] sm:$0xf]
    %v222 = vld [vmem:[%s4 + $0x24] sm:$0xf]
    %v223 = vld [vmem:[%s4 + $0x28] sm:$0xf]
    %v224 = vld [vmem:[%s4 + $0x2c] sm:$0xf]
    %v225 = vld [vmem:[%s4 + $0x30] sm:$0xf]
    %v226 = vld [vmem:[%s4 + $0x34] sm:$0xf]
    %v227 = vld [vmem:[%s4 + $0x38] sm:$0xf]
    %v228 = vld [vmem:[%s4 + $0x3c] sm:$0xf]
    %v229 = vld [vmem:[#allocation2] sm:$0xf]
    %v230 = vld [vmem:[#allocation2 + $0x4] sm:$0xf]
    %v231 = vld [vmem:[#allocation2 + $0x8] sm:$0xf]
    %v232 = vld [vmem:[#allocation2 + $0xc] sm:$0xf]
    %v233 = vld [vmem:[#allocation2 + $0x10] sm:$0xf]
    %v234 = vld [vmem:[#allocation2 + $0x14] sm:$0xf]
    %v235 = vld [vmem:[#allocation2 + $0x18] sm:$0xf]
    %v236 = vld [vmem:[#allocation2 + $0x1c] sm:$0xf]
    %v237 = vld [vmem:[#allocation2 + $0x20] sm:$0xf]
    %v238 = vld [vmem:[#allocation2 + $0x24] sm:$0xf]
    %v239 = vld [vmem:[#allocation2 + $0x28] sm:$0xf]
    %v240 = vld [vmem:[#allocation2 + $0x2c] sm:$0xf]
    %v241 = vld [vmem:[#allocation2 + $0x30] sm:$0xf]
    %v242 = vld [vmem:[#allocation2 + $0x34] sm:$0xf]
    %v243 = vld [vmem:[#allocation2 + $0x38] sm:$0xf]
    %v244 = vld [vmem:[#allocation2 + $0x3c] sm:$0xf]
    %v245 = vld [vmem:[#allocation5] sm:$0xf]
    %v246 = vld [vmem:[#allocation5 + $0x4] sm:$0xf]
    %v247 = vld [vmem:[#allocation5 + $0x8] sm:$0xf]
    %v248 = vld [vmem:[#allocation5 + $0xc] sm:$0xf]
    %v249 = vld [vmem:[#allocation5 + $0x10] sm:$0xf]
    %v250 = vld [vmem:[#allocation5 + $0x14] sm:$0xf]
    %v251 = vld [vmem:[#allocation5 + $0x18] sm:$0xf]
    %v252 = vld [vmem:[#allocation5 + $0x1c] sm:$0xf]
    %v253 = vld [vmem:[#allocation5 + $0x20] sm:$0xf]
    %v254 = vld [vmem:[#allocation5 + $0x24] sm:$0xf]
    %v255 = vld [vmem:[#allocation5 + $0x28] sm:$0xf]
    %v256 = vld [vmem:[#allocation5 + $0x2c] sm:$0xf]
    %v257 = vld [vmem:[#allocation5 + $0x30] sm:$0xf]
    %v258 = vld [vmem:[#allocation5 + $0x34] sm:$0xf]
    %v259 = vld [vmem:[#allocation5 + $0x38] sm:$0xf]
    %v260 = vld [vmem:[#allocation5 + $0x3c] sm:$0xf]
    %v261 = vld [vmem:[#allocation7] sm:$0xf]
    %v262 = vld [vmem:[#allocation7 + $0x4] sm:$0xf]
    %v263 = vld [vmem:[#allocation7 + $0x8] sm:$0xf]
    %v264 = vld [vmem:[#allocation7 + $0xc] sm:$0xf]
    %v265 = vld [vmem:[#allocation7 + $0x10] sm:$0xf]
    %v266 = vld [vmem:[#allocation7 + $0x14] sm:$0xf]
    %v267 = vld [vmem:[#allocation7 + $0x18] sm:$0xf]
    %v268 = vld [vmem:[#allocation7 + $0x1c] sm:$0xf]
    %v269 = vld [vmem:[#allocation7 + $0x20] sm:$0xf]
    %v270 = vld [vmem:[#allocation7 + $0x24] sm:$0xf]
    %v271 = vld [vmem:[#allocation7 + $0x28] sm:$0xf]
    %v272 = vld [vmem:[#allocation7 + $0x2c] sm:$0xf]
    %v273 = vld [vmem:[#allocation7 + $0x30] sm:$0xf]
    %v274 = vld [vmem:[#allocation7 + $0x34] sm:$0xf]
    %v275 = vld [vmem:[#allocation7 + $0x38] sm:$0xf]
    %v276 = vld [vmem:[#allocation7 + $0x3c] sm:$0xf]
    %v277 = vpack.c.bf16 %v211, %v210
    %v278 = vld [vmem:[%s5] sm:$0x1]
    %v280 = vperm.slane %v278, 0
    %v298 = vunpack.c.l.b16 %v213
    %v299 = vunpack.c.l.b16 %v214
    %v300 = vunpack.c.l.b16 %v215
    %v301 = vunpack.c.l.b16 %v216
    %v302 = vunpack.c.l.b16 %v217
    %v303 = vunpack.c.l.b16 %v218
    %v304 = vunpack.c.l.b16 %v219
    %v305 = vunpack.c.l.b16 %v220
    %v306 = vunpack.c.l.b16 %v221
    %v307 = vunpack.c.l.b16 %v222
    %v308 = vunpack.c.l.b16 %v223
    %v309 = vunpack.c.l.b16 %v224
    %v310 = vunpack.c.l.b16 %v225
    %v311 = vunpack.c.l.b16 %v226
    %v312 = vunpack.c.l.b16 %v227
    %v313 = vunpack.c.l.b16 %v228
    %v314 = vpack.c.b16 %v299, %v298
    %v315 = vpack.c.b16 %v301, %v300
    %v316 = vpack.c.b16 %v303, %v302
    %v317 = vpack.c.b16 %v305, %v304
    %v318 = vpack.c.b16 %v307, %v306
    %v319 = vpack.c.b16 %v309, %v308
    %v320 = vpack.c.b16 %v311, %v310
    %v321 = vpack.c.b16 %v313, %v312
    %330 = vmatpush.bf16.msra.mxu0 %v321
    %331 = vmatpush.bf16.msra.mxu0 %v320
    %332 = vmatpush.bf16.msra.mxu0 %v319
    %333 = vmatpush.bf16.msra.mxu0 %v318
    %334 = vmatpush.bf16.msra.mxu0 %v317
    %335 = vmatpush.bf16.msra.mxu0 %v316
    %336 = vmatpush.bf16.msra.mxu0 %v315
    %337 = vmatpush.bf16.msra.mxu0 %v314
    %338 = vmatmul.bf16.gmra.mxu0 %v277
    %v339 = vpop.f32.mrf.mxu0
    %v340 = vadd.f32 %v280, %v339
    %v341 = vpop.f32.mrf.mxu0
    %v342 = vadd.f32 %v280, %v341
    %343 = vdwg.mxu0
    %v344 = vld [vmem:[%s7] sm:$0x1]
    %v346 = vperm.slane %v344, 0
    %v364 = vunpack.c.l.b16 %v229
    %v365 = vunpack.c.l.b16 %v230
    %v366 = vunpack.c.l.b16 %v231
    %v367 = vunpack.c.l.b16 %v232
    %v368 = vunpack.c.l.b16 %v233
    %v369 = vunpack.c.l.b16 %v234
    %v370 = vunpack.c.l.b16 %v235
    %v371 = vunpack.c.l.b16 %v236
    %v372 = vunpack.c.l.b16 %v237
    %v373 = vunpack.c.l.b16 %v238
    %v374 = vunpack.c.l.b16 %v239
    %v375 = vunpack.c.l.b16 %v240
    %v376 = vunpack.c.l.b16 %v241
    %v377 = vunpack.c.l.b16 %v242
    %v378 = vunpack.c.l.b16 %v243
    %v379 = vunpack.c.l.b16 %v244
    %v380 = vpack.c.b16 %v365, %v364
    %v381 = vpack.c.b16 %v367, %v366
    %v382 = vpack.c.b16 %v369, %v368
    %v383 = vpack.c.b16 %v371, %v370
    %v384 = vpack.c.b16 %v373, %v372
    %v385 = vpack.c.b16 %v375, %v374
    %v386 = vpack.c.b16 %v377, %v376
    %v387 = vpack.c.b16 %v379, %v378
    %396 = vmatpush.bf16.msra.mxu0 %v387
    %397 = vmatpush.bf16.msra.mxu0 %v386
    %398 = vmatpush.bf16.msra.mxu0 %v385
    %399 = vmatpush.bf16.msra.mxu0 %v384
    %400 = vmatpush.bf16.msra.mxu0 %v383
    %401 = vmatpush.bf16.msra.mxu0 %v382
    %402 = vmatpush.bf16.msra.mxu0 %v381
    %403 = vmatpush.bf16.msra.mxu0 %v380
    %404 = vmatmul.bf16.gmra.mxu0 %v277
    %v405 = vpop.f32.mrf.mxu0
    %v406 = vadd.f32 %v346, %v405
    %v407 = vpop.f32.mrf.mxu0
    %v408 = vadd.f32 %v346, %v407
    %409 = vdwg.mxu0
    %v410 = vld [vmem:[%s9] sm:$0x1]
    %v412 = vperm.slane %v410, 0
    %v430 = vunpack.c.l.b16 %v245
    %v431 = vunpack.c.l.b16 %v246
    %v432 = vunpack.c.l.b16 %v247
    %v433 = vunpack.c.l.b16 %v248
    %v434 = vunpack.c.l.b16 %v249
    %v435 = vunpack.c.l.b16 %v250
    %v436 = vunpack.c.l.b16 %v251
    %v437 = vunpack.c.l.b16 %v252
    %v438 = vunpack.c.l.b16 %v253
    %v439 = vunpack.c.l.b16 %v254
    %v440 = vunpack.c.l.b16 %v255
    %v441 = vunpack.c.l.b16 %v256
    %v442 = vunpack.c.l.b16 %v257
    %v443 = vunpack.c.l.b16 %v258
    %v444 = vunpack.c.l.b16 %v259
    %v445 = vunpack.c.l.b16 %v260
    %v446 = vpack.c.b16 %v431, %v430
    %v447 = vpack.c.b16 %v433, %v432
    %v448 = vpack.c.b16 %v435, %v434
    %v449 = vpack.c.b16 %v437, %v436
    %v450 = vpack.c.b16 %v439, %v438
    %v451 = vpack.c.b16 %v441, %v440
    %v452 = vpack.c.b16 %v443, %v442
    %v453 = vpack.c.b16 %v445, %v444
    %462 = vmatpush.bf16.msra.mxu0 %v453
    %463 = vmatpush.bf16.msra.mxu0 %v452
    %464 = vmatpush.bf16.msra.mxu0 %v451
    %465 = vmatpush.bf16.msra.mxu0 %v450
    %466 = vmatpush.bf16.msra.mxu0 %v449
    %467 = vmatpush.bf16.msra.mxu0 %v448
    %468 = vmatpush.bf16.msra.mxu0 %v447
    %469 = vmatpush.bf16.msra.mxu0 %v446
    %470 = vmatmul.bf16.gmra.mxu0 %v277
    %v471 = vpop.f32.mrf.mxu0
    %v472 = vadd.f32 %v412, %v471
    %v473 = vpop.f32.mrf.mxu0
    %v474 = vadd.f32 %v412, %v473
    %475 = vdwg.mxu0
    %v476 = vmul.f32 %v340, 0.125
    %v477 = vmul.f32 %v342, 0.125
    %v478 = vpack.c.bf16 %v476, %v476
    %v479 = vpack.c.bf16 %v406, %v406
    %v480 = vperm.slane %v212, 0
    %vm481 = vcmask 523264
    %v483 = vsel %vm481, %v478, 0
    %v486 = vsel %vm481, %v479, 0
    %488 = vmatpush.bf16.xpose.msra.mxu0 0
    %489 = vmatpush.bf16.xpose.msra.mxu0 0
    %490 = vmatpush.bf16.xpose.msra.mxu0 0
    %491 = vmatpush.bf16.xpose.msra.mxu0 0
    %492 = vmatpush.bf16.xpose.msra.mxu0 0
    %493 = vmatpush.bf16.xpose.msra.mxu0 0
    %494 = vmatpush.bf16.xpose.msra.mxu0 0
    %495 = vmatpush.bf16.xpose.msra.mxu0 %v486
    %496 = vmatmul.bf16.gmra.mxu0 %v483
    %v497 = vpop.f32.mrf.mxu0
    %v498 = vadd.f32 %v480, %v497
    %v499 = vpop.f32.mrf.mxu0
    %500 = vdwg.mxu0
    %vm501 = vcmask 64512
    %v502 = vsel %vm501, %v498, -inf
    %503 = vmax.xlane.f32.xlu0 %v502
    %v504 = vpop.xlane.xlu0 %503
    %v505 = vsub.f32 %v498, %v504
    %v506 = vmul.f32 %v505, 1.442695
    %v507 = vpow.pop %v506
    %v508 = vsel %vm501, %v507, 0.0
    %509 = vadd.xlane.f32.xlu0 %v508
    %v510 = vpop.xlane.xlu0 %509
    %v511 = vrcp.pop %v510
    %v512 = vmul.f32 %v507, %v511
    %v513 = vpack.c.bf16 %v512, %v512
    %v514 = vpack.c.bf16 %v472, %v472
    %v516 = vsel %vm501, %v513, 0
    %vm518 = vcmask 1043456
    %v520 = vsel %vm518, %v514, 0
    %522 = vmatpush.bf16.msra.mxu0 0
    %523 = vmatpush.bf16.msra.mxu0 0
    %524 = vmatpush.bf16.msra.mxu0 0
    %525 = vmatpush.bf16.msra.mxu0 0
    %526 = vmatpush.bf16.msra.mxu0 0
    %527 = vmatpush.bf16.msra.mxu0 0
    %528 = vmatpush.bf16.msra.mxu0 0
    %529 = vmatpush.bf16.msra.mxu0 %v520
    %530 = vmatmul.bf16.gmra.mxu0 %v516
    %v531 = vpop.f32.mrf.mxu0
    %v532 = vadd.f32 0.0, %v531
    %v533 = vpop.f32.mrf.mxu0
    %534 = vdwg.mxu0
    %v535 = vpack.c.bf16 %v532, %v532
    %537 = vrot.lane.b32.xlu0 %v478, 64
    %v538 = vpop.permute.xlu0 %537
    %540 = vrot.lane.b32.xlu0 %v479, 64
    %v541 = vpop.permute.xlu0 %540
    %v543 = vsel %vm481, %v538, 0
    %v546 = vsel %vm481, %v541, 0
    %548 = vmatpush.bf16.xpose.msra.mxu0 0
    %549 = vmatpush.bf16.xpose.msra.mxu0 0
    %550 = vmatpush.bf16.xpose.msra.mxu0 0
    %551 = vmatpush.bf16.xpose.msra.mxu0 0
    %552 = vmatpush.bf16.xpose.msra.mxu0 0
    %553 = vmatpush.bf16.xpose.msra.mxu0 0
    %554 = vmatpush.bf16.xpose.msra.mxu0 0
    %555 = vmatpush.bf16.xpose.msra.mxu0 %v546
    %556 = vmatmul.bf16.gmra.mxu0 %v543
    %v557 = vpop.f32.mrf.mxu0
    %v558 = vadd.f32 %v480, %v557
    %v559 = vpop.f32.mrf.mxu0
    %560 = vdwg.mxu0
    %v561 = vsel %vm501, %v558, -inf
    %562 = vmax.xlane.f32.xlu0 %v561
    %v563 = vpop.xlane.xlu0 %562
    %v564 = vsub.f32 %v558, %v563
    %v565 = vmul.f32 %v564, 1.442695
    %v566 = vpow.pop %v565
    %v567 = vsel %vm501, %v566, 0.0
    %568 = vadd.xlane.f32.xlu0 %v567
    %v569 = vpop.xlane.xlu0 %568
    %v570 = vrcp.pop %v569
    %v571 = vmul.f32 %v566, %v570
    %v572 = vpack.c.bf16 %v571, %v571
    %574 = vrot.lane.b32.xlu0 %v514, 64
    %v575 = vpop.permute.xlu0 %574
    %v577 = vsel %vm501, %v572, 0
    %v580 = vsel %vm518, %v575, 0
    %582 = vmatpush.bf16.msra.mxu0 0
    %583 = vmatpush.bf16.msra.mxu0 0
    %584 = vmatpush.bf16.msra.mxu0 0
    %585 = vmatpush.bf16.msra.mxu0 0
    %586 = vmatpush.bf16.msra.mxu0 0
    %587 = vmatpush.bf16.msra.mxu0 0
    %588 = vmatpush.bf16.msra.mxu0 0
    %589 = vmatpush.bf16.msra.mxu0 %v580
    %590 = vmatmul.bf16.gmra.mxu0 %v577
    %v591 = vpop.f32.mrf.mxu0
    %v592 = vadd.f32 0.0, %v591
    %v593 = vpop.f32.mrf.mxu0
    %594 = vdwg.mxu0
    %v595 = vpack.c.bf16 %v592, %v592
    %v604 = vunpack.c.l.b16 %v269
    %v605 = vunpack.c.l.b16 %v270
    %v606 = vunpack.c.l.b16 %v271
    %v607 = vunpack.c.l.b16 %v272
    %v608 = vunpack.c.l.b16 %v273
    %v609 = vunpack.c.l.b16 %v274
    %v610 = vunpack.c.l.b16 %v275
    %v611 = vunpack.c.l.b16 %v276
    %v612 = vpack.c.b16 %v605, %v604
    %v613 = vpack.c.b16 %v607, %v606
    %v614 = vpack.c.b16 %v609, %v608
    %v615 = vpack.c.b16 %v611, %v610
    %v621 = vsel %vm481, %v595, 0
    %623 = vmatpush.bf16.msra.mxu0 0
    %624 = vmatpush.bf16.msra.mxu0 0
    %625 = vmatpush.bf16.msra.mxu0 0
    %626 = vmatpush.bf16.msra.mxu0 0
    %627 = vmatpush.bf16.msra.mxu0 %v615
    %628 = vmatpush.bf16.msra.mxu0 %v614
    %629 = vmatpush.bf16.msra.mxu0 %v613
    %630 = vmatpush.bf16.msra.mxu0 %v612
    %631 = vmatmul.bf16.gmra.mxu0 %v621
    %v632 = vpop.f32.mrf.mxu0
    %v633 = vadd.f32 0.0, %v632
    %v634 = vpop.f32.mrf.mxu0
    %635 = vdwg.mxu0
    %v644 = vunpack.c.l.b16 %v261
    %v645 = vunpack.c.l.b16 %v262
    %v646 = vunpack.c.l.b16 %v263
    %v647 = vunpack.c.l.b16 %v264
    %v648 = vunpack.c.l.b16 %v265
    %v649 = vunpack.c.l.b16 %v266
    %v650 = vunpack.c.l.b16 %v267
    %v651 = vunpack.c.l.b16 %v268
    %v652 = vpack.c.b16 %v645, %v644
    %v653 = vpack.c.b16 %v647, %v646
    %v654 = vpack.c.b16 %v649, %v648
    %v655 = vpack.c.b16 %v651, %v650
    %v661 = vsel %vm481, %v535, 0
    %663 = vmatpush.bf16.msra.mxu0 0
    %664 = vmatpush.bf16.msra.mxu0 0
    %665 = vmatpush.bf16.msra.mxu0 0
    %666 = vmatpush.bf16.msra.mxu0 0
    %667 = vmatpush.bf16.msra.mxu0 %v655
    %668 = vmatpush.bf16.msra.mxu0 %v654
    %669 = vmatpush.bf16.msra.mxu0 %v653
    %670 = vmatpush.bf16.msra.mxu0 %v652
    %671 = vmatmul.bf16.gmra.mxu0 %v661
    %v672 = vpop.f32.mrf.mxu0
    %v673 = vadd.f32 %v633, %v672
    %v674 = vpop.f32.mrf.mxu0
    %675 = vdwg.mxu0
    %v676 = vpack.c.bf16 %v477, %v477
    %v677 = vpack.c.bf16 %v408, %v408
    %v678 = vperm.slane %v212, 1
    %v680 = vsel %vm481, %v676, 0
    %v683 = vsel %vm481, %v677, 0
    %685 = vmatpush.bf16.xpose.msra.mxu0 0
    %686 = vmatpush.bf16.xpose.msra.mxu0 0
    %687 = vmatpush.bf16.xpose.msra.mxu0 0
    %688 = vmatpush.bf16.xpose.msra.mxu0 0
    %689 = vmatpush.bf16.xpose.msra.mxu0 0
    %690 = vmatpush.bf16.xpose.msra.mxu0 0
    %691 = vmatpush.bf16.xpose.msra.mxu0 0
    %692 = vmatpush.bf16.xpose.msra.mxu0 %v683
    %693 = vmatmul.bf16.gmra.mxu0 %v680
    %v694 = vpop.f32.mrf.mxu0
    %v695 = vadd.f32 %v678, %v694
    %v696 = vpop.f32.mrf.mxu0
    %697 = vdwg.mxu0
    %v698 = vsel %vm501, %v695, -inf
    %699 = vmax.xlane.f32.xlu0 %v698
    %v700 = vpop.xlane.xlu0 %699
    %v701 = vsub.f32 %v695, %v700
    %v702 = vmul.f32 %v701, 1.442695
    %v703 = vpow.pop %v702
    %v704 = vsel %vm501, %v703, 0.0
    %705 = vadd.xlane.f32.xlu0 %v704
    %v706 = vpop.xlane.xlu0 %705
    %v707 = vrcp.pop %v706
    %v708 = vmul.f32 %v703, %v707
    %v709 = vpack.c.bf16 %v708, %v708
    %v710 = vpack.c.bf16 %v474, %v474
    %v712 = vsel %vm501, %v709, 0
    %v715 = vsel %vm518, %v710, 0
    %717 = vmatpush.bf16.msra.mxu0 0
    %718 = vmatpush.bf16.msra.mxu0 0
    %719 = vmatpush.bf16.msra.mxu0 0
    %720 = vmatpush.bf16.msra.mxu0 0
    %721 = vmatpush.bf16.msra.mxu0 0
    %722 = vmatpush.bf16.msra.mxu0 0
    %723 = vmatpush.bf16.msra.mxu0 0
    %724 = vmatpush.bf16.msra.mxu0 %v715
    %725 = vmatmul.bf16.gmra.mxu0 %v712
    %v726 = vpop.f32.mrf.mxu0
    %v727 = vadd.f32 0.0, %v726
    %v728 = vpop.f32.mrf.mxu0
    %729 = vdwg.mxu0
    %v730 = vpack.c.bf16 %v727, %v727
    %732 = vrot.lane.b32.xlu0 %v676, 64
    %v733 = vpop.permute.xlu0 %732
    %735 = vrot.lane.b32.xlu0 %v677, 64
    %v736 = vpop.permute.xlu0 %735
    %v738 = vsel %vm481, %v733, 0
    %v741 = vsel %vm481, %v736, 0
    %743 = vmatpush.bf16.xpose.msra.mxu0 0
    %744 = vmatpush.bf16.xpose.msra.mxu0 0
    %745 = vmatpush.bf16.xpose.msra.mxu0 0
    %746 = vmatpush.bf16.xpose.msra.mxu0 0
    %747 = vmatpush.bf16.xpose.msra.mxu0 0
    %748 = vmatpush.bf16.xpose.msra.mxu0 0
    %749 = vmatpush.bf16.xpose.msra.mxu0 0
    %750 = vmatpush.bf16.xpose.msra.mxu0 %v741
    %751 = vmatmul.bf16.gmra.mxu0 %v738
    %v752 = vpop.f32.mrf.mxu0
    %v753 = vadd.f32 %v678, %v752
    %v754 = vpop.f32.mrf.mxu0
    %755 = vdwg.mxu0
    %v756 = vsel %vm501, %v753, -inf
    %757 = vmax.xlane.f32.xlu0 %v756
    %v758 = vpop.xlane.xlu0 %757
    %v759 = vsub.f32 %v753, %v758
    %v760 = vmul.f32 %v759, 1.442695
    %v761 = vpow.pop %v760
    %v762 = vsel %vm501, %v761, 0.0
    %763 = vadd.xlane.f32.xlu0 %v762
    %v764 = vpop.xlane.xlu0 %763
    %v765 = vrcp.pop %v764
    %v766 = vmul.f32 %v761, %v765
    %v767 = vpack.c.bf16 %v766, %v766
    %769 = vrot.lane.b32.xlu0 %v710, 64
    %v770 = vpop.permute.xlu0 %769
    %v772 = vsel %vm501, %v767, 0
    %v775 = vsel %vm518, %v770, 0
    %777 = vmatpush.bf16.msra.mxu0 0
    %778 = vmatpush.bf16.msra.mxu0 0
    %779 = vmatpush.bf16.msra.mxu0 0
    %780 = vmatpush.bf16.msra.mxu0 0
    %781 = vmatpush.bf16.msra.mxu0 0
    %782 = vmatpush.bf16.msra.mxu0 0
    %783 = vmatpush.bf16.msra.mxu0 0
    %784 = vmatpush.bf16.msra.mxu0 %v775
    %785 = vmatmul.bf16.gmra.mxu0 %v772
    %v786 = vpop.f32.mrf.mxu0
    %v787 = vadd.f32 0.0, %v786
    %v788 = vpop.f32.mrf.mxu0
    %789 = vdwg.mxu0
    %v790 = vpack.c.bf16 %v787, %v787
    %v792 = vsel %vm481, %v790, 0
    %794 = vmatpush.bf16.msra.mxu0 0
    %795 = vmatpush.bf16.msra.mxu0 0
    %796 = vmatpush.bf16.msra.mxu0 0
    %797 = vmatpush.bf16.msra.mxu0 0
    %798 = vmatpush.bf16.msra.mxu0 %v615
    %799 = vmatpush.bf16.msra.mxu0 %v614
    %800 = vmatpush.bf16.msra.mxu0 %v613
    %801 = vmatpush.bf16.msra.mxu0 %v612
    %802 = vmatmul.bf16.gmra.mxu0 %v792
    %v803 = vpop.f32.mrf.mxu0
    %v804 = vadd.f32 0.0, %v803
    %v805 = vpop.f32.mrf.mxu0
    %806 = vdwg.mxu0
    %v808 = vsel %vm481, %v730, 0
    %810 = vmatpush.bf16.msra.mxu0 0
    %811 = vmatpush.bf16.msra.mxu0 0
    %812 = vmatpush.bf16.msra.mxu0 0
    %813 = vmatpush.bf16.msra.mxu0 0
    %814 = vmatpush.bf16.msra.mxu0 %v655
    %815 = vmatpush.bf16.msra.mxu0 %v654
    %816 = vmatpush.bf16.msra.mxu0 %v653
    %817 = vmatpush.bf16.msra.mxu0 %v652
    %818 = vmatmul.bf16.gmra.mxu0 %v808
    %v819 = vpop.f32.mrf.mxu0
    %v820 = vadd.f32 %v804, %v819
    %v821 = vpop.f32.mrf.mxu0
    %822 = vdwg.mxu0
    %v823 = vld [vmem:[%s11] sm:$0x1]
    %v825 = vperm.slane %v823, 0
    %v827 = vadd.f32 %v673, %v825
    %v828 = vadd.f32 %v820, %v825
    %v829 = vadd.f32 %v827, %v210
    %v830 = vadd.f32 %v828, %v211
    %v831 = vld [vmem:[%s12] sm:$0x1]
    %v832 = vld [vmem:[%s13] sm:$0x1]
    %833 = vadd.xlane.f32.xlu0 %v829
    %v834 = vpop.xlane.xlu0 %833
    %835 = vadd.xlane.f32.xlu0 %v830
    %v836 = vpop.xlane.xlu0 %835
    %v837 = vmul.f32 %v834, %v165
    %v838 = vmul.f32 %v836, %v165
    %v839 = vsub.f32 %v829, %v837
    %v840 = vsub.f32 %v830, %v838
    %v841 = vmul.f32 %v839, %v839
    %v842 = vmul.f32 %v840, %v840
    %843 = vadd.xlane.f32.xlu0 %v841
    %v844 = vpop.xlane.xlu0 %843
    %845 = vadd.xlane.f32.xlu0 %v842
    %v846 = vpop.xlane.xlu0 %845
    %v847 = vmul.f32 %v844, %v165
    %v848 = vmul.f32 %v846, %v165
    %v849 = vadd.f32 %v847, 1e-12
    %v850 = vadd.f32 %v848, 1e-12
    %v851 = vrsqrt.pop %v849
    %v852 = vmul.f32 %v851, %v849
    %v853 = vmul.f32 %v852, %v851
    %v854 = vmul.f32 0.5, %v853
    %v855 = vsub.f32 1.5, %v854
    %v856 = vmul.f32 %v851, %v855
    %vm857 = vweird.f32 %v849
    %vm858 = vweird.f32 %v851
    %vm859 = vmor %vm857, %vm858
    %v860 = vsel %vm859, %v851, %v856
    %v861 = vrsqrt.pop %v850
    %v862 = vmul.f32 %v861, %v850
    %v863 = vmul.f32 %v862, %v861
    %v864 = vmul.f32 0.5, %v863
    %v865 = vsub.f32 1.5, %v864
    %v866 = vmul.f32 %v861, %v865
    %vm867 = vweird.f32 %v850
    %vm868 = vweird.f32 %v861
    %vm869 = vmor %vm867, %vm868
    %v870 = vsel %vm869, %v861, %v866
    %v871 = vmul.f32 %v839, %v860
    %v872 = vmul.f32 %v840, %v870
    %v874 = vperm.slane %v831, 0
    %v876 = vmul.f32 %v871, %v874
    %v877 = vmul.f32 %v872, %v874
    %v879 = vperm.slane %v832, 0
    %v881 = vadd.f32 %v876, %v879
    %v882 = vadd.f32 %v877, %v879
    %v883 = vld [vmem:[#allocation8] sm:$0xff]
    %v884 = vld [vmem:[#allocation8 + $0x8] sm:$0xff]
    %v885 = vld [vmem:[#allocation8 + $0x10] sm:$0xff]
    %v886 = vld [vmem:[#allocation8 + $0x18] sm:$0xff]
    %v887 = vld [vmem:[#allocation8 + $0x20] sm:$0xff]
    %v888 = vld [vmem:[#allocation8 + $0x28] sm:$0xff]
    %v889 = vld [vmem:[#allocation8 + $0x30] sm:$0xff]
    %v890 = vld [vmem:[#allocation8 + $0x38] sm:$0xff]
    %v891 = vld [vmem:[#allocation8 + $0x40] sm:$0xff]
    %v892 = vld [vmem:[#allocation8 + $0x48] sm:$0xff]
    %v893 = vld [vmem:[#allocation8 + $0x50] sm:$0xff]
    %v894 = vld [vmem:[#allocation8 + $0x58] sm:$0xff]
    %v895 = vld [vmem:[#allocation8 + $0x60] sm:$0xff]
    %v896 = vld [vmem:[#allocation8 + $0x68] sm:$0xff]
    %v897 = vld [vmem:[#allocation8 + $0x70] sm:$0xff]
    %v898 = vld [vmem:[#allocation8 + $0x78] sm:$0xff]
    %v899 = vpack.c.bf16 %v882, %v881
    %v900 = vld [vmem:[%s15] sm:$0x3]
    %v902 = vperm.slane %v900, 0
    %v903 = vperm.slane %v900, 1
    %v922 = vunpack.c.l.b16 %v883
    %v923 = vunpack.c.h.b16 %v883
    %v924 = vunpack.c.l.b16 %v884
    %v925 = vunpack.c.h.b16 %v884
    %v926 = vunpack.c.l.b16 %v885
    %v927 = vunpack.c.h.b16 %v885
    %v928 = vunpack.c.l.b16 %v886
    %v929 = vunpack.c.h.b16 %v886
    %v930 = vunpack.c.l.b16 %v887
    %v931 = vunpack.c.h.b16 %v887
    %v932 = vunpack.c.l.b16 %v888
    %v933 = vunpack.c.h.b16 %v888
    %v934 = vunpack.c.l.b16 %v889
    %v935 = vunpack.c.h.b16 %v889
    %v936 = vunpack.c.l.b16 %v890
    %v937 = vunpack.c.h.b16 %v890
    %v938 = vunpack.c.l.b16 %v891
    %v939 = vunpack.c.h.b16 %v891
    %v940 = vunpack.c.l.b16 %v892
    %v941 = vunpack.c.h.b16 %v892
    %v942 = vunpack.c.l.b16 %v893
    %v943 = vunpack.c.h.b16 %v893
    %v944 = vunpack.c.l.b16 %v894
    %v945 = vunpack.c.h.b16 %v894
    %v946 = vunpack.c.l.b16 %v895
    %v947 = vunpack.c.h.b16 %v895
    %v948 = vunpack.c.l.b16 %v896
    %v949 = vunpack.c.h.b16 %v896
    %v950 = vunpack.c.l.b16 %v897
    %v951 = vunpack.c.h.b16 %v897
    %v952 = vunpack.c.l.b16 %v898
    %v953 = vunpack.c.h.b16 %v898
    %v954 = vpack.c.b16 %v924, %v922
    %v955 = vpack.c.b16 %v925, %v923
    %v956 = vpack.c.b16 %v928, %v926
    %v957 = vpack.c.b16 %v929, %v927
    %v958 = vpack.c.b16 %v932, %v930
    %v959 = vpack.c.b16 %v933, %v931
    %v960 = vpack.c.b16 %v936, %v934
    %v961 = vpack.c.b16 %v937, %v935
    %v962 = vpack.c.b16 %v940, %v938
    %v963 = vpack.c.b16 %v941, %v939
    %v964 = vpack.c.b16 %v944, %v942
    %v965 = vpack.c.b16 %v945, %v943
    %v966 = vpack.c.b16 %v948, %v946
    %v967 = vpack.c.b16 %v949, %v947
    %v968 = vpack.c.b16 %v952, %v950
    %v969 = vpack.c.b16 %v953, %v951
    %986 = vmatpush.bf16.msra.mxu0 %v968
    %987 = vmatpush.bf16.msra.mxu0 %v966
    %988 = vmatpush.bf16.msra.mxu0 %v964
    %989 = vmatpush.bf16.msra.mxu0 %v962
    %990 = vmatpush.bf16.msra.mxu0 %v960
    %991 = vmatpush.bf16.msra.mxu0 %v958
    %992 = vmatpush.bf16.msra.mxu0 %v956
    %993 = vmatpush.bf16.msra.mxu0 %v954
    %994 = vmatmul.bf16.gmra.mxu0 %v899
    %v995 = vpop.f32.mrf.mxu0
    %v996 = vadd.f32 %v902, %v995
    %v997 = vpop.f32.mrf.mxu0
    %v998 = vadd.f32 %v902, %v997
    %999 = vdwg.mxu0
    %1000 = vmatpush.bf16.msra.mxu0 %v969
    %1001 = vmatpush.bf16.msra.mxu0 %v967
    %1002 = vmatpush.bf16.msra.mxu0 %v965
    %1003 = vmatpush.bf16.msra.mxu0 %v963
    %1004 = vmatpush.bf16.msra.mxu0 %v961
    %1005 = vmatpush.bf16.msra.mxu0 %v959
    %1006 = vmatpush.bf16.msra.mxu0 %v957
    %1007 = vmatpush.bf16.msra.mxu0 %v955
    %1008 = vmatmul.bf16.gmra.mxu0 %v899
    %v1009 = vpop.f32.mrf.mxu0
    %v1010 = vadd.f32 %v903, %v1009
    %v1011 = vpop.f32.mrf.mxu0
    %v1012 = vadd.f32 %v903, %v1011
    %1013 = vdwg.mxu0
    %v1014 = vmul.f32 %v996, 0.5
    %v1015 = vmul.f32 %v1010, 0.5
    %v1016 = vmul.f32 %v998, 0.5
    %v1017 = vmul.f32 %v1012, 0.5
    %v1018 = vmul.f32 %v996, 0.044715
    %v1019 = vmul.f32 %v1010, 0.044715
    %v1020 = vmul.f32 %v998, 0.044715
    %v1021 = vmul.f32 %v1012, 0.044715
    %v1022 = vmul.f32 %v1018, %v996
    %v1023 = vmul.f32 %v1019, %v1010
    %v1024 = vmul.f32 %v1020, %v998
    %v1025 = vmul.f32 %v1021, %v1012
    %v1026 = vmul.f32 %v1022, %v996
    %v1027 = vmul.f32 %v1023, %v1010
    %v1028 = vmul.f32 %v1024, %v998
    %v1029 = vmul.f32 %v1025, %v1012
    %v1030 = vadd.f32 %v996, %v1026
    %v1031 = vadd.f32 %v1010, %v1027
    %v1032 = vadd.f32 %v998, %v1028
    %v1033 = vadd.f32 %v1012, %v1029
    %v1034 = vmul.f32 %v1030, 0.7978846
    %v1035 = vmul.f32 %v1031, 0.7978846
    %v1036 = vmul.f32 %v1032, 0.7978846
    %v1037 = vmul.f32 %v1033, 0.7978846
    %v1038 = vtanh.pop %v1034
    %v1039 = vtanh.pop %v1035
    %v1040 = vtanh.pop %v1036
    %v1041 = vtanh.pop %v1037
    %v1042 = vadd.f32 %v1038, 1.0
    %v1043 = vadd.f32 %v1039, 1.0
    %v1044 = vadd.f32 %v1040, 1.0
    %v1045 = vadd.f32 %v1041, 1.0
    %v1046 = vmul.f32 %v1014, %v1042
    %v1047 = vmul.f32 %v1015, %v1043
    %v1048 = vmul.f32 %v1016, %v1044
    %v1049 = vmul.f32 %v1017, %v1045
    %v1050 = vld [vmem:[#allocation10] sm:$0xf]
    %v1051 = vld [vmem:[#allocation10 + $0x4] sm:$0xf]
    %v1052 = vld [vmem:[#allocation10 + $0x8] sm:$0xf]
    %v1053 = vld [vmem:[#allocation10 + $0xc] sm:$0xf]
    %v1054 = vld [vmem:[#allocation10 + $0x10] sm:$0xf]
    %v1055 = vld [vmem:[#allocation10 + $0x14] sm:$0xf]
    %v1056 = vld [vmem:[#allocation10 + $0x18] sm:$0xf]
    %v1057 = vld [vmem:[#allocation10 + $0x1c] sm:$0xf]
    %v1058 = vld [vmem:[#allocation10 + $0x20] sm:$0xf]
    %v1059 = vld [vmem:[#allocation10 + $0x24] sm:$0xf]
    %v1060 = vld [vmem:[#allocation10 + $0x28] sm:$0xf]
    %v1061 = vld [vmem:[#allocation10 + $0x2c] sm:$0xf]
    %v1062 = vld [vmem:[#allocation10 + $0x30] sm:$0xf]
    %v1063 = vld [vmem:[#allocation10 + $0x34] sm:$0xf]
    %v1064 = vld [vmem:[#allocation10 + $0x38] sm:$0xf]
    %v1065 = vld [vmem:[#allocation10 + $0x3c] sm:$0xf]
    %v1066 = vld [vmem:[#allocation10 + $0x40] sm:$0xf]
    %v1067 = vld [vmem:[#allocation10 + $0x44] sm:$0xf]
    %v1068 = vld [vmem:[#allocation10 + $0x48] sm:$0xf]
    %v1069 = vld [vmem:[#allocation10 + $0x4c] sm:$0xf]
    %v1070 = vld [vmem:[#allocation10 + $0x50] sm:$0xf]
    %v1071 = vld [vmem:[#allocation10 + $0x54] sm:$0xf]
    %v1072 = vld [vmem:[#allocation10 + $0x58] sm:$0xf]
    %v1073 = vld [vmem:[#allocation10 + $0x5c] sm:$0xf]
    %v1074 = vld [vmem:[#allocation10 + $0x60] sm:$0xf]
    %v1075 = vld [vmem:[#allocation10 + $0x64] sm:$0xf]
    %v1076 = vld [vmem:[#allocation10 + $0x68] sm:$0xf]
    %v1077 = vld [vmem:[#allocation10 + $0x6c] sm:$0xf]
    %v1078 = vld [vmem:[#allocation10 + $0x70] sm:$0xf]
    %v1079 = vld [vmem:[#allocation10 + $0x74] sm:$0xf]
    %v1080 = vld [vmem:[#allocation10 + $0x78] sm:$0xf]
    %v1081 = vld [vmem:[#allocation10 + $0x7c] sm:$0xf]
    %v1082 = vpack.c.bf16 %v1048, %v1046
    %v1083 = vpack.c.bf16 %v1049, %v1047
    %v1084 = vld [vmem:[%s17] sm:$0x1]
    %v1086 = vperm.slane %v1084, 0
    %v1120 = vunpack.c.l.b16 %v1050
    %v1121 = vunpack.c.l.b16 %v1051
    %v1122 = vunpack.c.l.b16 %v1052
    %v1123 = vunpack.c.l.b16 %v1053
    %v1124 = vunpack.c.l.b16 %v1054
    %v1125 = vunpack.c.l.b16 %v1055
    %v1126 = vunpack.c.l.b16 %v1056
    %v1127 = vunpack.c.l.b16 %v1057
    %v1128 = vunpack.c.l.b16 %v1058
    %v1129 = vunpack.c.l.b16 %v1059
    %v1130 = vunpack.c.l.b16 %v1060
    %v1131 = vunpack.c.l.b16 %v1061
    %v1132 = vunpack.c.l.b16 %v1062
    %v1133 = vunpack.c.l.b16 %v1063
    %v1134 = vunpack.c.l.b16 %v1064
    %v1135 = vunpack.c.l.b16 %v1065
    %v1136 = vunpack.c.l.b16 %v1066
    %v1137 = vunpack.c.l.b16 %v1067
    %v1138 = vunpack.c.l.b16 %v1068
    %v1139 = vunpack.c.l.b16 %v1069
    %v1140 = vunpack.c.l.b16 %v1070
    %v1141 = vunpack.c.l.b16 %v1071
    %v1142 = vunpack.c.l.b16 %v1072
    %v1143 = vunpack.c.l.b16 %v1073
    %v1144 = vunpack.c.l.b16 %v1074
    %v1145 = vunpack.c.l.b16 %v1075
    %v1146 = vunpack.c.l.b16 %v1076
    %v1147 = vunpack.c.l.b16 %v1077
    %v1148 = vunpack.c.l.b16 %v1078
    %v1149 = vunpack.c.l.b16 %v1079
    %v1150 = vunpack.c.l.b16 %v1080
    %v1151 = vunpack.c.l.b16 %v1081
    %v1152 = vpack.c.b16 %v1121, %v1120
    %v1153 = vpack.c.b16 %v1123, %v1122
    %v1154 = vpack.c.b16 %v1125, %v1124
    %v1155 = vpack.c.b16 %v1127, %v1126
    %v1156 = vpack.c.b16 %v1129, %v1128
    %v1157 = vpack.c.b16 %v1131, %v1130
    %v1158 = vpack.c.b16 %v1133, %v1132
    %v1159 = vpack.c.b16 %v1135, %v1134
    %v1160 = vpack.c.b16 %v1137, %v1136
    %v1161 = vpack.c.b16 %v1139, %v1138
    %v1162 = vpack.c.b16 %v1141, %v1140
    %v1163 = vpack.c.b16 %v1143, %v1142
    %v1164 = vpack.c.b16 %v1145, %v1144
    %v1165 = vpack.c.b16 %v1147, %v1146
    %v1166 = vpack.c.b16 %v1149, %v1148
    %v1167 = vpack.c.b16 %v1151, %v1150
    %1184 = vmatpush.bf16.msra.mxu0 %v1159
    %1185 = vmatpush.bf16.msra.mxu0 %v1158
    %1186 = vmatpush.bf16.msra.mxu0 %v1157
    %1187 = vmatpush.bf16.msra.mxu0 %v1156
    %1188 = vmatpush.bf16.msra.mxu0 %v1155
    %1189 = vmatpush.bf16.msra.mxu0 %v1154
    %1190 = vmatpush.bf16.msra.mxu0 %v1153
    %1191 = vmatpush.bf16.msra.mxu0 %v1152
    %1192 = vmatmul.bf16.gmra.mxu0 %v1082
    %v1193 = vpop.f32.mrf.mxu0
    %v1194 = vadd.f32 %v1086, %v1193
    %v1195 = vpop.f32.mrf.mxu0
    %v1196 = vadd.f32 %v1086, %v1195
    %1197 = vdwg.mxu0
    %1198 = vmatpush.bf16.msra.mxu0 %v1167
    %1199 = vmatpush.bf16.msra.mxu0 %v1166
    %1200 = vmatpush.bf16.msra.mxu0 %v1165
    %1201 = vmatpush.bf16.msra.mxu0 %v1164
    %1202 = vmatpush.bf16.msra.mxu0 %v1163
    %1203 = vmatpush.bf16.msra.mxu0 %v1162
    %1204 = vmatpush.bf16.msra.mxu0 %v1161
    %1205 = vmatpush.bf16.msra.mxu0 %v1160
    %1206 = vmatmul.bf16.gmra.mxu0 %v1083
    %v1207 = vpop.f32.mrf.mxu0
    %v1208 = vadd.f32 %v1194, %v1207
    %v1209 = vpop.f32.mrf.mxu0
    %v1210 = vadd.f32 %v1196, %v1209
    %1211 = vdwg.mxu0
    %v1212 = vadd.f32 %v1208, %v881
    %v1213 = vadd.f32 %v1210, %v882
    %v1214 = vld [vmem:[%s18] sm:$0x1]
    %v1215 = vld [vmem:[%s19] sm:$0x1]
    %1216 = vadd.xlane.f32.xlu0 %v1212
    %v1217 = vpop.xlane.xlu0 %1216
    %1218 = vadd.xlane.f32.xlu0 %v1213
    %v1219 = vpop.xlane.xlu0 %1218
    %v1220 = vmul.f32 %v1217, %v165
    %v1221 = vmul.f32 %v1219, %v165
    %v1222 = vsub.f32 %v1212, %v1220
    %v1223 = vsub.f32 %v1213, %v1221
    %v1224 = vmul.f32 %v1222, %v1222
    %v1225 = vmul.f32 %v1223, %v1223
    %1226 = vadd.xlane.f32.xlu0 %v1224
    %v1227 = vpop.xlane.xlu0 %1226
    %1228 = vadd.xlane.f32.xlu0 %v1225
    %v1229 = vpop.xlane.xlu0 %1228
    %v1230 = vmul.f32 %v1227, %v165
    %v1231 = vmul.f32 %v1229, %v165
    %v1232 = vadd.f32 %v1230, 1e-12
    %v1233 = vadd.f32 %v1231, 1e-12
    %v1234 = vrsqrt.pop %v1232
    %v1235 = vmul.f32 %v1234, %v1232
    %v1236 = vmul.f32 %v1235, %v1234
    %v1237 = vmul.f32 0.5, %v1236
    %v1238 = vsub.f32 1.5, %v1237
    %v1239 = vmul.f32 %v1234, %v1238
    %vm1240 = vweird.f32 %v1232
    %vm1241 = vweird.f32 %v1234
    %vm1242 = vmor %vm1240, %vm1241
    %v1243 = vsel %vm1242, %v1234, %v1239
    %v1244 = vrsqrt.pop %v1233
    %v1245 = vmul.f32 %v1244, %v1233
    %v1246 = vmul.f32 %v1245, %v1244
    %v1247 = vmul.f32 0.5, %v1246
    %v1248 = vsub.f32 1.5, %v1247
    %v1249 = vmul.f32 %v1244, %v1248
    %vm1250 = vweird.f32 %v1233
    %vm1251 = vweird.f32 %v1244
    %vm1252 = vmor %vm1250, %vm1251
    %v1253 = vsel %vm1252, %v1244, %v1249
    %v1254 = vmul.f32 %v1222, %v1243
    %v1255 = vmul.f32 %v1223, %v1253
    %v1257 = vperm.slane %v1214, 0
    %v1259 = vmul.f32 %v1254, %v1257
    %v1260 = vmul.f32 %v1255, %v1257
    %v1262 = vperm.slane %v1215, 0
    %v1264 = vadd.f32 %v1259, %v1262
    %v1265 = vadd.f32 %v1260, %v1262
    %s1266 = scalar_lea.vmem %s4, 64
    %v1267 = vld [vmem:[%s1266] sm:$0xf]
    %v1268 = vld [vmem:[%s1266 + $0x4] sm:$0xf]
    %v1269 = vld [vmem:[%s1266 + $0x8] sm:$0xf]
    %v1270 = vld [vmem:[%s1266 + $0xc] sm:$0xf]
    %v1271 = vld [vmem:[%s1266 + $0x10] sm:$0xf]
    %v1272 = vld [vmem:[%s1266 + $0x14] sm:$0xf]
    %v1273 = vld [vmem:[%s1266 + $0x18] sm:$0xf]
    %v1274 = vld [vmem:[%s1266 + $0x1c] sm:$0xf]
    %v1275 = vld [vmem:[%s1266 + $0x20] sm:$0xf]
    %v1276 = vld [vmem:[%s1266 + $0x24] sm:$0xf]
    %v1277 = vld [vmem:[%s1266 + $0x28] sm:$0xf]
    %v1278 = vld [vmem:[%s1266 + $0x2c] sm:$0xf]
    %v1279 = vld [vmem:[%s1266 + $0x30] sm:$0xf]
    %v1280 = vld [vmem:[%s1266 + $0x34] sm:$0xf]
    %v1281 = vld [vmem:[%s1266 + $0x38] sm:$0xf]
    %v1282 = vld [vmem:[%s1266 + $0x3c] sm:$0xf]
    %s1283 = scalar_lea.vmem [#allocation2], 64
    %v1284 = vld [vmem:[%s1283] sm:$0xf]
    %v1285 = vld [vmem:[%s1283 + $0x4] sm:$0xf]
    %v1286 = vld [vmem:[%s1283 + $0x8] sm:$0xf]
    %v1287 = vld [vmem:[%s1283 + $0xc] sm:$0xf]
    %v1288 = vld [vmem:[%s1283 + $0x10] sm:$0xf]
    %v1289 = vld [vmem:[%s1283 + $0x14] sm:$0xf]
    %v1290 = vld [vmem:[%s1283 + $0x18] sm:$0xf]
    %v1291 = vld [vmem:[%s1283 + $0x1c] sm:$0xf]
    %v1292 = vld [vmem:[%s1283 + $0x20] sm:$0xf]
    %v1293 = vld [vmem:[%s1283 + $0x24] sm:$0xf]
    %v1294 = vld [vmem:[%s1283 + $0x28] sm:$0xf]
    %v1295 = vld [vmem:[%s1283 + $0x2c] sm:$0xf]
    %v1296 = vld [vmem:[%s1283 + $0x30] sm:$0xf]
    %v1297 = vld [vmem:[%s1283 + $0x34] sm:$0xf]
    %v1298 = vld [vmem:[%s1283 + $0x38] sm:$0xf]
    %v1299 = vld [vmem:[%s1283 + $0x3c] sm:$0xf]
    %s1300 = scalar_lea.vmem [#allocation5], 64
    %v1301 = vld [vmem:[%s1300] sm:$0xf]
    %v1302 = vld [vmem:[%s1300 + $0x4] sm:$0xf]
    %v1303 = vld [vmem:[%s1300 + $0x8] sm:$0xf]
    %v1304 = vld [vmem:[%s1300 + $0xc] sm:$0xf]
    %v1305 = vld [vmem:[%s1300 + $0x10] sm:$0xf]
    %v1306 = vld [vmem:[%s1300 + $0x14] sm:$0xf]
    %v1307 = vld [vmem:[%s1300 + $0x18] sm:$0xf]
    %v1308 = vld [vmem:[%s1300 + $0x1c] sm:$0xf]
    %v1309 = vld [vmem:[%s1300 + $0x20] sm:$0xf]
    %v1310 = vld [vmem:[%s1300 + $0x24] sm:$0xf]
    %v1311 = vld [vmem:[%s1300 + $0x28] sm:$0xf]
    %v1312 = vld [vmem:[%s1300 + $0x2c] sm:$0xf]
    %v1313 = vld [vmem:[%s1300 + $0x30] sm:$0xf]
    %v1314 = vld [vmem:[%s1300 + $0x34] sm:$0xf]
    %v1315 = vld [vmem:[%s1300 + $0x38] sm:$0xf]
    %v1316 = vld [vmem:[%s1300 + $0x3c] sm:$0xf]
    %s1317 = scalar_lea.vmem [#allocation7], 64
    %v1318 = vld [vmem:[%s1317] sm:$0xf]
    %v1319 = vld [vmem:[%s1317 + $0x4] sm:$0xf]
    %v1320 = vld [vmem:[%s1317 + $0x8] sm:$0xf]
    %v1321 = vld [vmem:[%s1317 + $0xc] sm:$0xf]
    %v1322 = vld [vmem:[%s1317 + $0x10] sm:$0xf]
    %v1323 = vld [vmem:[%s1317 + $0x14] sm:$0xf]
    %v1324 = vld [vmem:[%s1317 + $0x18] sm:$0xf]
    %v1325 = vld [vmem:[%s1317 + $0x1c] sm:$0xf]
    %v1326 = vld [vmem:[%s1317 + $0x20] sm:$0xf]
    %v1327 = vld [vmem:[%s1317 + $0x24] sm:$0xf]
    %v1328 = vld [vmem:[%s1317 + $0x28] sm:$0xf]
    %v1329 = vld [vmem:[%s1317 + $0x2c] sm:$0xf]
    %v1330 = vld [vmem:[%s1317 + $0x30] sm:$0xf]
    %v1331 = vld [vmem:[%s1317 + $0x34] sm:$0xf]
    %v1332 = vld [vmem:[%s1317 + $0x38] sm:$0xf]
    %v1333 = vld [vmem:[%s1317 + $0x3c] sm:$0xf]
    %v1334 = vpack.c.bf16 %v1265, %v1264
    %s1335 = scalar_lea.vmem %s5, 1
    %v1336 = vld [vmem:[%s1335] sm:$0x1]
    %v1338 = vperm.slane %v1336, 0
    %v1356 = vunpack.c.l.b16 %v1267
    %v1357 = vunpack.c.l.b16 %v1268
    %v1358 = vunpack.c.l.b16 %v1269
    %v1359 = vunpack.c.l.b16 %v1270
    %v1360 = vunpack.c.l.b16 %v1271
    %v1361 = vunpack.c.l.b16 %v1272
    %v1362 = vunpack.c.l.b16 %v1273
    %v1363 = vunpack.c.l.b16 %v1274
    %v1364 = vunpack.c.l.b16 %v1275
    %v1365 = vunpack.c.l.b16 %v1276
    %v1366 = vunpack.c.l.b16 %v1277
    %v1367 = vunpack.c.l.b16 %v1278
    %v1368 = vunpack.c.l.b16 %v1279
    %v1369 = vunpack.c.l.b16 %v1280
    %v1370 = vunpack.c.l.b16 %v1281
    %v1371 = vunpack.c.l.b16 %v1282
    %v1372 = vpack.c.b16 %v1357, %v1356
    %v1373 = vpack.c.b16 %v1359, %v1358
    %v1374 = vpack.c.b16 %v1361, %v1360
    %v1375 = vpack.c.b16 %v1363, %v1362
    %v1376 = vpack.c.b16 %v1365, %v1364
    %v1377 = vpack.c.b16 %v1367, %v1366
    %v1378 = vpack.c.b16 %v1369, %v1368
    %v1379 = vpack.c.b16 %v1371, %v1370
    %1388 = vmatpush.bf16.msra.mxu0 %v1379
    %1389 = vmatpush.bf16.msra.mxu0 %v1378
    %1390 = vmatpush.bf16.msra.mxu0 %v1377
    %1391 = vmatpush.bf16.msra.mxu0 %v1376
    %1392 = vmatpush.bf16.msra.mxu0 %v1375
    %1393 = vmatpush.bf16.msra.mxu0 %v1374
    %1394 = vmatpush.bf16.msra.mxu0 %v1373
    %1395 = vmatpush.bf16.msra.mxu0 %v1372
    %1396 = vmatmul.bf16.gmra.mxu0 %v1334
    %v1397 = vpop.f32.mrf.mxu0
    %v1398 = vadd.f32 %v1338, %v1397
    %v1399 = vpop.f32.mrf.mxu0
    %v1400 = vadd.f32 %v1338, %v1399
    %1401 = vdwg.mxu0
    %s1402 = scalar_lea.vmem %s7, 1
    %v1403 = vld [vmem:[%s1402] sm:$0x1]
    %v1405 = vperm.slane %v1403, 0
    %v1423 = vunpack.c.l.b16 %v1284
    %v1424 = vunpack.c.l.b16 %v1285
    %v1425 = vunpack.c.l.b16 %v1286
    %v1426 = vunpack.c.l.b16 %v1287
    %v1427 = vunpack.c.l.b16 %v1288
    %v1428 = vunpack.c.l.b16 %v1289
    %v1429 = vunpack.c.l.b16 %v1290
    %v1430 = vunpack.c.l.b16 %v1291
    %v1431 = vunpack.c.l.b16 %v1292
    %v1432 = vunpack.c.l.b16 %v1293
    %v1433 = vunpack.c.l.b16 %v1294
    %v1434 = vunpack.c.l.b16 %v1295
    %v1435 = vunpack.c.l.b16 %v1296
    %v1436 = vunpack.c.l.b16 %v1297
    %v1437 = vunpack.c.l.b16 %v1298
    %v1438 = vunpack.c.l.b16 %v1299
    %v1439 = vpack.c.b16 %v1424, %v1423
    %v1440 = vpack.c.b16 %v1426, %v1425
    %v1441 = vpack.c.b16 %v1428, %v1427
    %v1442 = vpack.c.b16 %v1430, %v1429
    %v1443 = vpack.c.b16 %v1432, %v1431
    %v1444 = vpack.c.b16 %v1434, %v1433
    %v1445 = vpack.c.b16 %v1436, %v1435
    %v1446 = vpack.c.b16 %v1438, %v1437
    %1455 = vmatpush.bf16.msra.mxu0 %v1446
    %1456 = vmatpush.bf16.msra.mxu0 %v1445
    %1457 = vmatpush.bf16.msra.mxu0 %v1444
    %1458 = vmatpush.bf16.msra.mxu0 %v1443
    %1459 = vmatpush.bf16.msra.mxu0 %v1442
    %1460 = vmatpush.bf16.msra.mxu0 %v1441
    %1461 = vmatpush.bf16.msra.mxu0 %v1440
    %1462 = vmatpush.bf16.msra.mxu0 %v1439
    %1463 = vmatmul.bf16.gmra.mxu0 %v1334
    %v1464 = vpop.f32.mrf.mxu0
    %v1465 = vadd.f32 %v1405, %v1464
    %v1466 = vpop.f32.mrf.mxu0
    %v1467 = vadd.f32 %v1405, %v1466
    %1468 = vdwg.mxu0
    %s1469 = scalar_lea.vmem %s9, 1
    %v1470 = vld [vmem:[%s1469] sm:$0x1]
    %v1472 = vperm.slane %v1470, 0
    %v1490 = vunpack.c.l.b16 %v1301
    %v1491 = vunpack.c.l.b16 %v1302
    %v1492 = vunpack.c.l.b16 %v1303
    %v1493 = vunpack.c.l.b16 %v1304
    %v1494 = vunpack.c.l.b16 %v1305
    %v1495 = vunpack.c.l.b16 %v1306
    %v1496 = vunpack.c.l.b16 %v1307
    %v1497 = vunpack.c.l.b16 %v1308
    %v1498 = vunpack.c.l.b16 %v1309
    %v1499 = vunpack.c.l.b16 %v1310
    %v1500 = vunpack.c.l.b16 %v1311
    %v1501 = vunpack.c.l.b16 %v1312
    %v1502 = vunpack.c.l.b16 %v1313
    %v1503 = vunpack.c.l.b16 %v1314
    %v1504 = vunpack.c.l.b16 %v1315
    %v1505 = vunpack.c.l.b16 %v1316
    %v1506 = vpack.c.b16 %v1491, %v1490
    %v1507 = vpack.c.b16 %v1493, %v1492
    %v1508 = vpack.c.b16 %v1495, %v1494
    %v1509 = vpack.c.b16 %v1497, %v1496
    %v1510 = vpack.c.b16 %v1499, %v1498
    %v1511 = vpack.c.b16 %v1501, %v1500
    %v1512 = vpack.c.b16 %v1503, %v1502
    %v1513 = vpack.c.b16 %v1505, %v1504
    %1522 = vmatpush.bf16.msra.mxu0 %v1513
    %1523 = vmatpush.bf16.msra.mxu0 %v1512
    %1524 = vmatpush.bf16.msra.mxu0 %v1511
    %1525 = vmatpush.bf16.msra.mxu0 %v1510
    %1526 = vmatpush.bf16.msra.mxu0 %v1509
    %1527 = vmatpush.bf16.msra.mxu0 %v1508
    %1528 = vmatpush.bf16.msra.mxu0 %v1507
    %1529 = vmatpush.bf16.msra.mxu0 %v1506
    %1530 = vmatmul.bf16.gmra.mxu0 %v1334
    %v1531 = vpop.f32.mrf.mxu0
    %v1532 = vadd.f32 %v1472, %v1531
    %v1533 = vpop.f32.mrf.mxu0
    %v1534 = vadd.f32 %v1472, %v1533
    %1535 = vdwg.mxu0
    %v1536 = vmul.f32 %v1398, 0.125
    %v1537 = vmul.f32 %v1400, 0.125
    %v1538 = vpack.c.bf16 %v1536, %v1536
    %v1539 = vpack.c.bf16 %v1465, %v1465
    %v1541 = vsel %vm481, %v1538, 0
    %v1544 = vsel %vm481, %v1539, 0
    %1546 = vmatpush.bf16.xpose.msra.mxu0 0
    %1547 = vmatpush.bf16.xpose.msra.mxu0 0
    %1548 = vmatpush.bf16.xpose.msra.mxu0 0
    %1549 = vmatpush.bf16.xpose.msra.mxu0 0
    %1550 = vmatpush.bf16.xpose.msra.mxu0 0
    %1551 = vmatpush.bf16.xpose.msra.mxu0 0
    %1552 = vmatpush.bf16.xpose.msra.mxu0 0
    %1553 = vmatpush.bf16.xpose.msra.mxu0 %v1544
    %1554 = vmatmul.bf16.gmra.mxu0 %v1541
    %v1555 = vpop.f32.mrf.mxu0
    %v1556 = vadd.f32 %v480, %v1555
    %v1557 = vpop.f32.mrf.mxu0
    %1558 = vdwg.mxu0
    %v1559 = vsel %vm501, %v1556, -inf
    %1560 = vmax.xlane.f32.xlu0 %v1559
    %v1561 = vpop.xlane.xlu0 %1560
    %v1562 = vsub.f32 %v1556, %v1561
    %v1563 = vmul.f32 %v1562, 1.442695
    %v1564 = vpow.pop %v1563
    %v1565 = vsel %vm501, %v1564, 0.0
    %1566 = vadd.xlane.f32.xlu0 %v1565
    %v1567 = vpop.xlane.xlu0 %1566
    %v1568 = vrcp.pop %v1567
    %v1569 = vmul.f32 %v1564, %v1568
    %v1570 = vpack.c.bf16 %v1569, %v1569
    %v1571 = vpack.c.bf16 %v1532, %v1532
    %v1573 = vsel %vm501, %v1570, 0
    %v1576 = vsel %vm518, %v1571, 0
    %1578 = vmatpush.bf16.msra.mxu0 0
    %1579 = vmatpush.bf16.msra.mxu0 0
    %1580 = vmatpush.bf16.msra.mxu0 0
    %1581 = vmatpush.bf16.msra.mxu0 0
    %1582 = vmatpush.bf16.msra.mxu0 0
    %1583 = vmatpush.bf16.msra.mxu0 0
    %1584 = vmatpush.bf16.msra.mxu0 0
    %1585 = vmatpush.bf16.msra.mxu0 %v1576
    %1586 = vmatmul.bf16.gmra.mxu0 %v1573
    %v1587 = vpop.f32.mrf.mxu0
    %v1588 = vadd.f32 0.0, %v1587
    %v1589 = vpop.f32.mrf.mxu0
    %1590 = vdwg.mxu0
    %v1591 = vpack.c.bf16 %v1588, %v1588
    %1593 = vrot.lane.b32.xlu0 %v1538, 64
    %v1594 = vpop.permute.xlu0 %1593
    %1596 = vrot.lane.b32.xlu0 %v1539, 64
    %v1597 = vpop.permute.xlu0 %1596
    %v1599 = vsel %vm481, %v1594, 0
    %v1602 = vsel %vm481, %v1597, 0
    %1604 = vmatpush.bf16.xpose.msra.mxu0 0
    %1605 = vmatpush.bf16.xpose.msra.mxu0 0
    %1606 = vmatpush.bf16.xpose.msra.mxu0 0
    %1607 = vmatpush.bf16.xpose.msra.mxu0 0
    %1608 = vmatpush.bf16.xpose.msra.mxu0 0
    %1609 = vmatpush.bf16.xpose.msra.mxu0 0
    %1610 = vmatpush.bf16.xpose.msra.mxu0 0
    %1611 = vmatpush.bf16.xpose.msra.mxu0 %v1602
    %1612 = vmatmul.bf16.gmra.mxu0 %v1599
    %v1613 = vpop.f32.mrf.mxu0
    %v1614 = vadd.f32 %v480, %v1613
    %v1615 = vpop.f32.mrf.mxu0
    %1616 = vdwg.mxu0
    %v1617 = vsel %vm501, %v1614, -inf
    %1618 = vmax.xlane.f32.xlu0 %v1617
    %v1619 = vpop.xlane.xlu0 %1618
    %v1620 = vsub.f32 %v1614, %v1619
    %v1621 = vmul.f32 %v1620, 1.442695
    %v1622 = vpow.pop %v1621
    %v1623 = vsel %vm501, %v1622, 0.0
    %1624 = vadd.xlane.f32.xlu0 %v1623
    %v1625 = vpop.xlane.xlu0 %1624
    %v1626 = vrcp.pop %v1625
    %v1627 = vmul.f32 %v1622, %v1626
    %v1628 = vpack.c.bf16 %v1627, %v1627
    %1630 = vrot.lane.b32.xlu0 %v1571, 64
    %v1631 = vpop.permute.xlu0 %1630
    %v1633 = vsel %vm501, %v1628, 0
    %v1636 = vsel %vm518, %v1631, 0
    %1638 = vmatpush.bf16.msra.mxu0 0
    %1639 = vmatpush.bf16.msra.mxu0 0
    %1640 = vmatpush.bf16.msra.mxu0 0
    %1641 = vmatpush.bf16.msra.mxu0 0
    %1642 = vmatpush.bf16.msra.mxu0 0
    %1643 = vmatpush.bf16.msra.mxu0 0
    %1644 = vmatpush.bf16.msra.mxu0 0
    %1645 = vmatpush.bf16.msra.mxu0 %v1636
    %1646 = vmatmul.bf16.gmra.mxu0 %v1633
    %v1647 = vpop.f32.mrf.mxu0
    %v1648 = vadd.f32 0.0, %v1647
    %v1649 = vpop.f32.mrf.mxu0
    %1650 = vdwg.mxu0
    %v1651 = vpack.c.bf16 %v1648, %v1648
    %v1660 = vunpack.c.l.b16 %v1326
    %v1661 = vunpack.c.l.b16 %v1327
    %v1662 = vunpack.c.l.b16 %v1328
    %v1663 = vunpack.c.l.b16 %v1329
    %v1664 = vunpack.c.l.b16 %v1330
    %v1665 = vunpack.c.l.b16 %v1331
    %v1666 = vunpack.c.l.b16 %v1332
    %v1667 = vunpack.c.l.b16 %v1333
    %v1668 = vpack.c.b16 %v1661, %v1660
    %v1669 = vpack.c.b16 %v1663, %v1662
    %v1670 = vpack.c.b16 %v1665, %v1664
    %v1671 = vpack.c.b16 %v1667, %v1666
    %v1677 = vsel %vm481, %v1651, 0
    %1679 = vmatpush.bf16.msra.mxu0 0
    %1680 = vmatpush.bf16.msra.mxu0 0
    %1681 = vmatpush.bf16.msra.mxu0 0
    %1682 = vmatpush.bf16.msra.mxu0 0
    %1683 = vmatpush.bf16.msra.mxu0 %v1671
    %1684 = vmatpush.bf16.msra.mxu0 %v1670
    %1685 = vmatpush.bf16.msra.mxu0 %v1669
    %1686 = vmatpush.bf16.msra.mxu0 %v1668
    %1687 = vmatmul.bf16.gmra.mxu0 %v1677
    %v1688 = vpop.f32.mrf.mxu0
    %v1689 = vadd.f32 0.0, %v1688
    %v1690 = vpop.f32.mrf.mxu0
    %1691 = vdwg.mxu0
    %v1700 = vunpack.c.l.b16 %v1318
    %v1701 = vunpack.c.l.b16 %v1319
    %v1702 = vunpack.c.l.b16 %v1320
    %v1703 = vunpack.c.l.b16 %v1321
    %v1704 = vunpack.c.l.b16 %v1322
    %v1705 = vunpack.c.l.b16 %v1323
    %v1706 = vunpack.c.l.b16 %v1324
    %v1707 = vunpack.c.l.b16 %v1325
    %v1708 = vpack.c.b16 %v1701, %v1700
    %v1709 = vpack.c.b16 %v1703, %v1702
    %v1710 = vpack.c.b16 %v1705, %v1704
    %v1711 = vpack.c.b16 %v1707, %v1706
    %v1717 = vsel %vm481, %v1591, 0
    %1719 = vmatpush.bf16.msra.mxu0 0
    %1720 = vmatpush.bf16.msra.mxu0 0
    %1721 = vmatpush.bf16.msra.mxu0 0
    %1722 = vmatpush.bf16.msra.mxu0 0
    %1723 = vmatpush.bf16.msra.mxu0 %v1711
    %1724 = vmatpush.bf16.msra.mxu0 %v1710
    %1725 = vmatpush.bf16.msra.mxu0 %v1709
    %1726 = vmatpush.bf16.msra.mxu0 %v1708
    %1727 = vmatmul.bf16.gmra.mxu0 %v1717
    %v1728 = vpop.f32.mrf.mxu0
    %v1729 = vadd.f32 %v1689, %v1728
    %v1730 = vpop.f32.mrf.mxu0
    %1731 = vdwg.mxu0
    %v1732 = vpack.c.bf16 %v1537, %v1537
    %v1733 = vpack.c.bf16 %v1467, %v1467
    %v1735 = vsel %vm481, %v1732, 0
    %v1738 = vsel %vm481, %v1733, 0
    %1740 = vmatpush.bf16.xpose.msra.mxu0 0
    %1741 = vmatpush.bf16.xpose.msra.mxu0 0
    %1742 = vmatpush.bf16.xpose.msra.mxu0 0
    %1743 = vmatpush.bf16.xpose.msra.mxu0 0
    %1744 = vmatpush.bf16.xpose.msra.mxu0 0
    %1745 = vmatpush.bf16.xpose.msra.mxu0 0
    %1746 = vmatpush.bf16.xpose.msra.mxu0 0
    %1747 = vmatpush.bf16.xpose.msra.mxu0 %v1738
    %1748 = vmatmul.bf16.gmra.mxu0 %v1735
    %v1749 = vpop.f32.mrf.mxu0
    %v1750 = vadd.f32 %v678, %v1749
    %v1751 = vpop.f32.mrf.mxu0
    %1752 = vdwg.mxu0
    %v1753 = vsel %vm501, %v1750, -inf
    %1754 = vmax.xlane.f32.xlu0 %v1753
    %v1755 = vpop.xlane.xlu0 %1754
    %v1756 = vsub.f32 %v1750, %v1755
    %v1757 = vmul.f32 %v1756, 1.442695
    %v1758 = vpow.pop %v1757
    %v1759 = vsel %vm501, %v1758, 0.0
    %1760 = vadd.xlane.f32.xlu0 %v1759
    %v1761 = vpop.xlane.xlu0 %1760
    %v1762 = vrcp.pop %v1761
    %v1763 = vmul.f32 %v1758, %v1762
    %v1764 = vpack.c.bf16 %v1763, %v1763
    %v1765 = vpack.c.bf16 %v1534, %v1534
    %v1767 = vsel %vm501, %v1764, 0
    %v1770 = vsel %vm518, %v1765, 0
    %1772 = vmatpush.bf16.msra.mxu0 0
    %1773 = vmatpush.bf16.msra.mxu0 0
    %1774 = vmatpush.bf16.msra.mxu0 0
    %1775 = vmatpush.bf16.msra.mxu0 0
    %1776 = vmatpush.bf16.msra.mxu0 0
    %1777 = vmatpush.bf16.msra.mxu0 0
    %1778 = vmatpush.bf16.msra.mxu0 0
    %1779 = vmatpush.bf16.msra.mxu0 %v1770
    %1780 = vmatmul.bf16.gmra.mxu0 %v1767
    %v1781 = vpop.f32.mrf.mxu0
    %v1782 = vadd.f32 0.0, %v1781
    %v1783 = vpop.f32.mrf.mxu0
    %1784 = vdwg.mxu0
    %v1785 = vpack.c.bf16 %v1782, %v1782
    %1787 = vrot.lane.b32.xlu0 %v1732, 64
    %v1788 = vpop.permute.xlu0 %1787
    %1790 = vrot.lane.b32.xlu0 %v1733, 64
    %v1791 = vpop.permute.xlu0 %1790
    %v1793 = vsel %vm481, %v1788, 0
    %v1796 = vsel %vm481, %v1791, 0
    %1798 = vmatpush.bf16.xpose.msra.mxu0 0
    %1799 = vmatpush.bf16.xpose.msra.mxu0 0
    %1800 = vmatpush.bf16.xpose.msra.mxu0 0
    %1801 = vmatpush.bf16.xpose.msra.mxu0 0
    %1802 = vmatpush.bf16.xpose.msra.mxu0 0
    %1803 = vmatpush.bf16.xpose.msra.mxu0 0
    %1804 = vmatpush.bf16.xpose.msra.mxu0 0
    %1805 = vmatpush.bf16.xpose.msra.mxu0 %v1796
    %1806 = vmatmul.bf16.gmra.mxu0 %v1793
    %v1807 = vpop.f32.mrf.mxu0
    %v1808 = vadd.f32 %v678, %v1807
    %v1809 = vpop.f32.mrf.mxu0
    %1810 = vdwg.mxu0
    %v1811 = vsel %vm501, %v1808, -inf
    %1812 = vmax.xlane.f32.xlu0 %v1811
    %v1813 = vpop.xlane.xlu0 %1812
    %v1814 = vsub.f32 %v1808, %v1813
    %v1815 = vmul.f32 %v1814, 1.442695
    %v1816 = vpow.pop %v1815
    %v1817 = vsel %vm501, %v1816, 0.0
    %1818 = vadd.xlane.f32.xlu0 %v1817
    %v1819 = vpop.xlane.xlu0 %1818
    %v1820 = vrcp.pop %v1819
    %v1821 = vmul.f32 %v1816, %v1820
    %v1822 = vpack.c.bf16 %v1821, %v1821
    %1824 = vrot.lane.b32.xlu0 %v1765, 64
    %v1825 = vpop.permute.xlu0 %1824
    %v1827 = vsel %vm501, %v1822, 0
    %v1830 = vsel %vm518, %v1825, 0
    %1832 = vmatpush.bf16.msra.mxu0 0
    %1833 = vmatpush.bf16.msra.mxu0 0
    %1834 = vmatpush.bf16.msra.mxu0 0
    %1835 = vmatpush.bf16.msra.mxu0 0
    %1836 = vmatpush.bf16.msra.mxu0 0
    %1837 = vmatpush.bf16.msra.mxu0 0
    %1838 = vmatpush.bf16.msra.mxu0 0
    %1839 = vmatpush.bf16.msra.mxu0 %v1830
    %1840 = vmatmul.bf16.gmra.mxu0 %v1827
    %v1841 = vpop.f32.mrf.mxu0
    %v1842 = vadd.f32 0.0, %v1841
    %v1843 = vpop.f32.mrf.mxu0
    %1844 = vdwg.mxu0
    %v1845 = vpack.c.bf16 %v1842, %v1842
    %v1847 = vsel %vm481, %v1845, 0
    %1849 = vmatpush.bf16.msra.mxu0 0
    %1850 = vmatpush.bf16.msra.mxu0 0
    %1851 = vmatpush.bf16.msra.mxu0 0
    %1852 = vmatpush.bf16.msra.mxu0 0
    %1853 = vmatpush.bf16.msra.mxu0 %v1671
    %1854 = vmatpush.bf16.msra.mxu0 %v1670
    %1855 = vmatpush.bf16.msra.mxu0 %v1669
    %1856 = vmatpush.bf16.msra.mxu0 %v1668
    %1857 = vmatmul.bf16.gmra.mxu0 %v1847
    %v1858 = vpop.f32.mrf.mxu0
    %v1859 = vadd.f32 0.0, %v1858
    %v1860 = vpop.f32.mrf.mxu0
    %1861 = vdwg.mxu0
    %v1863 = vsel %vm481, %v1785, 0
    %1865 = vmatpush.bf16.msra.mxu0 0
    %1866 = vmatpush.bf16.msra.mxu0 0
    %1867 = vmatpush.bf16.msra.mxu0 0
    %1868 = vmatpush.bf16.msra.mxu0 0
    %1869 = vmatpush.bf16.msra.mxu0 %v1711
    %1870 = vmatpush.bf16.msra.mxu0 %v1710
    %1871 = vmatpush.bf16.msra.mxu0 %v1709
    %1872 = vmatpush.bf16.msra.mxu0 %v1708
    %1873 = vmatmul.bf16.gmra.mxu0 %v1863
    %v1874 = vpop.f32.mrf.mxu0
    %v1875 = vadd.f32 %v1859, %v1874
    %v1876 = vpop.f32.mrf.mxu0
    %1877 = vdwg.mxu0
    %s1878 = scalar_lea.vmem %s11, 1
    %v1879 = vld [vmem:[%s1878] sm:$0x1]
    %v1881 = vperm.slane %v1879, 0
    %v1883 = vadd.f32 %v1729, %v1881
    %v1884 = vadd.f32 %v1875, %v1881
    %v1885 = vadd.f32 %v1883, %v1264
    %v1886 = vadd.f32 %v1884, %v1265
    %s1887 = scalar_lea.vmem %s12, 1
    %v1888 = vld [vmem:[%s1887] sm:$0x1]
    %s1889 = scalar_lea.vmem %s13, 1
    %v1890 = vld [vmem:[%s1889] sm:$0x1]
    %1891 = vadd.xlane.f32.xlu0 %v1885
    %v1892 = vpop.xlane.xlu0 %1891
    %1893 = vadd.xlane.f32.xlu0 %v1886
    %v1894 = vpop.xlane.xlu0 %1893
    %v1895 = vmul.f32 %v1892, %v165
    %v1896 = vmul.f32 %v1894, %v165
    %v1897 = vsub.f32 %v1885, %v1895
    %v1898 = vsub.f32 %v1886, %v1896
    %v1899 = vmul.f32 %v1897, %v1897
    %v1900 = vmul.f32 %v1898, %v1898
    %1901 = vadd.xlane.f32.xlu0 %v1899
    %v1902 = vpop.xlane.xlu0 %1901
    %1903 = vadd.xlane.f32.xlu0 %v1900
    %v1904 = vpop.xlane.xlu0 %1903
    %v1905 = vmul.f32 %v1902, %v165
    %v1906 = vmul.f32 %v1904, %v165
    %v1907 = vadd.f32 %v1905, 1e-12
    %v1908 = vadd.f32 %v1906, 1e-12
    %v1909 = vrsqrt.pop %v1907
    %v1910 = vmul.f32 %v1909, %v1907
    %v1911 = vmul.f32 %v1910, %v1909
    %v1912 = vmul.f32 0.5, %v1911
    %v1913 = vsub.f32 1.5, %v1912
    %v1914 = vmul.f32 %v1909, %v1913
    %vm1915 = vweird.f32 %v1907
    %vm1916 = vweird.f32 %v1909
    %vm1917 = vmor %vm1915, %vm1916
    %v1918 = vsel %vm1917, %v1909, %v1914
    %v1919 = vrsqrt.pop %v1908
    %v1920 = vmul.f32 %v1919, %v1908
    %v1921 = vmul.f32 %v1920, %v1919
    %v1922 = vmul.f32 0.5, %v1921
    %v1923 = vsub.f32 1.5, %v1922
    %v1924 = vmul.f32 %v1919, %v1923
    %vm1925 = vweird.f32 %v1908
    %vm1926 = vweird.f32 %v1919
    %vm1927 = vmor %vm1925, %vm1926
    %v1928 = vsel %vm1927, %v1919, %v1924
    %v1929 = vmul.f32 %v1897, %v1918
    %v1930 = vmul.f32 %v1898, %v1928
    %v1932 = vperm.slane %v1888, 0
    %v1934 = vmul.f32 %v1929, %v1932
    %v1935 = vmul.f32 %v1930, %v1932
    %v1937 = vperm.slane %v1890, 0
    %v1939 = vadd.f32 %v1934, %v1937
    %v1940 = vadd.f32 %v1935, %v1937
    %s1941 = scalar_lea.vmem [#allocation8], 128
    %v1942 = vld [vmem:[%s1941] sm:$0xff]
    %v1943 = vld [vmem:[%s1941 + $0x8] sm:$0xff]
    %v1944 = vld [vmem:[%s1941 + $0x10] sm:$0xff]
    %v1945 = vld [vmem:[%s1941 + $0x18] sm:$0xff]
    %v1946 = vld [vmem:[%s1941 + $0x20] sm:$0xff]
    %v1947 = vld [vmem:[%s1941 + $0x28] sm:$0xff]
    %v1948 = vld [vmem:[%s1941 + $0x30] sm:$0xff]
    %v1949 = vld [vmem:[%s1941 + $0x38] sm:$0xff]
    %v1950 = vld [vmem:[%s1941 + $0x40] sm:$0xff]
    %v1951 = vld [vmem:[%s1941 + $0x48] sm:$0xff]
    %v1952 = vld [vmem:[%s1941 + $0x50] sm:$0xff]
    %v1953 = vld [vmem:[%s1941 + $0x58] sm:$0xff]
    %v1954 = vld [vmem:[%s1941 + $0x60] sm:$0xff]
    %v1955 = vld [vmem:[%s1941 + $0x68] sm:$0xff]
    %v1956 = vld [vmem:[%s1941 + $0x70] sm:$0xff]
    %v1957 = vld [vmem:[%s1941 + $0x78] sm:$0xff]
    %v1958 = vpack.c.bf16 %v1940, %v1939
    %s1959 = scalar_lea.vmem %s15, 2
    %v1960 = vld [vmem:[%s1959] sm:$0x3]
    %v1962 = vperm.slane %v1960, 0
    %v1963 = vperm.slane %v1960, 1
    %v1982 = vunpack.c.l.b16 %v1942
    %v1983 = vunpack.c.h.b16 %v1942
    %v1984 = vunpack.c.l.b16 %v1943
    %v1985 = vunpack.c.h.b16 %v1943
    %v1986 = vunpack.c.l.b16 %v1944
    %v1987 = vunpack.c.h.b16 %v1944
    %v1988 = vunpack.c.l.b16 %v1945
    %v1989 = vunpack.c.h.b16 %v1945
    %v1990 = vunpack.c.l.b16 %v1946
    %v1991 = vunpack.c.h.b16 %v1946
    %v1992 = vunpack.c.l.b16 %v1947
    %v1993 = vunpack.c.h.b16 %v1947
    %v1994 = vunpack.c.l.b16 %v1948
    %v1995 = vunpack.c.h.b16 %v1948
    %v1996 = vunpack.c.l.b16 %v1949
    %v1997 = vunpack.c.h.b16 %v1949
    %v1998 = vunpack.c.l.b16 %v1950
    %v1999 = vunpack.c.h.b16 %v1950
    %v2000 = vunpack.c.l.b16 %v1951
    %v2001 = vunpack.c.h.b16 %v1951
    %v2002 = vunpack.c.l.b16 %v1952
    %v2003 = vunpack.c.h.b16 %v1952
    %v2004 = vunpack.c.l.b16 %v1953
    %v2005 = vunpack.c.h.b16 %v1953
    %v2006 = vunpack.c.l.b16 %v1954
    %v2007 = vunpack.c.h.b16 %v1954
    %v2008 = vunpack.c.l.b16 %v1955
    %v2009 = vunpack.c.h.b16 %v1955
    %v2010 = vunpack.c.l.b16 %v1956
    %v2011 = vunpack.c.h.b16 %v1956
    %v2012 = vunpack.c.l.b16 %v1957
    %v2013 = vunpack.c.h.b16 %v1957
    %v2014 = vpack.c.b16 %v1984, %v1982
    %v2015 = vpack.c.b16 %v1985, %v1983
    %v2016 = vpack.c.b16 %v1988, %v1986
    %v2017 = vpack.c.b16 %v1989, %v1987
    %v2018 = vpack.c.b16 %v1992, %v1990
    %v2019 = vpack.c.b16 %v1993, %v1991
    %v2020 = vpack.c.b16 %v1996, %v1994
    %v2021 = vpack.c.b16 %v1997, %v1995
    %v2022 = vpack.c.b16 %v2000, %v1998
    %v2023 = vpack.c.b16 %v2001, %v1999
    %v2024 = vpack.c.b16 %v2004, %v2002
    %v2025 = vpack.c.b16 %v2005, %v2003
    %v2026 = vpack.c.b16 %v2008, %v2006
    %v2027 = vpack.c.b16 %v2009, %v2007
    %v2028 = vpack.c.b16 %v2012, %v2010
    %v2029 = vpack.c.b16 %v2013, %v2011
    %2046 = vmatpush.bf16.msra.mxu0 %v2028
    %2047 = vmatpush.bf16.msra.mxu0 %v2026
    %2048 = vmatpush.bf16.msra.mxu0 %v2024
    %2049 = vmatpush.bf16.msra.mxu0 %v2022
    %2050 = vmatpush.bf16.msra.mxu0 %v2020
    %2051 = vmatpush.bf16.msra.mxu0 %v2018
    %2052 = vmatpush.bf16.msra.mxu0 %v2016
    %2053 = vmatpush.bf16.msra.mxu0 %v2014
    %2054 = vmatmul.bf16.gmra.mxu0 %v1958
    %v2055 = vpop.f32.mrf.mxu0
    %v2056 = vadd.f32 %v1962, %v2055
    %v2057 = vpop.f32.mrf.mxu0
    %v2058 = vadd.f32 %v1962, %v2057
    %2059 = vdwg.mxu0
    %2060 = vmatpush.bf16.msra.mxu0 %v2029
    %2061 = vmatpush.bf16.msra.mxu0 %v2027
    %2062 = vmatpush.bf16.msra.mxu0 %v2025
    %2063 = vmatpush.bf16.msra.mxu0 %v2023
    %2064 = vmatpush.bf16.msra.mxu0 %v2021
    %2065 = vmatpush.bf16.msra.mxu0 %v2019
    %2066 = vmatpush.bf16.msra.mxu0 %v2017
    %2067 = vmatpush.bf16.msra.mxu0 %v2015
    %2068 = vmatmul.bf16.gmra.mxu0 %v1958
    %v2069 = vpop.f32.mrf.mxu0
    %v2070 = vadd.f32 %v1963, %v2069
    %v2071 = vpop.f32.mrf.mxu0
    %v2072 = vadd.f32 %v1963, %v2071
    %2073 = vdwg.mxu0
    %v2074 = vmul.f32 %v2056, 0.5
    %v2075 = vmul.f32 %v2070, 0.5
    %v2076 = vmul.f32 %v2058, 0.5
    %v2077 = vmul.f32 %v2072, 0.5
    %v2078 = vmul.f32 %v2056, 0.044715
    %v2079 = vmul.f32 %v2070, 0.044715
    %v2080 = vmul.f32 %v2058, 0.044715
    %v2081 = vmul.f32 %v2072, 0.044715
    %v2082 = vmul.f32 %v2078, %v2056
    %v2083 = vmul.f32 %v2079, %v2070
    %v2084 = vmul.f32 %v2080, %v2058
    %v2085 = vmul.f32 %v2081, %v2072
    %v2086 = vmul.f32 %v2082, %v2056
    %v2087 = vmul.f32 %v2083, %v2070
    %v2088 = vmul.f32 %v2084, %v2058
    %v2089 = vmul.f32 %v2085, %v2072
    %v2090 = vadd.f32 %v2056, %v2086
    %v2091 = vadd.f32 %v2070, %v2087
    %v2092 = vadd.f32 %v2058, %v2088
    %v2093 = vadd.f32 %v2072, %v2089
    %v2094 = vmul.f32 %v2090, 0.7978846
    %v2095 = vmul.f32 %v2091, 0.7978846
    %v2096 = vmul.f32 %v2092, 0.7978846
    %v2097 = vmul.f32 %v2093, 0.7978846
    %v2098 = vtanh.pop %v2094
    %v2099 = vtanh.pop %v2095
    %v2100 = vtanh.pop %v2096
    %v2101 = vtanh.pop %v2097
    %v2102 = vadd.f32 %v2098, 1.0
    %v2103 = vadd.f32 %v2099, 1.0
    %v2104 = vadd.f32 %v2100, 1.0
    %v2105 = vadd.f32 %v2101, 1.0
    %v2106 = vmul.f32 %v2074, %v2102
    %v2107 = vmul.f32 %v2075, %v2103
    %v2108 = vmul.f32 %v2076, %v2104
    %v2109 = vmul.f32 %v2077, %v2105
    %s2110 = scalar_lea.vmem [#allocation10], 128
    %v2111 = vld [vmem:[%s2110] sm:$0xf]
    %v2112 = vld [vmem:[%s2110 + $0x4] sm:$0xf]
    %v2113 = vld [vmem:[%s2110 + $0x8] sm:$0xf]
    %v2114 = vld [vmem:[%s2110 + $0xc] sm:$0xf]
    %v2115 = vld [vmem:[%s2110 + $0x10] sm:$0xf]
    %v2116 = vld [vmem:[%s2110 + $0x14] sm:$0xf]
    %v2117 = vld [vmem:[%s2110 + $0x18] sm:$0xf]
    %v2118 = vld [vmem:[%s2110 + $0x1c] sm:$0xf]
    %v2119 = vld [vmem:[%s2110 + $0x20] sm:$0xf]
    %v2120 = vld [vmem:[%s2110 + $0x24] sm:$0xf]
    %v2121 = vld [vmem:[%s2110 + $0x28] sm:$0xf]
    %v2122 = vld [vmem:[%s2110 + $0x2c] sm:$0xf]
    %v2123 = vld [vmem:[%s2110 + $0x30] sm:$0xf]
    %v2124 = vld [vmem:[%s2110 + $0x34] sm:$0xf]
    %v2125 = vld [vmem:[%s2110 + $0x38] sm:$0xf]
    %v2126 = vld [vmem:[%s2110 + $0x3c] sm:$0xf]
    %v2127 = vld [vmem:[%s2110 + $0x40] sm:$0xf]
    %v2128 = vld [vmem:[%s2110 + $0x44] sm:$0xf]
    %v2129 = vld [vmem:[%s2110 + $0x48] sm:$0xf]
    %v2130 = vld [vmem:[%s2110 + $0x4c] sm:$0xf]
    %v2131 = vld [vmem:[%s2110 + $0x50] sm:$0xf]
    %v2132 = vld [vmem:[%s2110 + $0x54] sm:$0xf]
    %v2133 = vld [vmem:[%s2110 + $0x58] sm:$0xf]
    %v2134 = vld [vmem:[%s2110 + $0x5c] sm:$0xf]
    %v2135 = vld [vmem:[%s2110 + $0x60] sm:$0xf]
    %v2136 = vld [vmem:[%s2110 + $0x64] sm:$0xf]
    %v2137 = vld [vmem:[%s2110 + $0x68] sm:$0xf]
    %v2138 = vld [vmem:[%s2110 + $0x6c] sm:$0xf]
    %v2139 = vld [vmem:[%s2110 + $0x70] sm:$0xf]
    %v2140 = vld [vmem:[%s2110 + $0x74] sm:$0xf]
    %v2141 = vld [vmem:[%s2110 + $0x78] sm:$0xf]
    %v2142 = vld [vmem:[%s2110 + $0x7c] sm:$0xf]
    %v2143 = vpack.c.bf16 %v2108, %v2106
    %v2144 = vpack.c.bf16 %v2109, %v2107
    %s2145 = scalar_lea.vmem %s17, 1
    %v2146 = vld [vmem:[%s2145] sm:$0x1]
    %v2148 = vperm.slane %v2146, 0
    %v2182 = vunpack.c.l.b16 %v2111
    %v2183 = vunpack.c.l.b16 %v2112
    %v2184 = vunpack.c.l.b16 %v2113
    %v2185 = vunpack.c.l.b16 %v2114
    %v2186 = vunpack.c.l.b16 %v2115
    %v2187 = vunpack.c.l.b16 %v2116
    %v2188 = vunpack.c.l.b16 %v2117
    %v2189 = vunpack.c.l.b16 %v2118
    %v2190 = vunpack.c.l.b16 %v2119
    %v2191 = vunpack.c.l.b16 %v2120
    %v2192 = vunpack.c.l.b16 %v2121
    %v2193 = vunpack.c.l.b16 %v2122
    %v2194 = vunpack.c.l.b16 %v2123
    %v2195 = vunpack.c.l.b16 %v2124
    %v2196 = vunpack.c.l.b16 %v2125
    %v2197 = vunpack.c.l.b16 %v2126
    %v2198 = vunpack.c.l.b16 %v2127
    %v2199 = vunpack.c.l.b16 %v2128
    %v2200 = vunpack.c.l.b16 %v2129
    %v2201 = vunpack.c.l.b16 %v2130
    %v2202 = vunpack.c.l.b16 %v2131
    %v2203 = vunpack.c.l.b16 %v2132
    %v2204 = vunpack.c.l.b16 %v2133
    %v2205 = vunpack.c.l.b16 %v2134
    %v2206 = vunpack.c.l.b16 %v2135
    %v2207 = vunpack.c.l.b16 %v2136
    %v2208 = vunpack.c.l.b16 %v2137
    %v2209 = vunpack.c.l.b16 %v2138
    %v2210 = vunpack.c.l.b16 %v2139
    %v2211 = vunpack.c.l.b16 %v2140
    %v2212 = vunpack.c.l.b16 %v2141
    %v2213 = vunpack.c.l.b16 %v2142
    %v2214 = vpack.c.b16 %v2183, %v2182
    %v2215 = vpack.c.b16 %v2185, %v2184
    %v2216 = vpack.c.b16 %v2187, %v2186
    %v2217 = vpack.c.b16 %v2189, %v2188
    %v2218 = vpack.c.b16 %v2191, %v2190
    %v2219 = vpack.c.b16 %v2193, %v2192
    %v2220 = vpack.c.b16 %v2195, %v2194
    %v2221 = vpack.c.b16 %v2197, %v2196
    %v2222 = vpack.c.b16 %v2199, %v2198
    %v2223 = vpack.c.b16 %v2201, %v2200
    %v2224 = vpack.c.b16 %v2203, %v2202
    %v2225 = vpack.c.b16 %v2205, %v2204
    %v2226 = vpack.c.b16 %v2207, %v2206
    %v2227 = vpack.c.b16 %v2209, %v2208
    %v2228 = vpack.c.b16 %v2211, %v2210
    %v2229 = vpack.c.b16 %v2213, %v2212
    %2246 = vmatpush.bf16.msra.mxu0 %v2221
    %2247 = vmatpush.bf16.msra.mxu0 %v2220
    %2248 = vmatpush.bf16.msra.mxu0 %v2219
    %2249 = vmatpush.bf16.msra.mxu0 %v2218
    %2250 = vmatpush.bf16.msra.mxu0 %v2217
    %2251 = vmatpush.bf16.msra.mxu0 %v2216
    %2252 = vmatpush.bf16.msra.mxu0 %v2215
    %2253 = vmatpush.bf16.msra.mxu0 %v2214
    %2254 = vmatmul.bf16.gmra.mxu0 %v2143
    %v2255 = vpop.f32.mrf.mxu0
    %v2256 = vadd.f32 %v2148, %v2255
    %v2257 = vpop.f32.mrf.mxu0
    %v2258 = vadd.f32 %v2148, %v2257
    %2259 = vdwg.mxu0
    %2260 = vmatpush.bf16.msra.mxu0 %v2229
    %2261 = vmatpush.bf16.msra.mxu0 %v2228
    %2262 = vmatpush.bf16.msra.mxu0 %v2227
    %2263 = vmatpush.bf16.msra.mxu0 %v2226
    %2264 = vmatpush.bf16.msra.mxu0 %v2225
    %2265 = vmatpush.bf16.msra.mxu0 %v2224
    %2266 = vmatpush.bf16.msra.mxu0 %v2223
    %2267 = vmatpush.bf16.msra.mxu0 %v2222
    %2268 = vmatmul.bf16.gmra.mxu0 %v2144
    %v2269 = vpop.f32.mrf.mxu0
    %v2270 = vadd.f32 %v2256, %v2269
    %v2271 = vpop.f32.mrf.mxu0
    %v2272 = vadd.f32 %v2258, %v2271
    %2273 = vdwg.mxu0
    %v2274 = vadd.f32 %v2270, %v1939
    %v2275 = vadd.f32 %v2272, %v1940
    %s2276 = scalar_lea.vmem %s18, 1
    %v2277 = vld [vmem:[%s2276] sm:$0x1]
    %s2278 = scalar_lea.vmem %s19, 1
    %v2279 = vld [vmem:[%s2278] sm:$0x1]
    %2280 = vadd.xlane.f32.xlu0 %v2274
    %v2281 = vpop.xlane.xlu0 %2280
    %2282 = vadd.xlane.f32.xlu0 %v2275
    %v2283 = vpop.xlane.xlu0 %2282
    %v2284 = vmul.f32 %v2281, %v165
    %v2285 = vmul.f32 %v2283, %v165
    %v2286 = vsub.f32 %v2274, %v2284
    %v2287 = vsub.f32 %v2275, %v2285
    %v2288 = vmul.f32 %v2286, %v2286
    %v2289 = vmul.f32 %v2287, %v2287
    %2290 = vadd.xlane.f32.xlu0 %v2288
    %v2291 = vpop.xlane.xlu0 %2290
    %2292 = vadd.xlane.f32.xlu0 %v2289
    %v2293 = vpop.xlane.xlu0 %2292
    %v2294 = vmul.f32 %v2291, %v165
    %v2295 = vmul.f32 %v2293, %v165
    %v2296 = vadd.f32 %v2294, 1e-12
    %v2297 = vadd.f32 %v2295, 1e-12
    %v2298 = vrsqrt.pop %v2296
    %v2299 = vmul.f32 %v2298, %v2296
    %v2300 = vmul.f32 %v2299, %v2298
    %v2301 = vmul.f32 0.5, %v2300
    %v2302 = vsub.f32 1.5, %v2301
    %v2303 = vmul.f32 %v2298, %v2302
    %vm2304 = vweird.f32 %v2296
    %vm2305 = vweird.f32 %v2298
    %vm2306 = vmor %vm2304, %vm2305
    %v2307 = vsel %vm2306, %v2298, %v2303
    %v2308 = vrsqrt.pop %v2297
    %v2309 = vmul.f32 %v2308, %v2297
    %v2310 = vmul.f32 %v2309, %v2308
    %v2311 = vmul.f32 0.5, %v2310
    %v2312 = vsub.f32 1.5, %v2311
    %v2313 = vmul.f32 %v2308, %v2312
    %vm2314 = vweird.f32 %v2297
    %vm2315 = vweird.f32 %v2308
    %vm2316 = vmor %vm2314, %vm2315
    %v2317 = vsel %vm2316, %v2308, %v2313
    %v2318 = vmul.f32 %v2286, %v2307
    %v2319 = vmul.f32 %v2287, %v2317
    %v2321 = vperm.slane %v2277, 0
    %v2323 = vmul.f32 %v2318, %v2321
    %v2324 = vmul.f32 %v2319, %v2321
    %v2326 = vperm.slane %v2279, 0
    %v2328 = vadd.f32 %v2323, %v2326
    %v2329 = vadd.f32 %v2324, %v2326
    %v2330 = vrot.slane %v2328, 4
    %v2331 = vadd.f32 %v2328, %v2330
    %v2332 = vrot.slane %v2331, 2
    %v2333 = vadd.f32 %v2331, %v2332
    %v2334 = vrot.slane %v2333, 1
    %v2335 = vadd.f32 %v2333, %v2334
    %v2336 = vrot.slane %v2329, 4
    %v2337 = vadd.f32 %v2329, %v2336
    %v2338 = vrot.slane %v2337, 2
    %v2339 = vadd.f32 %v2337, %v2338
    %v2340 = vrot.slane %v2339, 1
    %v2341 = vadd.f32 %v2339, %v2340
    %v2342 = vrcp.pop 8.0
    %v2343 = vmul.f32 8.0, %v2342
    %v2344 = vsub.f32 1.0, %v2343
    %v2345 = vmul.f32 %v2342, %v2344
    %v2346 = vadd.f32 %v2342, %v2345
    %vm2347 = vweird.f32 %v2342
    %v2348 = vsel %vm2347, %v2342, %v2346
    %v2349 = vmul.f32 %v2335, %v2348
    %v2350 = vmul.f32 %v2341, %v2348
    %v2351 = vld [vmem:[%s20] sm:$0xf]
    %v2352 = vld [vmem:[%s20 + $0x4] sm:$0xf]
    %v2353 = vld [vmem:[%s20 + $0x8] sm:$0xf]
    %v2354 = vld [vmem:[%s20 + $0xc] sm:$0xf]
    %v2355 = vld [vmem:[%s20 + $0x10] sm:$0xf]
    %v2356 = vld [vmem:[%s20 + $0x14] sm:$0xf]
    %v2357 = vld [vmem:[%s20 + $0x18] sm:$0xf]
    %v2358 = vld [vmem:[%s20 + $0x1c] sm:$0xf]
    %v2359 = vld [vmem:[%s20 + $0x20] sm:$0xf]
    %v2360 = vld [vmem:[%s20 + $0x24] sm:$0xf]
    %v2361 = vld [vmem:[%s20 + $0x28] sm:$0xf]
    %v2362 = vld [vmem:[%s20 + $0x2c] sm:$0xf]
    %v2363 = vld [vmem:[%s20 + $0x30] sm:$0xf]
    %v2364 = vld [vmem:[%s20 + $0x34] sm:$0xf]
    %v2365 = vld [vmem:[%s20 + $0x38] sm:$0xf]
    %v2366 = vld [vmem:[%s20 + $0x3c] sm:$0xf]
    %v2367 = vpack.c.bf16 %v2349, %v2349
    %v2368 = vpack.c.bf16 %v2350, %v2350
    %v2369 = vld [vmem:[%s21] sm:$0x1]
    %v2371 = vperm.slane %v2369, 0
    %v2375 = vunpack.c.l.b16 %v2367
    %v2376 = vunpack.c.l.b16 %v2368
    %vm2377 = vcmask 1041409
    %v2378 = vsel %vm2377, %v2376, %v2375
    %v2379 = vpack.c.b16 %v2378, %v2378
    %v2397 = vunpack.c.l.b16 %v2351
    %v2398 = vunpack.c.l.b16 %v2352
    %v2399 = vunpack.c.l.b16 %v2353
    %v2400 = vunpack.c.l.b16 %v2354
    %v2401 = vunpack.c.l.b16 %v2355
    %v2402 = vunpack.c.l.b16 %v2356
    %v2403 = vunpack.c.l.b16 %v2357
    %v2404 = vunpack.c.l.b16 %v2358
    %v2405 = vunpack.c.l.b16 %v2359
    %v2406 = vunpack.c.l.b16 %v2360
    %v2407 = vunpack.c.l.b16 %v2361
    %v2408 = vunpack.c.l.b16 %v2362
    %v2409 = vunpack.c.l.b16 %v2363
    %v2410 = vunpack.c.l.b16 %v2364
    %v2411 = vunpack.c.l.b16 %v2365
    %v2412 = vunpack.c.l.b16 %v2366
    %v2413 = vpack.c.b16 %v2398, %v2397
    %v2414 = vpack.c.b16 %v2400, %v2399
    %v2415 = vpack.c.b16 %v2402, %v2401
    %v2416 = vpack.c.b16 %v2404, %v2403
    %v2417 = vpack.c.b16 %v2406, %v2405
    %v2418 = vpack.c.b16 %v2408, %v2407
    %v2419 = vpack.c.b16 %v2410, %v2409
    %v2420 = vpack.c.b16 %v2412, %v2411
    %2429 = vmatpush.bf16.msra.mxu0 %v2420
    %2430 = vmatpush.bf16.msra.mxu0 %v2419
    %2431 = vmatpush.bf16.msra.mxu0 %v2418
    %2432 = vmatpush.bf16.msra.mxu0 %v2417
    %2433 = vmatpush.bf16.msra.mxu0 %v2416
    %2434 = vmatpush.bf16.msra.mxu0 %v2415
    %2435 = vmatpush.bf16.msra.mxu0 %v2414
    %2436 = vmatpush.bf16.msra.mxu0 %v2413
    %2437 = vmatmul.bf16.gmra.mxu0 %v2379
    %v2438 = vpop.f32.mrf.mxu0
    %v2439 = vadd.f32 %v2371, %v2438
    %v2440 = vpop.f32.mrf.mxu0
    %2441 = vdwg.mxu0
    %vm2442 = vcmask 9216
    %2443 = vst.msk [vmem:[#allocation11] sm:$0x3] %vm2442, %v2439
    // Predicated region
    $region110: #{forward.1} parent=1 // pred_check
      _
    $region111: #{forward.1} parent=1 // pred_check_branch
      %2445 = sbr.rel (0) target = $region113
    $region112: #{forward.1} parent=1 // pred_region
      %2447 = vsyncadd [#allocation4], 0
      %s2449 = sshll.u32 [#allocation11], 4
      %s2450 = int_to_ptr.vmem [resolvable:$true] %s2449
      %s2451 = sshll.u32 %s22, 4
      %s2452 = int_to_ptr.hbm [resolvable:$true] %s2451
      %2454 = dma.vmem_to_hbm [thread:$0]  %s2450, 32, %s2452, [#allocation4]
    $region113: #{forward.1} parent=1 // pred_fallthru
      _
    // Predicated region
    $region114: #{forward.1} parent=1 // pred_check
      _
    $region115: #{forward.1} parent=1 // pred_check_branch
      %2456 = sbr.rel (0) target = $region117
    $region116: #{forward.1} parent=1 // pred_region
      %2458 = dma.done [#allocation4], 32
    $region117: #{forward.1} parent=1 // pred_fallthru
      _
    %2459 = vsyncpa [#allocation3], 1
    %2460 = vsyncpa [#allocation6], 1
    %2461 = vsyncpa [#allocation9], 1
    %2462 = vsyncpa [#allocation4], 1

</llo_original>
